<compile_context>
chip_gen: v5e
topology: v5e:2x2
jax: 0.10.0
libtpu: 0.0.40
codegen_flags: <defaults>
</compile_context>

<pallas_src>
import jax
import jax.numpy as jnp
from jax import lax
from jax.experimental import pallas as pl
from jax.experimental.pallas import tpu as pltpu


# ----------------------------- config ---------------------------------------
B = 2            # batch
T = 8            # max sequence length
E = 32           # word_vec_size
MEM = 32         # mem_size
BRNN = True
NDIR = 2 if BRNN else 1
H = MEM // NDIR  # hidden_size per direction (16)
ATTN = 16        # attn_size
HOPS = 2         # hops
NEG = -10000000.0

GP = 128         # per-gate lane padding (one vreg of lanes)
G4 = 4 * GP      # padded gate width per direction (512)


# --------------------------- fused Pallas kernel ------------------------------
def self_attn_kernel(x_ref, lens_ref, wih_ref, whh_f_ref, whh_b_ref,
                     bf_ref, bb_ref, ws1_ref, ws2_ref,
                     rep_ref, alphas_ref):
    """Fused BiLSTM + multi-hop self-attention.

    x_ref    : (B*T, E) f32   row index = b*T + t
    lens_ref : (B, 1)   i32
    wih_ref  : (E, 2*G4) f32  both directions' input projections, gate-padded
    whh_*    : (H, G4)  f32   recurrent weights, gate-padded columns
    b*_ref   : (1, G4)  f32   b_ih + b_hh, gate-padded
    ws1_ref  : (MEM, ATTN), ws2_ref : (ATTN, HOPS)
    rep_ref  : (B, MEM), alphas_ref : (B, HOPS, T)
    """
    f32 = jnp.float32

    # ---- hoisted loads (read once, outside all loops) ----
    lens_v = lens_ref[...]            # (B, 1) int32
    whh_f = whh_f_ref[...]            # (H, G4)
    whh_b = whh_b_ref[...]
    bias_f = bf_ref[...]              # (1, G4)
    bias_b = bb_ref[...]
    ws1 = ws1_ref[...]                # (MEM, ATTN)
    ws2 = ws2_ref[...]                # (ATTN, HOPS)

    # ---- hoisted input projection: ONE lane-dense matmul for both dirs ----
    xproj = jnp.dot(x_ref[...], wih_ref[...],
                    preferred_element_type=f32)          # (B*T, 2*G4)

    # Per-timestep (B, 2*G4) slabs, gathered once (off the recurrent path).
    xslab = [
        jnp.concatenate(
            [xproj[b * T + t: b * T + t + 1, :] for b in range(B)], axis=0)
        for t in range(T)
    ]
    xf = [s[:, :G4] for s in xslab]     # forward-direction gate inputs
    xb = [s[:, G4:] for s in xslab]     # backward-direction gate inputs

    # Per-timestep validity masks, precomputed once. (B, 1) bool each.
    valids = [lens_v > t for t in range(T)]

    def run_dir(x_slabs, whh, bias, order):
        outs = [None] * T
        h = None
        c = None
        for idx, t in enumerate(order):
            if idx == 0:
                g = x_slabs[t] + bias                      # h == c == 0 initially
            else:
                g = (x_slabs[t]
                     + jnp.dot(h, whh, preferred_element_type=f32)
                     + bias)                               # (B, G4)
            # Gate groups start at lane offsets 0/128/256/384 -> aligned slices.
            i_g = jax.nn.sigmoid(g[:, 0 * GP:0 * GP + H])
            f_g = jax.nn.sigmoid(g[:, 1 * GP:1 * GP + H])
            g_g = jnp.tanh(g[:, 2 * GP:2 * GP + H])
            o_g = jax.nn.sigmoid(g[:, 3 * GP:3 * GP + H])
            c_new = (i_g * g_g) if idx == 0 else (f_g * c + i_g * g_g)
            h_new = o_g * jnp.tanh(c_new)                  # (B, H)

            v = valids[t]
            zero = jnp.zeros_like(h_new)
            c = jnp.where(v, c_new, zero if idx == 0 else c)
            h = jnp.where(v, h_new, zero if idx == 0 else h)
            outs[t] = jnp.where(v, h_new, zero)            # zero at pad steps
        return outs

    hf = run_dir(xf, whh_f, bias_f, list(range(T)))                 # forward
    hb = run_dir(xb, whh_b, bias_b, list(range(T - 1, -1, -1)))     # backward

    # ---- multi-hop self-attention, fused (B unrolled, all data in VMEM) ----
    t_row = lax.broadcasted_iota(jnp.int32, (1, T), 1)     # (1, T) = 0..T-1
    rep_rows = []
    for b in range(B):
        r_b = jnp.concatenate(
            [jnp.concatenate([hf[t][b:b + 1, :] for t in range(T)], axis=0),
             jnp.concatenate([hb[t][b:b + 1, :] for t in range(T)], axis=0)],
            axis=1)                                                  # (T, MEM)

        hbar = jnp.tanh(jnp.dot(r_b, ws1, preferred_element_type=f32))  # (T, A)
        scores = jnp.dot(hbar, ws2, preferred_element_type=f32)         # (T, HOPS)
        scores_ht = scores.T                                             # (HOPS, T)

        mask_row = (t_row < lens_v[b:b + 1, :]).astype(f32)              # (1, T)
        pen = scores_ht + NEG * (1.0 - mask_row)                         # (HOPS, T)

        m = jnp.max(pen, axis=-1, keepdims=True)
        e = jnp.exp(pen - m)
        s = jnp.sum(e, axis=-1, keepdims=True)
        alphas_b = e / s                                                 # (HOPS, T)

        rep_b = jnp.dot(alphas_b, r_b, preferred_element_type=f32)       # (HOPS, MEM)
        rep_rows.append(jnp.sum(rep_b, axis=0, keepdims=True) * (1.0 / HOPS))

        alphas_ref[b] = alphas_b.astype(alphas_ref.dtype)

    rep_ref[...] = jnp.concatenate(rep_rows, axis=0).astype(rep_ref.dtype)


# ------------------------------ wrapper --------------------------------------
def self_attn_forward(tokens_emb, lengths, packed):
    """tokens_emb: (B, T, E) f32; lengths: (B,) i32. Returns (rep, alphas)."""
    x2 = tokens_emb.reshape(B * T, E)                    # free contiguous reshape
    lens = lengths.astype(jnp.int32).reshape(B, 1)

    full = lambda shape: pl.BlockSpec(shape, lambda i: tuple(0 for _ in shape))

    rep, alphas = pl.pallas_call(
        self_attn_kernel,
        out_shape=(jax.ShapeDtypeStruct((B, MEM), jnp.float32),
                   jax.ShapeDtypeStruct((B, HOPS, T), jnp.float32)),
        grid=(1,),
        in_specs=[full((B * T, E)), full((B, 1)),
                  full((E, NDIR * G4)),
                  full((H, G4)), full((H, G4)),
                  full((1, G4)), full((1, G4)),
                  full((MEM, ATTN)), full((ATTN, HOPS))],
        out_specs=(full((B, MEM)), full((B, HOPS, T))),
        compiler_params=pltpu.CompilerParams(
            dimension_semantics=("arbitrary",)),
    )(x2, lens, packed["wih"], packed["whh_f"], packed["whh_b"],
      packed["b_f"], packed["b_b"], packed["ws1"], packed["ws2"])
    return rep, alphas


# --------------------------- parameters --------------------------------------
def make_params(key):
    """PyTorch-layout parameters (nn.LSTM / nn.Linear conventions)."""
    ks = jax.random.split(key, 10)
    s = 0.1
    nrm = lambda k, shape: s * jax.random.normal(k, shape, jnp.float32)
    return {
        "w_ih_f": nrm(ks[0], (4 * H, E)),
        "w_hh_f": nrm(ks[1], (4 * H, H)),
        "b_ih_f": nrm(ks[2], (4 * H,)),
        "b_hh_f": nrm(ks[3], (4 * H,)),
        "w_ih_b": nrm(ks[4], (4 * H, E)),
        "w_hh_b": nrm(ks[5], (4 * H, H)),
        "b_ih_b": nrm(ks[6], (4 * H,)),
        "b_hh_b": nrm(ks[7], (4 * H,)),
        "ws1":    nrm(ks[8], (ATTN, MEM)),   # nn.Linear(mem, attn).weight
        "ws2":    nrm(ks[9], (HOPS, ATTN)),  # nn.Linear(attn, hops).weight
    }


def pack_params(raw):
    """One-time packing into the kernel's 128-lane-padded gate layout."""
    def pack_gate_cols(w):            # (4H, X) -> (X, G4), gate k at [k*GP, k*GP+H)
        cols = jnp.zeros((w.shape[1], G4), jnp.float32)
        for k in range(4):
            cols = cols.at[:, k * GP:k * GP + H].set(w[k * H:(k + 1) * H, :].T)
        return cols

    def pack_gate_bias(b):            # (4H,) -> (1, G4)
        out = jnp.zeros((1, G4), jnp.float32)
        for k in range(4):
            out = out.at[0, k * GP:k * GP + H].set(b[k * H:(k + 1) * H])
        return out

    return {
        "wih": jnp.concatenate([pack_gate_cols(raw["w_ih_f"]),
                                pack_gate_cols(raw["w_ih_b"])], axis=1),
        "whh_f": pack_gate_cols(raw["w_hh_f"]),
        "whh_b": pack_gate_cols(raw["w_hh_b"]),
        "b_f": pack_gate_bias(raw["b_ih_f"] + raw["b_hh_f"]),
        "b_b": pack_gate_bias(raw["b_ih_b"] + raw["b_hh_b"]),
        "ws1": raw["ws1"].T,          # (MEM, ATTN)
        "ws2": raw["ws2"].T,          # (ATTN, HOPS)
    }


# --------------------- pure-JAX reference (for checking) ---------------------
def reference_forward(tokens_emb, lengths, raw):
    def run_dir(w_ih, w_hh, b, reverse):
        h = jnp.zeros((B, H), jnp.float32)
        c = jnp.zeros((B, H), jnp.float32)
        outs = [None] * T
        order = range(T - 1, -1, -1) if reverse else range(T)
        for t in order:
            x_t = tokens_emb[:, t, :]
            g = x_t @ w_ih.T + h @ w_hh.T + b
            i = jax.nn.sigmoid(g[:, 0:H])
            f = jax.nn.sigmoid(g[:, H:2 * H])
            gg = jnp.tanh(g[:, 2 * H:3 * H])
            o = jax.nn.sigmoid(g[:, 3 * H:4 * H])
            c_new = f * c + i * gg
            h_new = o * jnp.tanh(c_new)
            v = lengths[:, None] > t
            c = jnp.where(v, c_new, c)
            h = jnp.where(v, h_new, h)
            outs[t] = jnp.where(v, h_new, 0.0)
        return jnp.stack(outs, axis=1)                       # (B, T, H)

    of = run_dir(raw["w_ih_f"], raw["w_hh_f"], raw["b_ih_f"] + raw["b_hh_f"], False)
    ob = run_dir(raw["w_ih_b"], raw["w_hh_b"], raw["b_ih_b"] + raw["b_hh_b"], True)
    reps = jnp.concatenate([of, ob], axis=-1)                # (B, T, MEM)

    hbar = jnp.tanh(reps.reshape(B * T, MEM) @ raw["ws1"].T)
    scores = (hbar @ raw["ws2"].T).reshape(B, T, HOPS)
    al = jnp.swapaxes(scores, 1, 2)                          # (B, HOPS, T)
    mask = (jnp.arange(T)[None, :] < lengths[:, None]).astype(jnp.float32)
    pen = al + NEG * (1.0 - mask[:, None, :])
    al = jax.nn.softmax(pen, axis=-1)
    rep = jnp.mean(jnp.einsum("bht,btm->bhm", al, reps), axis=1)
    return rep, al


# ------------------------------- main ----------------------------------------
if __name__ == "__main__":
    key = jax.random.PRNGKey(0)
    k_x, k_p = jax.random.split(key)

    tokens_emb = jax.random.normal(k_x, (B, T, E), jnp.float32)
    lengths = jnp.array([8, 5], dtype=jnp.int32)   # descending, as pack() requires
    raw = make_params(k_p)
    packed = pack_params(raw)

    rep, alphas = jax.jit(self_attn_forward)(tokens_emb, lengths, packed)
    jax.block_until_ready((rep, alphas))

    assert rep.shape == (B, MEM)
    assert alphas.shape == (B, HOPS, T)
    assert bool(jnp.all(jnp.isfinite(rep))) and bool(jnp.all(jnp.isfinite(alphas)))

    rep_ref, al_ref = reference_forward(tokens_emb, lengths, raw)
    assert jnp.allclose(rep, rep_ref, atol=2e-3, rtol=2e-3), \
        float(jnp.max(jnp.abs(rep - rep_ref)))
    assert jnp.allclose(alphas, al_ref, atol=2e-3, rtol=2e-3), \
        float(jnp.max(jnp.abs(alphas - al_ref)))

    print("KERNEL_OK")
</pallas_src>

<mosaic_0001>
module attributes {stable_mosaic.version = 11 : i64} {
  func.func @self_attn_kernel(%arg0: i32, %arg1: memref<16x32xf32, #tpu.memory_space<vmem>>, %arg2: memref<2x1xi32, #tpu.memory_space<vmem>>, %arg3: memref<32x1024xf32, #tpu.memory_space<vmem>>, %arg4: memref<16x512xf32, #tpu.memory_space<vmem>>, %arg5: memref<16x512xf32, #tpu.memory_space<vmem>>, %arg6: memref<1x512xf32, #tpu.memory_space<vmem>>, %arg7: memref<1x512xf32, #tpu.memory_space<vmem>>, %arg8: memref<32x16xf32, #tpu.memory_space<vmem>>, %arg9: memref<16x2xf32, #tpu.memory_space<vmem>>, %arg10: memref<2x32xf32, #tpu.memory_space<vmem>>, %arg11: memref<2x2x8xf32, #tpu.memory_space<vmem>>) attributes {dimension_semantics = [#tpu.dimension_semantics<arbitrary>], iteration_bounds = array<i64: 1>, scalar_prefetch = 0 : i64, scratch_operands = 0 : i64, tpu.core_type = #tpu.core_type<tc>, window_params = [{pipeline_mode = #tpu.pipeline_mode<synchronous>, transform_indices = @transform_0, window_bounds = array<i64: 16, 32>}, {pipeline_mode = #tpu.pipeline_mode<synchronous>, transform_indices = @transform_1, window_bounds = array<i64: 2, 1>}, {pipeline_mode = #tpu.pipeline_mode<synchronous>, transform_indices = @transform_2, window_bounds = array<i64: 32, 1024>}, {pipeline_mode = #tpu.pipeline_mode<synchronous>, transform_indices = @transform_3, window_bounds = array<i64: 16, 512>}, {pipeline_mode = #tpu.pipeline_mode<synchronous>, transform_indices = @transform_4, window_bounds = array<i64: 16, 512>}, {pipeline_mode = #tpu.pipeline_mode<synchronous>, transform_indices = @transform_5, window_bounds = array<i64: 1, 512>}, {pipeline_mode = #tpu.pipeline_mode<synchronous>, transform_indices = @transform_6, window_bounds = array<i64: 1, 512>}, {pipeline_mode = #tpu.pipeline_mode<synchronous>, transform_indices = @transform_7, window_bounds = array<i64: 32, 16>}, {pipeline_mode = #tpu.pipeline_mode<synchronous>, transform_indices = @transform_8, window_bounds = array<i64: 16, 2>}, {pipeline_mode = #tpu.pipeline_mode<synchronous>, transform_indices = @transform_9, window_bounds = array<i64: 2, 32>}, {pipeline_mode = #tpu.pipeline_mode<synchronous>, transform_indices = @transform_10, window_bounds = array<i64: 2, 2, 8>}]} {
    %c0 = arith.constant 0 : index
    %c0_0 = arith.constant 0 : index
    %0 = vector.load %arg2[%c0, %c0_0] : memref<2x1xi32, #tpu.memory_space<vmem>>, vector<2x1xi32>
    %c0_1 = arith.constant 0 : index
    %c0_2 = arith.constant 0 : index
    %1 = vector.load %arg4[%c0_1, %c0_2] : memref<16x512xf32, #tpu.memory_space<vmem>>, vector<16x512xf32>
    %c0_3 = arith.constant 0 : index
    %c0_4 = arith.constant 0 : index
    %2 = vector.load %arg5[%c0_3, %c0_4] : memref<16x512xf32, #tpu.memory_space<vmem>>, vector<16x512xf32>
    %c0_5 = arith.constant 0 : index
    %c0_6 = arith.constant 0 : index
    %3 = vector.load %arg6[%c0_5, %c0_6] : memref<1x512xf32, #tpu.memory_space<vmem>>, vector<1x512xf32>
    %c0_7 = arith.constant 0 : index
    %c0_8 = arith.constant 0 : index
    %4 = vector.load %arg7[%c0_7, %c0_8] : memref<1x512xf32, #tpu.memory_space<vmem>>, vector<1x512xf32>
    %c0_9 = arith.constant 0 : index
    %c0_10 = arith.constant 0 : index
    %5 = vector.load %arg8[%c0_9, %c0_10] : memref<32x16xf32, #tpu.memory_space<vmem>>, vector<32x16xf32>
    %c0_11 = arith.constant 0 : index
    %c0_12 = arith.constant 0 : index
    %6 = vector.load %arg9[%c0_11, %c0_12] : memref<16x2xf32, #tpu.memory_space<vmem>>, vector<16x2xf32>
    %c0_13 = arith.constant 0 : index
    %c0_14 = arith.constant 0 : index
    %7 = vector.load %arg1[%c0_13, %c0_14] : memref<16x32xf32, #tpu.memory_space<vmem>>, vector<16x32xf32>
    %c0_15 = arith.constant 0 : index
    %c0_16 = arith.constant 0 : index
    %8 = vector.load %arg3[%c0_15, %c0_16] : memref<32x1024xf32, #tpu.memory_space<vmem>>, vector<32x1024xf32>
    %cst = arith.constant dense<0.000000e+00> : vector<16x1024xf32>
    %9 = tpu.matmul %7, %8, %cst {dimension_numbers = #tpu.dot_dimension_numbers<[1], [0], [0], [1], [0, 0, 1, 1], [], []>} : vector<16x32xf32>, vector<32x1024xf32>, vector<16x1024xf32> -> vector<16x1024xf32>
    %10 = vector.extract_strided_slice %9 {offsets = [0, 0], sizes = [1, 1024], strides = [1, 1]} : vector<16x1024xf32> to vector<1x1024xf32>
    %11 = vector.extract_strided_slice %9 {offsets = [8, 0], sizes = [1, 1024], strides = [1, 1]} : vector<16x1024xf32> to vector<1x1024xf32>
    %12 = tpu.concatenate %10, %11 in 0 : vector<1x1024xf32>, vector<1x1024xf32> -> vector<2x1024xf32>
    %13 = vector.extract_strided_slice %9 {offsets = [1, 0], sizes = [1, 1024], strides = [1, 1]} : vector<16x1024xf32> to vector<1x1024xf32>
    %14 = vector.extract_strided_slice %9 {offsets = [9, 0], sizes = [1, 1024], strides = [1, 1]} : vector<16x1024xf32> to vector<1x1024xf32>
    %15 = tpu.concatenate %13, %14 in 0 : vector<1x1024xf32>, vector<1x1024xf32> -> vector<2x1024xf32>
    %16 = vector.extract_strided_slice %9 {offsets = [2, 0], sizes = [1, 1024], strides = [1, 1]} : vector<16x1024xf32> to vector<1x1024xf32>
    %17 = vector.extract_strided_slice %9 {offsets = [10, 0], sizes = [1, 1024], strides = [1, 1]} : vector<16x1024xf32> to vector<1x1024xf32>
    %18 = tpu.concatenate %16, %17 in 0 : vector<1x1024xf32>, vector<1x1024xf32> -> vector<2x1024xf32>
    %19 = vector.extract_strided_slice %9 {offsets = [3, 0], sizes = [1, 1024], strides = [1, 1]} : vector<16x1024xf32> to vector<1x1024xf32>
    %20 = vector.extract_strided_slice %9 {offsets = [11, 0], sizes = [1, 1024], strides = [1, 1]} : vector<16x1024xf32> to vector<1x1024xf32>
    %21 = tpu.concatenate %19, %20 in 0 : vector<1x1024xf32>, vector<1x1024xf32> -> vector<2x1024xf32>
    %22 = vector.extract_strided_slice %9 {offsets = [4, 0], sizes = [1, 1024], strides = [1, 1]} : vector<16x1024xf32> to vector<1x1024xf32>
    %23 = vector.extract_strided_slice %9 {offsets = [12, 0], sizes = [1, 1024], strides = [1, 1]} : vector<16x1024xf32> to vector<1x1024xf32>
    %24 = tpu.concatenate %22, %23 in 0 : vector<1x1024xf32>, vector<1x1024xf32> -> vector<2x1024xf32>
    %25 = vector.extract_strided_slice %9 {offsets = [5, 0], sizes = [1, 1024], strides = [1, 1]} : vector<16x1024xf32> to vector<1x1024xf32>
    %26 = vector.extract_strided_slice %9 {offsets = [13, 0], sizes = [1, 1024], strides = [1, 1]} : vector<16x1024xf32> to vector<1x1024xf32>
    %27 = tpu.concatenate %25, %26 in 0 : vector<1x1024xf32>, vector<1x1024xf32> -> vector<2x1024xf32>
    %28 = vector.extract_strided_slice %9 {offsets = [6, 0], sizes = [1, 1024], strides = [1, 1]} : vector<16x1024xf32> to vector<1x1024xf32>
    %29 = vector.extract_strided_slice %9 {offsets = [14, 0], sizes = [1, 1024], strides = [1, 1]} : vector<16x1024xf32> to vector<1x1024xf32>
    %30 = tpu.concatenate %28, %29 in 0 : vector<1x1024xf32>, vector<1x1024xf32> -> vector<2x1024xf32>
    %31 = vector.extract_strided_slice %9 {offsets = [7, 0], sizes = [1, 1024], strides = [1, 1]} : vector<16x1024xf32> to vector<1x1024xf32>
    %32 = vector.extract_strided_slice %9 {offsets = [15, 0], sizes = [1, 1024], strides = [1, 1]} : vector<16x1024xf32> to vector<1x1024xf32>
    %33 = tpu.concatenate %31, %32 in 0 : vector<1x1024xf32>, vector<1x1024xf32> -> vector<2x1024xf32>
    %34 = vector.extract_strided_slice %12 {offsets = [0, 0], sizes = [2, 512], strides = [1, 1]} : vector<2x1024xf32> to vector<2x512xf32>
    %35 = vector.extract_strided_slice %15 {offsets = [0, 0], sizes = [2, 512], strides = [1, 1]} : vector<2x1024xf32> to vector<2x512xf32>
    %36 = vector.extract_strided_slice %18 {offsets = [0, 0], sizes = [2, 512], strides = [1, 1]} : vector<2x1024xf32> to vector<2x512xf32>
    %37 = vector.extract_strided_slice %21 {offsets = [0, 0], sizes = [2, 512], strides = [1, 1]} : vector<2x1024xf32> to vector<2x512xf32>
    %38 = vector.extract_strided_slice %24 {offsets = [0, 0], sizes = [2, 512], strides = [1, 1]} : vector<2x1024xf32> to vector<2x512xf32>
    %39 = vector.extract_strided_slice %27 {offsets = [0, 0], sizes = [2, 512], strides = [1, 1]} : vector<2x1024xf32> to vector<2x512xf32>
    %40 = vector.extract_strided_slice %30 {offsets = [0, 0], sizes = [2, 512], strides = [1, 1]} : vector<2x1024xf32> to vector<2x512xf32>
    %41 = vector.extract_strided_slice %33 {offsets = [0, 0], sizes = [2, 512], strides = [1, 1]} : vector<2x1024xf32> to vector<2x512xf32>
    %42 = vector.extract_strided_slice %12 {offsets = [0, 512], sizes = [2, 512], strides = [1, 1]} : vector<2x1024xf32> to vector<2x512xf32>
    %43 = vector.extract_strided_slice %15 {offsets = [0, 512], sizes = [2, 512], strides = [1, 1]} : vector<2x1024xf32> to vector<2x512xf32>
    %44 = vector.extract_strided_slice %18 {offsets = [0, 512], sizes = [2, 512], strides = [1, 1]} : vector<2x1024xf32> to vector<2x512xf32>
    %45 = vector.extract_strided_slice %21 {offsets = [0, 512], sizes = [2, 512], strides = [1, 1]} : vector<2x1024xf32> to vector<2x512xf32>
    %46 = vector.extract_strided_slice %24 {offsets = [0, 512], sizes = [2, 512], strides = [1, 1]} : vector<2x1024xf32> to vector<2x512xf32>
    %47 = vector.extract_strided_slice %27 {offsets = [0, 512], sizes = [2, 512], strides = [1, 1]} : vector<2x1024xf32> to vector<2x512xf32>
    %48 = vector.extract_strided_slice %30 {offsets = [0, 512], sizes = [2, 512], strides = [1, 1]} : vector<2x1024xf32> to vector<2x512xf32>
    %49 = vector.extract_strided_slice %33 {offsets = [0, 512], sizes = [2, 512], strides = [1, 1]} : vector<2x1024xf32> to vector<2x512xf32>
    %c0_i32 = arith.constant 0 : i32
    %50 = vector.broadcast %c0_i32 : i32 to vector<2x1xi32>
    %51 = arith.cmpi sgt, %0, %50 : vector<2x1xi32>
    %c1_i32 = arith.constant 1 : i32
    %52 = vector.broadcast %c1_i32 : i32 to vector<2x1xi32>
    %53 = arith.cmpi sgt, %0, %52 : vector<2x1xi32>
    %c2_i32 = arith.constant 2 : i32
    %54 = vector.broadcast %c2_i32 : i32 to vector<2x1xi32>
    %55 = arith.cmpi sgt, %0, %54 : vector<2x1xi32>
    %c3_i32 = arith.constant 3 : i32
    %56 = vector.broadcast %c3_i32 : i32 to vector<2x1xi32>
    %57 = arith.cmpi sgt, %0, %56 : vector<2x1xi32>
    %c4_i32 = arith.constant 4 : i32
    %58 = vector.broadcast %c4_i32 : i32 to vector<2x1xi32>
    %59 = arith.cmpi sgt, %0, %58 : vector<2x1xi32>
    %c5_i32 = arith.constant 5 : i32
    %60 = vector.broadcast %c5_i32 : i32 to vector<2x1xi32>
    %61 = arith.cmpi sgt, %0, %60 : vector<2x1xi32>
    %c6_i32 = arith.constant 6 : i32
    %62 = vector.broadcast %c6_i32 : i32 to vector<2x1xi32>
    %63 = arith.cmpi sgt, %0, %62 : vector<2x1xi32>
    %c7_i32 = arith.constant 7 : i32
    %64 = vector.broadcast %c7_i32 : i32 to vector<2x1xi32>
    %65 = arith.cmpi sgt, %0, %64 : vector<2x1xi32>
    %66 = vector.broadcast %3 : vector<1x512xf32> to vector<2x512xf32>
    %67 = arith.addf %34, %66 : vector<2x512xf32>
    %68 = vector.extract_strided_slice %67 {offsets = [0, 0], sizes = [2, 16], strides = [1, 1]} : vector<2x512xf32> to vector<2x16xf32>
    %69 = arith.negf %68 : vector<2x16xf32>
    %70 = math.exp %69 : vector<2x16xf32>
    %cst_17 = arith.constant 1.000000e+00 : f32
    %71 = vector.broadcast %cst_17 : f32 to vector<2x16xf32>
    %72 = arith.addf %71, %70 : vector<2x16xf32>
    %73 = arith.divf %71, %72 : vector<2x16xf32>
    %74 = vector.extract_strided_slice %67 {offsets = [0, 256], sizes = [2, 16], strides = [1, 1]} : vector<2x512xf32> to vector<2x16xf32>
    %75 = math.tanh %74 : vector<2x16xf32>
    %76 = vector.extract_strided_slice %67 {offsets = [0, 384], sizes = [2, 16], strides = [1, 1]} : vector<2x512xf32> to vector<2x16xf32>
    %77 = arith.negf %76 : vector<2x16xf32>
    %78 = math.exp %77 : vector<2x16xf32>
    %cst_18 = arith.constant 1.000000e+00 : f32
    %79 = vector.broadcast %cst_18 : f32 to vector<2x16xf32>
    %80 = arith.addf %79, %78 : vector<2x16xf32>
    %81 = arith.divf %79, %80 : vector<2x16xf32>
    %82 = arith.mulf %73, %75 : vector<2x16xf32>
    %83 = math.tanh %82 : vector<2x16xf32>
    %84 = arith.mulf %81, %83 : vector<2x16xf32>
    %cst_19 = arith.constant 0.000000e+00 : f32
    %85 = vector.broadcast %cst_19 : f32 to vector<2x16xf32>
    %86 = vector.shape_cast %51 : vector<2x1xi1> to vector<2x1xi1>
    %87 = vector.broadcast %86 : vector<2x1xi1> to vector<2x16xi1>
    %88 = arith.select %87, %82, %85 : vector<2x16xi1>, vector<2x16xf32>
    %89 = vector.shape_cast %51 : vector<2x1xi1> to vector<2x1xi1>
    %90 = vector.broadcast %89 : vector<2x1xi1> to vector<2x16xi1>
    %91 = arith.select %90, %84, %85 : vector<2x16xi1>, vector<2x16xf32>
    %92 = vector.shape_cast %51 : vector<2x1xi1> to vector<2x1xi1>
    %93 = vector.broadcast %92 : vector<2x1xi1> to vector<2x16xi1>
    %94 = arith.select %93, %84, %85 : vector<2x16xi1>, vector<2x16xf32>
    %cst_20 = arith.constant dense<0.000000e+00> : vector<2x512xf32>
    %95 = tpu.matmul %91, %1, %cst_20 {dimension_numbers = #tpu.dot_dimension_numbers<[1], [0], [0], [1], [0, 0, 1, 1], [], []>} : vector<2x16xf32>, vector<16x512xf32>, vector<2x512xf32> -> vector<2x512xf32>
    %96 = arith.addf %35, %95 : vector<2x512xf32>
    %97 = vector.broadcast %3 : vector<1x512xf32> to vector<2x512xf32>
    %98 = arith.addf %96, %97 : vector<2x512xf32>
    %99 = vector.extract_strided_slice %98 {offsets = [0, 0], sizes = [2, 16], strides = [1, 1]} : vector<2x512xf32> to vector<2x16xf32>
    %100 = arith.negf %99 : vector<2x16xf32>
    %101 = math.exp %100 : vector<2x16xf32>
    %cst_21 = arith.constant 1.000000e+00 : f32
    %102 = vector.broadcast %cst_21 : f32 to vector<2x16xf32>
    %103 = arith.addf %102, %101 : vector<2x16xf32>
    %104 = arith.divf %102, %103 : vector<2x16xf32>
    %105 = vector.extract_strided_slice %98 {offsets = [0, 128], sizes = [2, 16], strides = [1, 1]} : vector<2x512xf32> to vector<2x16xf32>
    %106 = arith.negf %105 : vector<2x16xf32>
    %107 = math.exp %106 : vector<2x16xf32>
    %cst_22 = arith.constant 1.000000e+00 : f32
    %108 = vector.broadcast %cst_22 : f32 to vector<2x16xf32>
    %109 = arith.addf %108, %107 : vector<2x16xf32>
    %110 = arith.divf %108, %109 : vector<2x16xf32>
    %111 = vector.extract_strided_slice %98 {offsets = [0, 256], sizes = [2, 16], strides = [1, 1]} : vector<2x512xf32> to vector<2x16xf32>
    %112 = math.tanh %111 : vector<2x16xf32>
    %113 = vector.extract_strided_slice %98 {offsets = [0, 384], sizes = [2, 16], strides = [1, 1]} : vector<2x512xf32> to vector<2x16xf32>
    %114 = arith.negf %113 : vector<2x16xf32>
    %115 = math.exp %114 : vector<2x16xf32>
    %cst_23 = arith.constant 1.000000e+00 : f32
    %116 = vector.broadcast %cst_23 : f32 to vector<2x16xf32>
    %117 = arith.addf %116, %115 : vector<2x16xf32>
    %118 = arith.divf %116, %117 : vector<2x16xf32>
    %119 = arith.mulf %110, %88 : vector<2x16xf32>
    %120 = arith.mulf %104, %112 : vector<2x16xf32>
    %121 = arith.addf %119, %120 : vector<2x16xf32>
    %122 = math.tanh %121 : vector<2x16xf32>
    %123 = arith.mulf %118, %122 : vector<2x16xf32>
    %cst_24 = arith.constant 0.000000e+00 : f32
    %124 = vector.broadcast %cst_24 : f32 to vector<2x16xf32>
    %125 = vector.shape_cast %53 : vector<2x1xi1> to vector<2x1xi1>
    %126 = vector.broadcast %125 : vector<2x1xi1> to vector<2x16xi1>
    %127 = arith.select %126, %121, %88 : vector<2x16xi1>, vector<2x16xf32>
    %128 = vector.shape_cast %53 : vector<2x1xi1> to vector<2x1xi1>
    %129 = vector.broadcast %128 : vector<2x1xi1> to vector<2x16xi1>
    %130 = arith.select %129, %123, %91 : vector<2x16xi1>, vector<2x16xf32>
    %131 = vector.shape_cast %53 : vector<2x1xi1> to vector<2x1xi1>
    %132 = vector.broadcast %131 : vector<2x1xi1> to vector<2x16xi1>
    %133 = arith.select %132, %123, %124 : vector<2x16xi1>, vector<2x16xf32>
    %cst_25 = arith.constant dense<0.000000e+00> : vector<2x512xf32>
    %134 = tpu.matmul %130, %1, %cst_25 {dimension_numbers = #tpu.dot_dimension_numbers<[1], [0], [0], [1], [0, 0, 1, 1], [], []>} : vector<2x16xf32>, vector<16x512xf32>, vector<2x512xf32> -> vector<2x512xf32>
    %135 = arith.addf %36, %134 : vector<2x512xf32>
    %136 = vector.broadcast %3 : vector<1x512xf32> to vector<2x512xf32>
    %137 = arith.addf %135, %136 : vector<2x512xf32>
    %138 = vector.extract_strided_slice %137 {offsets = [0, 0], sizes = [2, 16], strides = [1, 1]} : vector<2x512xf32> to vector<2x16xf32>
    %139 = arith.negf %138 : vector<2x16xf32>
    %140 = math.exp %139 : vector<2x16xf32>
    %cst_26 = arith.constant 1.000000e+00 : f32
    %141 = vector.broadcast %cst_26 : f32 to vector<2x16xf32>
    %142 = arith.addf %141, %140 : vector<2x16xf32>
    %143 = arith.divf %141, %142 : vector<2x16xf32>
    %144 = vector.extract_strided_slice %137 {offsets = [0, 128], sizes = [2, 16], strides = [1, 1]} : vector<2x512xf32> to vector<2x16xf32>
    %145 = arith.negf %144 : vector<2x16xf32>
    %146 = math.exp %145 : vector<2x16xf32>
    %cst_27 = arith.constant 1.000000e+00 : f32
    %147 = vector.broadcast %cst_27 : f32 to vector<2x16xf32>
    %148 = arith.addf %147, %146 : vector<2x16xf32>
    %149 = arith.divf %147, %148 : vector<2x16xf32>
    %150 = vector.extract_strided_slice %137 {offsets = [0, 256], sizes = [2, 16], strides = [1, 1]} : vector<2x512xf32> to vector<2x16xf32>
    %151 = math.tanh %150 : vector<2x16xf32>
    %152 = vector.extract_strided_slice %137 {offsets = [0, 384], sizes = [2, 16], strides = [1, 1]} : vector<2x512xf32> to vector<2x16xf32>
    %153 = arith.negf %152 : vector<2x16xf32>
    %154 = math.exp %153 : vector<2x16xf32>
    %cst_28 = arith.constant 1.000000e+00 : f32
    %155 = vector.broadcast %cst_28 : f32 to vector<2x16xf32>
    %156 = arith.addf %155, %154 : vector<2x16xf32>
    %157 = arith.divf %155, %156 : vector<2x16xf32>
    %158 = arith.mulf %149, %127 : vector<2x16xf32>
    %159 = arith.mulf %143, %151 : vector<2x16xf32>
    %160 = arith.addf %158, %159 : vector<2x16xf32>
    %161 = math.tanh %160 : vector<2x16xf32>
    %162 = arith.mulf %157, %161 : vector<2x16xf32>
    %cst_29 = arith.constant 0.000000e+00 : f32
    %163 = vector.broadcast %cst_29 : f32 to vector<2x16xf32>
    %164 = vector.shape_cast %55 : vector<2x1xi1> to vector<2x1xi1>
    %165 = vector.broadcast %164 : vector<2x1xi1> to vector<2x16xi1>
    %166 = arith.select %165, %160, %127 : vector<2x16xi1>, vector<2x16xf32>
    %167 = vector.shape_cast %55 : vector<2x1xi1> to vector<2x1xi1>
    %168 = vector.broadcast %167 : vector<2x1xi1> to vector<2x16xi1>
    %169 = arith.select %168, %162, %130 : vector<2x16xi1>, vector<2x16xf32>
    %170 = vector.shape_cast %55 : vector<2x1xi1> to vector<2x1xi1>
    %171 = vector.broadcast %170 : vector<2x1xi1> to vector<2x16xi1>
    %172 = arith.select %171, %162, %163 : vector<2x16xi1>, vector<2x16xf32>
    %cst_30 = arith.constant dense<0.000000e+00> : vector<2x512xf32>
    %173 = tpu.matmul %169, %1, %cst_30 {dimension_numbers = #tpu.dot_dimension_numbers<[1], [0], [0], [1], [0, 0, 1, 1], [], []>} : vector<2x16xf32>, vector<16x512xf32>, vector<2x512xf32> -> vector<2x512xf32>
    %174 = arith.addf %37, %173 : vector<2x512xf32>
    %175 = vector.broadcast %3 : vector<1x512xf32> to vector<2x512xf32>
    %176 = arith.addf %174, %175 : vector<2x512xf32>
    %177 = vector.extract_strided_slice %176 {offsets = [0, 0], sizes = [2, 16], strides = [1, 1]} : vector<2x512xf32> to vector<2x16xf32>
    %178 = arith.negf %177 : vector<2x16xf32>
    %179 = math.exp %178 : vector<2x16xf32>
    %cst_31 = arith.constant 1.000000e+00 : f32
    %180 = vector.broadcast %cst_31 : f32 to vector<2x16xf32>
    %181 = arith.addf %180, %179 : vector<2x16xf32>
    %182 = arith.divf %180, %181 : vector<2x16xf32>
    %183 = vector.extract_strided_slice %176 {offsets = [0, 128], sizes = [2, 16], strides = [1, 1]} : vector<2x512xf32> to vector<2x16xf32>
    %184 = arith.negf %183 : vector<2x16xf32>
    %185 = math.exp %184 : vector<2x16xf32>
    %cst_32 = arith.constant 1.000000e+00 : f32
    %186 = vector.broadcast %cst_32 : f32 to vector<2x16xf32>
    %187 = arith.addf %186, %185 : vector<2x16xf32>
    %188 = arith.divf %186, %187 : vector<2x16xf32>
    %189 = vector.extract_strided_slice %176 {offsets = [0, 256], sizes = [2, 16], strides = [1, 1]} : vector<2x512xf32> to vector<2x16xf32>
    %190 = math.tanh %189 : vector<2x16xf32>
    %191 = vector.extract_strided_slice %176 {offsets = [0, 384], sizes = [2, 16], strides = [1, 1]} : vector<2x512xf32> to vector<2x16xf32>
    %192 = arith.negf %191 : vector<2x16xf32>
    %193 = math.exp %192 : vector<2x16xf32>
    %cst_33 = arith.constant 1.000000e+00 : f32
    %194 = vector.broadcast %cst_33 : f32 to vector<2x16xf32>
    %195 = arith.addf %194, %193 : vector<2x16xf32>
    %196 = arith.divf %194, %195 : vector<2x16xf32>
    %197 = arith.mulf %188, %166 : vector<2x16xf32>
    %198 = arith.mulf %182, %190 : vector<2x16xf32>
    %199 = arith.addf %197, %198 : vector<2x16xf32>
    %200 = math.tanh %199 : vector<2x16xf32>
    %201 = arith.mulf %196, %200 : vector<2x16xf32>
    %cst_34 = arith.constant 0.000000e+00 : f32
    %202 = vector.broadcast %cst_34 : f32 to vector<2x16xf32>
    %203 = vector.shape_cast %57 : vector<2x1xi1> to vector<2x1xi1>
    %204 = vector.broadcast %203 : vector<2x1xi1> to vector<2x16xi1>
    %205 = arith.select %204, %199, %166 : vector<2x16xi1>, vector<2x16xf32>
    %206 = vector.shape_cast %57 : vector<2x1xi1> to vector<2x1xi1>
    %207 = vector.broadcast %206 : vector<2x1xi1> to vector<2x16xi1>
    %208 = arith.select %207, %201, %169 : vector<2x16xi1>, vector<2x16xf32>
    %209 = vector.shape_cast %57 : vector<2x1xi1> to vector<2x1xi1>
    %210 = vector.broadcast %209 : vector<2x1xi1> to vector<2x16xi1>
    %211 = arith.select %210, %201, %202 : vector<2x16xi1>, vector<2x16xf32>
    %cst_35 = arith.constant dense<0.000000e+00> : vector<2x512xf32>
    %212 = tpu.matmul %208, %1, %cst_35 {dimension_numbers = #tpu.dot_dimension_numbers<[1], [0], [0], [1], [0, 0, 1, 1], [], []>} : vector<2x16xf32>, vector<16x512xf32>, vector<2x512xf32> -> vector<2x512xf32>
    %213 = arith.addf %38, %212 : vector<2x512xf32>
    %214 = vector.broadcast %3 : vector<1x512xf32> to vector<2x512xf32>
    %215 = arith.addf %213, %214 : vector<2x512xf32>
    %216 = vector.extract_strided_slice %215 {offsets = [0, 0], sizes = [2, 16], strides = [1, 1]} : vector<2x512xf32> to vector<2x16xf32>
    %217 = arith.negf %216 : vector<2x16xf32>
    %218 = math.exp %217 : vector<2x16xf32>
    %cst_36 = arith.constant 1.000000e+00 : f32
    %219 = vector.broadcast %cst_36 : f32 to vector<2x16xf32>
    %220 = arith.addf %219, %218 : vector<2x16xf32>
    %221 = arith.divf %219, %220 : vector<2x16xf32>
    %222 = vector.extract_strided_slice %215 {offsets = [0, 128], sizes = [2, 16], strides = [1, 1]} : vector<2x512xf32> to vector<2x16xf32>
    %223 = arith.negf %222 : vector<2x16xf32>
    %224 = math.exp %223 : vector<2x16xf32>
    %cst_37 = arith.constant 1.000000e+00 : f32
    %225 = vector.broadcast %cst_37 : f32 to vector<2x16xf32>
    %226 = arith.addf %225, %224 : vector<2x16xf32>
    %227 = arith.divf %225, %226 : vector<2x16xf32>
    %228 = vector.extract_strided_slice %215 {offsets = [0, 256], sizes = [2, 16], strides = [1, 1]} : vector<2x512xf32> to vector<2x16xf32>
    %229 = math.tanh %228 : vector<2x16xf32>
    %230 = vector.extract_strided_slice %215 {offsets = [0, 384], sizes = [2, 16], strides = [1, 1]} : vector<2x512xf32> to vector<2x16xf32>
    %231 = arith.negf %230 : vector<2x16xf32>
    %232 = math.exp %231 : vector<2x16xf32>
    %cst_38 = arith.constant 1.000000e+00 : f32
    %233 = vector.broadcast %cst_38 : f32 to vector<2x16xf32>
    %234 = arith.addf %233, %232 : vector<2x16xf32>
    %235 = arith.divf %233, %234 : vector<2x16xf32>
    %236 = arith.mulf %227, %205 : vector<2x16xf32>
    %237 = arith.mulf %221, %229 : vector<2x16xf32>
    %238 = arith.addf %236, %237 : vector<2x16xf32>
    %239 = math.tanh %238 : vector<2x16xf32>
    %240 = arith.mulf %235, %239 : vector<2x16xf32>
    %cst_39 = arith.constant 0.000000e+00 : f32
    %241 = vector.broadcast %cst_39 : f32 to vector<2x16xf32>
    %242 = vector.shape_cast %59 : vector<2x1xi1> to vector<2x1xi1>
    %243 = vector.broadcast %242 : vector<2x1xi1> to vector<2x16xi1>
    %244 = arith.select %243, %238, %205 : vector<2x16xi1>, vector<2x16xf32>
    %245 = vector.shape_cast %59 : vector<2x1xi1> to vector<2x1xi1>
    %246 = vector.broadcast %245 : vector<2x1xi1> to vector<2x16xi1>
    %247 = arith.select %246, %240, %208 : vector<2x16xi1>, vector<2x16xf32>
    %248 = vector.shape_cast %59 : vector<2x1xi1> to vector<2x1xi1>
    %249 = vector.broadcast %248 : vector<2x1xi1> to vector<2x16xi1>
    %250 = arith.select %249, %240, %241 : vector<2x16xi1>, vector<2x16xf32>
    %cst_40 = arith.constant dense<0.000000e+00> : vector<2x512xf32>
    %251 = tpu.matmul %247, %1, %cst_40 {dimension_numbers = #tpu.dot_dimension_numbers<[1], [0], [0], [1], [0, 0, 1, 1], [], []>} : vector<2x16xf32>, vector<16x512xf32>, vector<2x512xf32> -> vector<2x512xf32>
    %252 = arith.addf %39, %251 : vector<2x512xf32>
    %253 = vector.broadcast %3 : vector<1x512xf32> to vector<2x512xf32>
    %254 = arith.addf %252, %253 : vector<2x512xf32>
    %255 = vector.extract_strided_slice %254 {offsets = [0, 0], sizes = [2, 16], strides = [1, 1]} : vector<2x512xf32> to vector<2x16xf32>
    %256 = arith.negf %255 : vector<2x16xf32>
    %257 = math.exp %256 : vector<2x16xf32>
    %cst_41 = arith.constant 1.000000e+00 : f32
    %258 = vector.broadcast %cst_41 : f32 to vector<2x16xf32>
    %259 = arith.addf %258, %257 : vector<2x16xf32>
    %260 = arith.divf %258, %259 : vector<2x16xf32>
    %261 = vector.extract_strided_slice %254 {offsets = [0, 128], sizes = [2, 16], strides = [1, 1]} : vector<2x512xf32> to vector<2x16xf32>
    %262 = arith.negf %261 : vector<2x16xf32>
    %263 = math.exp %262 : vector<2x16xf32>
    %cst_42 = arith.constant 1.000000e+00 : f32
    %264 = vector.broadcast %cst_42 : f32 to vector<2x16xf32>
    %265 = arith.addf %264, %263 : vector<2x16xf32>
    %266 = arith.divf %264, %265 : vector<2x16xf32>
    %267 = vector.extract_strided_slice %254 {offsets = [0, 256], sizes = [2, 16], strides = [1, 1]} : vector<2x512xf32> to vector<2x16xf32>
    %268 = math.tanh %267 : vector<2x16xf32>
    %269 = vector.extract_strided_slice %254 {offsets = [0, 384], sizes = [2, 16], strides = [1, 1]} : vector<2x512xf32> to vector<2x16xf32>
    %270 = arith.negf %269 : vector<2x16xf32>
    %271 = math.exp %270 : vector<2x16xf32>
    %cst_43 = arith.constant 1.000000e+00 : f32
    %272 = vector.broadcast %cst_43 : f32 to vector<2x16xf32>
    %273 = arith.addf %272, %271 : vector<2x16xf32>
    %274 = arith.divf %272, %273 : vector<2x16xf32>
    %275 = arith.mulf %266, %244 : vector<2x16xf32>
    %276 = arith.mulf %260, %268 : vector<2x16xf32>
    %277 = arith.addf %275, %276 : vector<2x16xf32>
    %278 = math.tanh %277 : vector<2x16xf32>
    %279 = arith.mulf %274, %278 : vector<2x16xf32>
    %cst_44 = arith.constant 0.000000e+00 : f32
    %280 = vector.broadcast %cst_44 : f32 to vector<2x16xf32>
    %281 = vector.shape_cast %61 : vector<2x1xi1> to vector<2x1xi1>
    %282 = vector.broadcast %281 : vector<2x1xi1> to vector<2x16xi1>
    %283 = arith.select %282, %277, %244 : vector<2x16xi1>, vector<2x16xf32>
    %284 = vector.shape_cast %61 : vector<2x1xi1> to vector<2x1xi1>
    %285 = vector.broadcast %284 : vector<2x1xi1> to vector<2x16xi1>
    %286 = arith.select %285, %279, %247 : vector<2x16xi1>, vector<2x16xf32>
    %287 = vector.shape_cast %61 : vector<2x1xi1> to vector<2x1xi1>
    %288 = vector.broadcast %287 : vector<2x1xi1> to vector<2x16xi1>
    %289 = arith.select %288, %279, %280 : vector<2x16xi1>, vector<2x16xf32>
    %cst_45 = arith.constant dense<0.000000e+00> : vector<2x512xf32>
    %290 = tpu.matmul %286, %1, %cst_45 {dimension_numbers = #tpu.dot_dimension_numbers<[1], [0], [0], [1], [0, 0, 1, 1], [], []>} : vector<2x16xf32>, vector<16x512xf32>, vector<2x512xf32> -> vector<2x512xf32>
    %291 = arith.addf %40, %290 : vector<2x512xf32>
    %292 = vector.broadcast %3 : vector<1x512xf32> to vector<2x512xf32>
    %293 = arith.addf %291, %292 : vector<2x512xf32>
    %294 = vector.extract_strided_slice %293 {offsets = [0, 0], sizes = [2, 16], strides = [1, 1]} : vector<2x512xf32> to vector<2x16xf32>
    %295 = arith.negf %294 : vector<2x16xf32>
    %296 = math.exp %295 : vector<2x16xf32>
    %cst_46 = arith.constant 1.000000e+00 : f32
    %297 = vector.broadcast %cst_46 : f32 to vector<2x16xf32>
    %298 = arith.addf %297, %296 : vector<2x16xf32>
    %299 = arith.divf %297, %298 : vector<2x16xf32>
    %300 = vector.extract_strided_slice %293 {offsets = [0, 128], sizes = [2, 16], strides = [1, 1]} : vector<2x512xf32> to vector<2x16xf32>
    %301 = arith.negf %300 : vector<2x16xf32>
    %302 = math.exp %301 : vector<2x16xf32>
    %cst_47 = arith.constant 1.000000e+00 : f32
    %303 = vector.broadcast %cst_47 : f32 to vector<2x16xf32>
    %304 = arith.addf %303, %302 : vector<2x16xf32>
    %305 = arith.divf %303, %304 : vector<2x16xf32>
    %306 = vector.extract_strided_slice %293 {offsets = [0, 256], sizes = [2, 16], strides = [1, 1]} : vector<2x512xf32> to vector<2x16xf32>
    %307 = math.tanh %306 : vector<2x16xf32>
    %308 = vector.extract_strided_slice %293 {offsets = [0, 384], sizes = [2, 16], strides = [1, 1]} : vector<2x512xf32> to vector<2x16xf32>
    %309 = arith.negf %308 : vector<2x16xf32>
    %310 = math.exp %309 : vector<2x16xf32>
    %cst_48 = arith.constant 1.000000e+00 : f32
    %311 = vector.broadcast %cst_48 : f32 to vector<2x16xf32>
    %312 = arith.addf %311, %310 : vector<2x16xf32>
    %313 = arith.divf %311, %312 : vector<2x16xf32>
    %314 = arith.mulf %305, %283 : vector<2x16xf32>
    %315 = arith.mulf %299, %307 : vector<2x16xf32>
    %316 = arith.addf %314, %315 : vector<2x16xf32>
    %317 = math.tanh %316 : vector<2x16xf32>
    %318 = arith.mulf %313, %317 : vector<2x16xf32>
    %cst_49 = arith.constant 0.000000e+00 : f32
    %319 = vector.broadcast %cst_49 : f32 to vector<2x16xf32>
    %320 = vector.shape_cast %63 : vector<2x1xi1> to vector<2x1xi1>
    %321 = vector.broadcast %320 : vector<2x1xi1> to vector<2x16xi1>
    %322 = arith.select %321, %316, %283 : vector<2x16xi1>, vector<2x16xf32>
    %323 = vector.shape_cast %63 : vector<2x1xi1> to vector<2x1xi1>
    %324 = vector.broadcast %323 : vector<2x1xi1> to vector<2x16xi1>
    %325 = arith.select %324, %318, %286 : vector<2x16xi1>, vector<2x16xf32>
    %326 = vector.shape_cast %63 : vector<2x1xi1> to vector<2x1xi1>
    %327 = vector.broadcast %326 : vector<2x1xi1> to vector<2x16xi1>
    %328 = arith.select %327, %318, %319 : vector<2x16xi1>, vector<2x16xf32>
    %cst_50 = arith.constant dense<0.000000e+00> : vector<2x512xf32>
    %329 = tpu.matmul %325, %1, %cst_50 {dimension_numbers = #tpu.dot_dimension_numbers<[1], [0], [0], [1], [0, 0, 1, 1], [], []>} : vector<2x16xf32>, vector<16x512xf32>, vector<2x512xf32> -> vector<2x512xf32>
    %330 = arith.addf %41, %329 : vector<2x512xf32>
    %331 = vector.broadcast %3 : vector<1x512xf32> to vector<2x512xf32>
    %332 = arith.addf %330, %331 : vector<2x512xf32>
    %333 = vector.extract_strided_slice %332 {offsets = [0, 0], sizes = [2, 16], strides = [1, 1]} : vector<2x512xf32> to vector<2x16xf32>
    %334 = arith.negf %333 : vector<2x16xf32>
    %335 = math.exp %334 : vector<2x16xf32>
    %cst_51 = arith.constant 1.000000e+00 : f32
    %336 = vector.broadcast %cst_51 : f32 to vector<2x16xf32>
    %337 = arith.addf %336, %335 : vector<2x16xf32>
    %338 = arith.divf %336, %337 : vector<2x16xf32>
    %339 = vector.extract_strided_slice %332 {offsets = [0, 128], sizes = [2, 16], strides = [1, 1]} : vector<2x512xf32> to vector<2x16xf32>
    %340 = arith.negf %339 : vector<2x16xf32>
    %341 = math.exp %340 : vector<2x16xf32>
    %cst_52 = arith.constant 1.000000e+00 : f32
    %342 = vector.broadcast %cst_52 : f32 to vector<2x16xf32>
    %343 = arith.addf %342, %341 : vector<2x16xf32>
    %344 = arith.divf %342, %343 : vector<2x16xf32>
    %345 = vector.extract_strided_slice %332 {offsets = [0, 256], sizes = [2, 16], strides = [1, 1]} : vector<2x512xf32> to vector<2x16xf32>
    %346 = math.tanh %345 : vector<2x16xf32>
    %347 = vector.extract_strided_slice %332 {offsets = [0, 384], sizes = [2, 16], strides = [1, 1]} : vector<2x512xf32> to vector<2x16xf32>
    %348 = arith.negf %347 : vector<2x16xf32>
    %349 = math.exp %348 : vector<2x16xf32>
    %cst_53 = arith.constant 1.000000e+00 : f32
    %350 = vector.broadcast %cst_53 : f32 to vector<2x16xf32>
    %351 = arith.addf %350, %349 : vector<2x16xf32>
    %352 = arith.divf %350, %351 : vector<2x16xf32>
    %353 = arith.mulf %344, %322 : vector<2x16xf32>
    %354 = arith.mulf %338, %346 : vector<2x16xf32>
    %355 = arith.addf %353, %354 : vector<2x16xf32>
    %356 = math.tanh %355 : vector<2x16xf32>
    %357 = arith.mulf %352, %356 : vector<2x16xf32>
    %cst_54 = arith.constant 0.000000e+00 : f32
    %358 = vector.broadcast %cst_54 : f32 to vector<2x16xf32>
    %359 = vector.shape_cast %65 : vector<2x1xi1> to vector<2x1xi1>
    %360 = vector.broadcast %359 : vector<2x1xi1> to vector<2x16xi1>
    %361 = arith.select %360, %357, %358 : vector<2x16xi1>, vector<2x16xf32>
    %362 = vector.broadcast %4 : vector<1x512xf32> to vector<2x512xf32>
    %363 = arith.addf %49, %362 : vector<2x512xf32>
    %364 = vector.extract_strided_slice %363 {offsets = [0, 0], sizes = [2, 16], strides = [1, 1]} : vector<2x512xf32> to vector<2x16xf32>
    %365 = arith.negf %364 : vector<2x16xf32>
    %366 = math.exp %365 : vector<2x16xf32>
    %cst_55 = arith.constant 1.000000e+00 : f32
    %367 = vector.broadcast %cst_55 : f32 to vector<2x16xf32>
    %368 = arith.addf %367, %366 : vector<2x16xf32>
    %369 = arith.divf %367, %368 : vector<2x16xf32>
    %370 = vector.extract_strided_slice %363 {offsets = [0, 256], sizes = [2, 16], strides = [1, 1]} : vector<2x512xf32> to vector<2x16xf32>
    %371 = math.tanh %370 : vector<2x16xf32>
    %372 = vector.extract_strided_slice %363 {offsets = [0, 384], sizes = [2, 16], strides = [1, 1]} : vector<2x512xf32> to vector<2x16xf32>
    %373 = arith.negf %372 : vector<2x16xf32>
    %374 = math.exp %373 : vector<2x16xf32>
    %cst_56 = arith.constant 1.000000e+00 : f32
    %375 = vector.broadcast %cst_56 : f32 to vector<2x16xf32>
    %376 = arith.addf %375, %374 : vector<2x16xf32>
    %377 = arith.divf %375, %376 : vector<2x16xf32>
    %378 = arith.mulf %369, %371 : vector<2x16xf32>
    %379 = math.tanh %378 : vector<2x16xf32>
    %380 = arith.mulf %377, %379 : vector<2x16xf32>
    %cst_57 = arith.constant 0.000000e+00 : f32
    %381 = vector.broadcast %cst_57 : f32 to vector<2x16xf32>
    %382 = vector.shape_cast %65 : vector<2x1xi1> to vector<2x1xi1>
    %383 = vector.broadcast %382 : vector<2x1xi1> to vector<2x16xi1>
    %384 = arith.select %383, %378, %381 : vector<2x16xi1>, vector<2x16xf32>
    %385 = vector.shape_cast %65 : vector<2x1xi1> to vector<2x1xi1>
    %386 = vector.broadcast %385 : vector<2x1xi1> to vector<2x16xi1>
    %387 = arith.select %386, %380, %381 : vector<2x16xi1>, vector<2x16xf32>
    %388 = vector.shape_cast %65 : vector<2x1xi1> to vector<2x1xi1>
    %389 = vector.broadcast %388 : vector<2x1xi1> to vector<2x16xi1>
    %390 = arith.select %389, %380, %381 : vector<2x16xi1>, vector<2x16xf32>
    %cst_58 = arith.constant dense<0.000000e+00> : vector<2x512xf32>
    %391 = tpu.matmul %387, %2, %cst_58 {dimension_numbers = #tpu.dot_dimension_numbers<[1], [0], [0], [1], [0, 0, 1, 1], [], []>} : vector<2x16xf32>, vector<16x512xf32>, vector<2x512xf32> -> vector<2x512xf32>
    %392 = arith.addf %48, %391 : vector<2x512xf32>
    %393 = vector.broadcast %4 : vector<1x512xf32> to vector<2x512xf32>
    %394 = arith.addf %392, %393 : vector<2x512xf32>
    %395 = vector.extract_strided_slice %394 {offsets = [0, 0], sizes = [2, 16], strides = [1, 1]} : vector<2x512xf32> to vector<2x16xf32>
    %396 = arith.negf %395 : vector<2x16xf32>
    %397 = math.exp %396 : vector<2x16xf32>
    %cst_59 = arith.constant 1.000000e+00 : f32
    %398 = vector.broadcast %cst_59 : f32 to vector<2x16xf32>
    %399 = arith.addf %398, %397 : vector<2x16xf32>
    %400 = arith.divf %398, %399 : vector<2x16xf32>
    %401 = vector.extract_strided_slice %394 {offsets = [0, 128], sizes = [2, 16], strides = [1, 1]} : vector<2x512xf32> to vector<2x16xf32>
    %402 = arith.negf %401 : vector<2x16xf32>
    %403 = math.exp %402 : vector<2x16xf32>
    %cst_60 = arith.constant 1.000000e+00 : f32
    %404 = vector.broadcast %cst_60 : f32 to vector<2x16xf32>
    %405 = arith.addf %404, %403 : vector<2x16xf32>
    %406 = arith.divf %404, %405 : vector<2x16xf32>
    %407 = vector.extract_strided_slice %394 {offsets = [0, 256], sizes = [2, 16], strides = [1, 1]} : vector<2x512xf32> to vector<2x16xf32>
    %408 = math.tanh %407 : vector<2x16xf32>
    %409 = vector.extract_strided_slice %394 {offsets = [0, 384], sizes = [2, 16], strides = [1, 1]} : vector<2x512xf32> to vector<2x16xf32>
    %410 = arith.negf %409 : vector<2x16xf32>
    %411 = math.exp %410 : vector<2x16xf32>
    %cst_61 = arith.constant 1.000000e+00 : f32
    %412 = vector.broadcast %cst_61 : f32 to vector<2x16xf32>
    %413 = arith.addf %412, %411 : vector<2x16xf32>
    %414 = arith.divf %412, %413 : vector<2x16xf32>
    %415 = arith.mulf %406, %384 : vector<2x16xf32>
    %416 = arith.mulf %400, %408 : vector<2x16xf32>
    %417 = arith.addf %415, %416 : vector<2x16xf32>
    %418 = math.tanh %417 : vector<2x16xf32>
    %419 = arith.mulf %414, %418 : vector<2x16xf32>
    %cst_62 = arith.constant 0.000000e+00 : f32
    %420 = vector.broadcast %cst_62 : f32 to vector<2x16xf32>
    %421 = vector.shape_cast %63 : vector<2x1xi1> to vector<2x1xi1>
    %422 = vector.broadcast %421 : vector<2x1xi1> to vector<2x16xi1>
    %423 = arith.select %422, %417, %384 : vector<2x16xi1>, vector<2x16xf32>
    %424 = vector.shape_cast %63 : vector<2x1xi1> to vector<2x1xi1>
    %425 = vector.broadcast %424 : vector<2x1xi1> to vector<2x16xi1>
    %426 = arith.select %425, %419, %387 : vector<2x16xi1>, vector<2x16xf32>
    %427 = vector.shape_cast %63 : vector<2x1xi1> to vector<2x1xi1>
    %428 = vector.broadcast %427 : vector<2x1xi1> to vector<2x16xi1>
    %429 = arith.select %428, %419, %420 : vector<2x16xi1>, vector<2x16xf32>
    %cst_63 = arith.constant dense<0.000000e+00> : vector<2x512xf32>
    %430 = tpu.matmul %426, %2, %cst_63 {dimension_numbers = #tpu.dot_dimension_numbers<[1], [0], [0], [1], [0, 0, 1, 1], [], []>} : vector<2x16xf32>, vector<16x512xf32>, vector<2x512xf32> -> vector<2x512xf32>
    %431 = arith.addf %47, %430 : vector<2x512xf32>
    %432 = vector.broadcast %4 : vector<1x512xf32> to vector<2x512xf32>
    %433 = arith.addf %431, %432 : vector<2x512xf32>
    %434 = vector.extract_strided_slice %433 {offsets = [0, 0], sizes = [2, 16], strides = [1, 1]} : vector<2x512xf32> to vector<2x16xf32>
    %435 = arith.negf %434 : vector<2x16xf32>
    %436 = math.exp %435 : vector<2x16xf32>
    %cst_64 = arith.constant 1.000000e+00 : f32
    %437 = vector.broadcast %cst_64 : f32 to vector<2x16xf32>
    %438 = arith.addf %437, %436 : vector<2x16xf32>
    %439 = arith.divf %437, %438 : vector<2x16xf32>
    %440 = vector.extract_strided_slice %433 {offsets = [0, 128], sizes = [2, 16], strides = [1, 1]} : vector<2x512xf32> to vector<2x16xf32>
    %441 = arith.negf %440 : vector<2x16xf32>
    %442 = math.exp %441 : vector<2x16xf32>
    %cst_65 = arith.constant 1.000000e+00 : f32
    %443 = vector.broadcast %cst_65 : f32 to vector<2x16xf32>
    %444 = arith.addf %443, %442 : vector<2x16xf32>
    %445 = arith.divf %443, %444 : vector<2x16xf32>
    %446 = vector.extract_strided_slice %433 {offsets = [0, 256], sizes = [2, 16], strides = [1, 1]} : vector<2x512xf32> to vector<2x16xf32>
    %447 = math.tanh %446 : vector<2x16xf32>
    %448 = vector.extract_strided_slice %433 {offsets = [0, 384], sizes = [2, 16], strides = [1, 1]} : vector<2x512xf32> to vector<2x16xf32>
    %449 = arith.negf %448 : vector<2x16xf32>
    %450 = math.exp %449 : vector<2x16xf32>
    %cst_66 = arith.constant 1.000000e+00 : f32
    %451 = vector.broadcast %cst_66 : f32 to vector<2x16xf32>
    %452 = arith.addf %451, %450 : vector<2x16xf32>
    %453 = arith.divf %451, %452 : vector<2x16xf32>
    %454 = arith.mulf %445, %423 : vector<2x16xf32>
    %455 = arith.mulf %439, %447 : vector<2x16xf32>
    %456 = arith.addf %454, %455 : vector<2x16xf32>
    %457 = math.tanh %456 : vector<2x16xf32>
    %458 = arith.mulf %453, %457 : vector<2x16xf32>
    %cst_67 = arith.constant 0.000000e+00 : f32
    %459 = vector.broadcast %cst_67 : f32 to vector<2x16xf32>
    %460 = vector.shape_cast %61 : vector<2x1xi1> to vector<2x1xi1>
    %461 = vector.broadcast %460 : vector<2x1xi1> to vector<2x16xi1>
    %462 = arith.select %461, %456, %423 : vector<2x16xi1>, vector<2x16xf32>
    %463 = vector.shape_cast %61 : vector<2x1xi1> to vector<2x1xi1>
    %464 = vector.broadcast %463 : vector<2x1xi1> to vector<2x16xi1>
    %465 = arith.select %464, %458, %426 : vector<2x16xi1>, vector<2x16xf32>
    %466 = vector.shape_cast %61 : vector<2x1xi1> to vector<2x1xi1>
    %467 = vector.broadcast %466 : vector<2x1xi1> to vector<2x16xi1>
    %468 = arith.select %467, %458, %459 : vector<2x16xi1>, vector<2x16xf32>
    %cst_68 = arith.constant dense<0.000000e+00> : vector<2x512xf32>
    %469 = tpu.matmul %465, %2, %cst_68 {dimension_numbers = #tpu.dot_dimension_numbers<[1], [0], [0], [1], [0, 0, 1, 1], [], []>} : vector<2x16xf32>, vector<16x512xf32>, vector<2x512xf32> -> vector<2x512xf32>
    %470 = arith.addf %46, %469 : vector<2x512xf32>
    %471 = vector.broadcast %4 : vector<1x512xf32> to vector<2x512xf32>
    %472 = arith.addf %470, %471 : vector<2x512xf32>
    %473 = vector.extract_strided_slice %472 {offsets = [0, 0], sizes = [2, 16], strides = [1, 1]} : vector<2x512xf32> to vector<2x16xf32>
    %474 = arith.negf %473 : vector<2x16xf32>
    %475 = math.exp %474 : vector<2x16xf32>
    %cst_69 = arith.constant 1.000000e+00 : f32
    %476 = vector.broadcast %cst_69 : f32 to vector<2x16xf32>
    %477 = arith.addf %476, %475 : vector<2x16xf32>
    %478 = arith.divf %476, %477 : vector<2x16xf32>
    %479 = vector.extract_strided_slice %472 {offsets = [0, 128], sizes = [2, 16], strides = [1, 1]} : vector<2x512xf32> to vector<2x16xf32>
    %480 = arith.negf %479 : vector<2x16xf32>
    %481 = math.exp %480 : vector<2x16xf32>
    %cst_70 = arith.constant 1.000000e+00 : f32
    %482 = vector.broadcast %cst_70 : f32 to vector<2x16xf32>
    %483 = arith.addf %482, %481 : vector<2x16xf32>
    %484 = arith.divf %482, %483 : vector<2x16xf32>
    %485 = vector.extract_strided_slice %472 {offsets = [0, 256], sizes = [2, 16], strides = [1, 1]} : vector<2x512xf32> to vector<2x16xf32>
    %486 = math.tanh %485 : vector<2x16xf32>
    %487 = vector.extract_strided_slice %472 {offsets = [0, 384], sizes = [2, 16], strides = [1, 1]} : vector<2x512xf32> to vector<2x16xf32>
    %488 = arith.negf %487 : vector<2x16xf32>
    %489 = math.exp %488 : vector<2x16xf32>
    %cst_71 = arith.constant 1.000000e+00 : f32
    %490 = vector.broadcast %cst_71 : f32 to vector<2x16xf32>
    %491 = arith.addf %490, %489 : vector<2x16xf32>
    %492 = arith.divf %490, %491 : vector<2x16xf32>
    %493 = arith.mulf %484, %462 : vector<2x16xf32>
    %494 = arith.mulf %478, %486 : vector<2x16xf32>
    %495 = arith.addf %493, %494 : vector<2x16xf32>
    %496 = math.tanh %495 : vector<2x16xf32>
    %497 = arith.mulf %492, %496 : vector<2x16xf32>
    %cst_72 = arith.constant 0.000000e+00 : f32
    %498 = vector.broadcast %cst_72 : f32 to vector<2x16xf32>
    %499 = vector.shape_cast %59 : vector<2x1xi1> to vector<2x1xi1>
    %500 = vector.broadcast %499 : vector<2x1xi1> to vector<2x16xi1>
    %501 = arith.select %500, %495, %462 : vector<2x16xi1>, vector<2x16xf32>
    %502 = vector.shape_cast %59 : vector<2x1xi1> to vector<2x1xi1>
    %503 = vector.broadcast %502 : vector<2x1xi1> to vector<2x16xi1>
    %504 = arith.select %503, %497, %465 : vector<2x16xi1>, vector<2x16xf32>
    %505 = vector.shape_cast %59 : vector<2x1xi1> to vector<2x1xi1>
    %506 = vector.broadcast %505 : vector<2x1xi1> to vector<2x16xi1>
    %507 = arith.select %506, %497, %498 : vector<2x16xi1>, vector<2x16xf32>
    %cst_73 = arith.constant dense<0.000000e+00> : vector<2x512xf32>
    %508 = tpu.matmul %504, %2, %cst_73 {dimension_numbers = #tpu.dot_dimension_numbers<[1], [0], [0], [1], [0, 0, 1, 1], [], []>} : vector<2x16xf32>, vector<16x512xf32>, vector<2x512xf32> -> vector<2x512xf32>
    %509 = arith.addf %45, %508 : vector<2x512xf32>
    %510 = vector.broadcast %4 : vector<1x512xf32> to vector<2x512xf32>
    %511 = arith.addf %509, %510 : vector<2x512xf32>
    %512 = vector.extract_strided_slice %511 {offsets = [0, 0], sizes = [2, 16], strides = [1, 1]} : vector<2x512xf32> to vector<2x16xf32>
    %513 = arith.negf %512 : vector<2x16xf32>
    %514 = math.exp %513 : vector<2x16xf32>
    %cst_74 = arith.constant 1.000000e+00 : f32
    %515 = vector.broadcast %cst_74 : f32 to vector<2x16xf32>
    %516 = arith.addf %515, %514 : vector<2x16xf32>
    %517 = arith.divf %515, %516 : vector<2x16xf32>
    %518 = vector.extract_strided_slice %511 {offsets = [0, 128], sizes = [2, 16], strides = [1, 1]} : vector<2x512xf32> to vector<2x16xf32>
    %519 = arith.negf %518 : vector<2x16xf32>
    %520 = math.exp %519 : vector<2x16xf32>
    %cst_75 = arith.constant 1.000000e+00 : f32
    %521 = vector.broadcast %cst_75 : f32 to vector<2x16xf32>
    %522 = arith.addf %521, %520 : vector<2x16xf32>
    %523 = arith.divf %521, %522 : vector<2x16xf32>
    %524 = vector.extract_strided_slice %511 {offsets = [0, 256], sizes = [2, 16], strides = [1, 1]} : vector<2x512xf32> to vector<2x16xf32>
    %525 = math.tanh %524 : vector<2x16xf32>
    %526 = vector.extract_strided_slice %511 {offsets = [0, 384], sizes = [2, 16], strides = [1, 1]} : vector<2x512xf32> to vector<2x16xf32>
    %527 = arith.negf %526 : vector<2x16xf32>
    %528 = math.exp %527 : vector<2x16xf32>
    %cst_76 = arith.constant 1.000000e+00 : f32
    %529 = vector.broadcast %cst_76 : f32 to vector<2x16xf32>
    %530 = arith.addf %529, %528 : vector<2x16xf32>
    %531 = arith.divf %529, %530 : vector<2x16xf32>
    %532 = arith.mulf %523, %501 : vector<2x16xf32>
    %533 = arith.mulf %517, %525 : vector<2x16xf32>
    %534 = arith.addf %532, %533 : vector<2x16xf32>
    %535 = math.tanh %534 : vector<2x16xf32>
    %536 = arith.mulf %531, %535 : vector<2x16xf32>
    %cst_77 = arith.constant 0.000000e+00 : f32
    %537 = vector.broadcast %cst_77 : f32 to vector<2x16xf32>
    %538 = vector.shape_cast %57 : vector<2x1xi1> to vector<2x1xi1>
    %539 = vector.broadcast %538 : vector<2x1xi1> to vector<2x16xi1>
    %540 = arith.select %539, %534, %501 : vector<2x16xi1>, vector<2x16xf32>
    %541 = vector.shape_cast %57 : vector<2x1xi1> to vector<2x1xi1>
    %542 = vector.broadcast %541 : vector<2x1xi1> to vector<2x16xi1>
    %543 = arith.select %542, %536, %504 : vector<2x16xi1>, vector<2x16xf32>
    %544 = vector.shape_cast %57 : vector<2x1xi1> to vector<2x1xi1>
    %545 = vector.broadcast %544 : vector<2x1xi1> to vector<2x16xi1>
    %546 = arith.select %545, %536, %537 : vector<2x16xi1>, vector<2x16xf32>
    %cst_78 = arith.constant dense<0.000000e+00> : vector<2x512xf32>
    %547 = tpu.matmul %543, %2, %cst_78 {dimension_numbers = #tpu.dot_dimension_numbers<[1], [0], [0], [1], [0, 0, 1, 1], [], []>} : vector<2x16xf32>, vector<16x512xf32>, vector<2x512xf32> -> vector<2x512xf32>
    %548 = arith.addf %44, %547 : vector<2x512xf32>
    %549 = vector.broadcast %4 : vector<1x512xf32> to vector<2x512xf32>
    %550 = arith.addf %548, %549 : vector<2x512xf32>
    %551 = vector.extract_strided_slice %550 {offsets = [0, 0], sizes = [2, 16], strides = [1, 1]} : vector<2x512xf32> to vector<2x16xf32>
    %552 = arith.negf %551 : vector<2x16xf32>
    %553 = math.exp %552 : vector<2x16xf32>
    %cst_79 = arith.constant 1.000000e+00 : f32
    %554 = vector.broadcast %cst_79 : f32 to vector<2x16xf32>
    %555 = arith.addf %554, %553 : vector<2x16xf32>
    %556 = arith.divf %554, %555 : vector<2x16xf32>
    %557 = vector.extract_strided_slice %550 {offsets = [0, 128], sizes = [2, 16], strides = [1, 1]} : vector<2x512xf32> to vector<2x16xf32>
    %558 = arith.negf %557 : vector<2x16xf32>
    %559 = math.exp %558 : vector<2x16xf32>
    %cst_80 = arith.constant 1.000000e+00 : f32
    %560 = vector.broadcast %cst_80 : f32 to vector<2x16xf32>
    %561 = arith.addf %560, %559 : vector<2x16xf32>
    %562 = arith.divf %560, %561 : vector<2x16xf32>
    %563 = vector.extract_strided_slice %550 {offsets = [0, 256], sizes = [2, 16], strides = [1, 1]} : vector<2x512xf32> to vector<2x16xf32>
    %564 = math.tanh %563 : vector<2x16xf32>
    %565 = vector.extract_strided_slice %550 {offsets = [0, 384], sizes = [2, 16], strides = [1, 1]} : vector<2x512xf32> to vector<2x16xf32>
    %566 = arith.negf %565 : vector<2x16xf32>
    %567 = math.exp %566 : vector<2x16xf32>
    %cst_81 = arith.constant 1.000000e+00 : f32
    %568 = vector.broadcast %cst_81 : f32 to vector<2x16xf32>
    %569 = arith.addf %568, %567 : vector<2x16xf32>
    %570 = arith.divf %568, %569 : vector<2x16xf32>
    %571 = arith.mulf %562, %540 : vector<2x16xf32>
    %572 = arith.mulf %556, %564 : vector<2x16xf32>
    %573 = arith.addf %571, %572 : vector<2x16xf32>
    %574 = math.tanh %573 : vector<2x16xf32>
    %575 = arith.mulf %570, %574 : vector<2x16xf32>
    %cst_82 = arith.constant 0.000000e+00 : f32
    %576 = vector.broadcast %cst_82 : f32 to vector<2x16xf32>
    %577 = vector.shape_cast %55 : vector<2x1xi1> to vector<2x1xi1>
    %578 = vector.broadcast %577 : vector<2x1xi1> to vector<2x16xi1>
    %579 = arith.select %578, %573, %540 : vector<2x16xi1>, vector<2x16xf32>
    %580 = vector.shape_cast %55 : vector<2x1xi1> to vector<2x1xi1>
    %581 = vector.broadcast %580 : vector<2x1xi1> to vector<2x16xi1>
    %582 = arith.select %581, %575, %543 : vector<2x16xi1>, vector<2x16xf32>
    %583 = vector.shape_cast %55 : vector<2x1xi1> to vector<2x1xi1>
    %584 = vector.broadcast %583 : vector<2x1xi1> to vector<2x16xi1>
    %585 = arith.select %584, %575, %576 : vector<2x16xi1>, vector<2x16xf32>
    %cst_83 = arith.constant dense<0.000000e+00> : vector<2x512xf32>
    %586 = tpu.matmul %582, %2, %cst_83 {dimension_numbers = #tpu.dot_dimension_numbers<[1], [0], [0], [1], [0, 0, 1, 1], [], []>} : vector<2x16xf32>, vector<16x512xf32>, vector<2x512xf32> -> vector<2x512xf32>
    %587 = arith.addf %43, %586 : vector<2x512xf32>
    %588 = vector.broadcast %4 : vector<1x512xf32> to vector<2x512xf32>
    %589 = arith.addf %587, %588 : vector<2x512xf32>
    %590 = vector.extract_strided_slice %589 {offsets = [0, 0], sizes = [2, 16], strides = [1, 1]} : vector<2x512xf32> to vector<2x16xf32>
    %591 = arith.negf %590 : vector<2x16xf32>
    %592 = math.exp %591 : vector<2x16xf32>
    %cst_84 = arith.constant 1.000000e+00 : f32
    %593 = vector.broadcast %cst_84 : f32 to vector<2x16xf32>
    %594 = arith.addf %593, %592 : vector<2x16xf32>
    %595 = arith.divf %593, %594 : vector<2x16xf32>
    %596 = vector.extract_strided_slice %589 {offsets = [0, 128], sizes = [2, 16], strides = [1, 1]} : vector<2x512xf32> to vector<2x16xf32>
    %597 = arith.negf %596 : vector<2x16xf32>
    %598 = math.exp %597 : vector<2x16xf32>
    %cst_85 = arith.constant 1.000000e+00 : f32
    %599 = vector.broadcast %cst_85 : f32 to vector<2x16xf32>
    %600 = arith.addf %599, %598 : vector<2x16xf32>
    %601 = arith.divf %599, %600 : vector<2x16xf32>
    %602 = vector.extract_strided_slice %589 {offsets = [0, 256], sizes = [2, 16], strides = [1, 1]} : vector<2x512xf32> to vector<2x16xf32>
    %603 = math.tanh %602 : vector<2x16xf32>
    %604 = vector.extract_strided_slice %589 {offsets = [0, 384], sizes = [2, 16], strides = [1, 1]} : vector<2x512xf32> to vector<2x16xf32>
    %605 = arith.negf %604 : vector<2x16xf32>
    %606 = math.exp %605 : vector<2x16xf32>
    %cst_86 = arith.constant 1.000000e+00 : f32
    %607 = vector.broadcast %cst_86 : f32 to vector<2x16xf32>
    %608 = arith.addf %607, %606 : vector<2x16xf32>
    %609 = arith.divf %607, %608 : vector<2x16xf32>
    %610 = arith.mulf %601, %579 : vector<2x16xf32>
    %611 = arith.mulf %595, %603 : vector<2x16xf32>
    %612 = arith.addf %610, %611 : vector<2x16xf32>
    %613 = math.tanh %612 : vector<2x16xf32>
    %614 = arith.mulf %609, %613 : vector<2x16xf32>
    %cst_87 = arith.constant 0.000000e+00 : f32
    %615 = vector.broadcast %cst_87 : f32 to vector<2x16xf32>
    %616 = vector.shape_cast %53 : vector<2x1xi1> to vector<2x1xi1>
    %617 = vector.broadcast %616 : vector<2x1xi1> to vector<2x16xi1>
    %618 = arith.select %617, %612, %579 : vector<2x16xi1>, vector<2x16xf32>
    %619 = vector.shape_cast %53 : vector<2x1xi1> to vector<2x1xi1>
    %620 = vector.broadcast %619 : vector<2x1xi1> to vector<2x16xi1>
    %621 = arith.select %620, %614, %582 : vector<2x16xi1>, vector<2x16xf32>
    %622 = vector.shape_cast %53 : vector<2x1xi1> to vector<2x1xi1>
    %623 = vector.broadcast %622 : vector<2x1xi1> to vector<2x16xi1>
    %624 = arith.select %623, %614, %615 : vector<2x16xi1>, vector<2x16xf32>
    %cst_88 = arith.constant dense<0.000000e+00> : vector<2x512xf32>
    %625 = tpu.matmul %621, %2, %cst_88 {dimension_numbers = #tpu.dot_dimension_numbers<[1], [0], [0], [1], [0, 0, 1, 1], [], []>} : vector<2x16xf32>, vector<16x512xf32>, vector<2x512xf32> -> vector<2x512xf32>
    %626 = arith.addf %42, %625 : vector<2x512xf32>
    %627 = vector.broadcast %4 : vector<1x512xf32> to vector<2x512xf32>
    %628 = arith.addf %626, %627 : vector<2x512xf32>
    %629 = vector.extract_strided_slice %628 {offsets = [0, 0], sizes = [2, 16], strides = [1, 1]} : vector<2x512xf32> to vector<2x16xf32>
    %630 = arith.negf %629 : vector<2x16xf32>
    %631 = math.exp %630 : vector<2x16xf32>
    %cst_89 = arith.constant 1.000000e+00 : f32
    %632 = vector.broadcast %cst_89 : f32 to vector<2x16xf32>
    %633 = arith.addf %632, %631 : vector<2x16xf32>
    %634 = arith.divf %632, %633 : vector<2x16xf32>
    %635 = vector.extract_strided_slice %628 {offsets = [0, 128], sizes = [2, 16], strides = [1, 1]} : vector<2x512xf32> to vector<2x16xf32>
    %636 = arith.negf %635 : vector<2x16xf32>
    %637 = math.exp %636 : vector<2x16xf32>
    %cst_90 = arith.constant 1.000000e+00 : f32
    %638 = vector.broadcast %cst_90 : f32 to vector<2x16xf32>
    %639 = arith.addf %638, %637 : vector<2x16xf32>
    %640 = arith.divf %638, %639 : vector<2x16xf32>
    %641 = vector.extract_strided_slice %628 {offsets = [0, 256], sizes = [2, 16], strides = [1, 1]} : vector<2x512xf32> to vector<2x16xf32>
    %642 = math.tanh %641 : vector<2x16xf32>
    %643 = vector.extract_strided_slice %628 {offsets = [0, 384], sizes = [2, 16], strides = [1, 1]} : vector<2x512xf32> to vector<2x16xf32>
    %644 = arith.negf %643 : vector<2x16xf32>
    %645 = math.exp %644 : vector<2x16xf32>
    %cst_91 = arith.constant 1.000000e+00 : f32
    %646 = vector.broadcast %cst_91 : f32 to vector<2x16xf32>
    %647 = arith.addf %646, %645 : vector<2x16xf32>
    %648 = arith.divf %646, %647 : vector<2x16xf32>
    %649 = arith.mulf %640, %618 : vector<2x16xf32>
    %650 = arith.mulf %634, %642 : vector<2x16xf32>
    %651 = arith.addf %649, %650 : vector<2x16xf32>
    %652 = math.tanh %651 : vector<2x16xf32>
    %653 = arith.mulf %648, %652 : vector<2x16xf32>
    %cst_92 = arith.constant 0.000000e+00 : f32
    %654 = vector.broadcast %cst_92 : f32 to vector<2x16xf32>
    %655 = vector.shape_cast %51 : vector<2x1xi1> to vector<2x1xi1>
    %656 = vector.broadcast %655 : vector<2x1xi1> to vector<2x16xi1>
    %657 = arith.select %656, %653, %654 : vector<2x16xi1>, vector<2x16xf32>
    %658 = tpu.iota {dimensions = array<i32: 1>} : vector<1x8xi32>
    %659 = vector.extract_strided_slice %94 {offsets = [0, 0], sizes = [1, 16], strides = [1, 1]} : vector<2x16xf32> to vector<1x16xf32>
    %660 = vector.extract_strided_slice %133 {offsets = [0, 0], sizes = [1, 16], strides = [1, 1]} : vector<2x16xf32> to vector<1x16xf32>
    %661 = vector.extract_strided_slice %172 {offsets = [0, 0], sizes = [1, 16], strides = [1, 1]} : vector<2x16xf32> to vector<1x16xf32>
    %662 = vector.extract_strided_slice %211 {offsets = [0, 0], sizes = [1, 16], strides = [1, 1]} : vector<2x16xf32> to vector<1x16xf32>
    %663 = vector.extract_strided_slice %250 {offsets = [0, 0], sizes = [1, 16], strides = [1, 1]} : vector<2x16xf32> to vector<1x16xf32>
    %664 = vector.extract_strided_slice %289 {offsets = [0, 0], sizes = [1, 16], strides = [1, 1]} : vector<2x16xf32> to vector<1x16xf32>
    %665 = vector.extract_strided_slice %328 {offsets = [0, 0], sizes = [1, 16], strides = [1, 1]} : vector<2x16xf32> to vector<1x16xf32>
    %666 = vector.extract_strided_slice %361 {offsets = [0, 0], sizes = [1, 16], strides = [1, 1]} : vector<2x16xf32> to vector<1x16xf32>
    %667 = tpu.concatenate %659, %660, %661, %662, %663, %664, %665, %666 in 0 : vector<1x16xf32>, vector<1x16xf32>, vector<1x16xf32>, vector<1x16xf32>, vector<1x16xf32>, vector<1x16xf32>, vector<1x16xf32>, vector<1x16xf32> -> vector<8x16xf32>
    %668 = vector.extract_strided_slice %657 {offsets = [0, 0], sizes = [1, 16], strides = [1, 1]} : vector<2x16xf32> to vector<1x16xf32>
    %669 = vector.extract_strided_slice %624 {offsets = [0, 0], sizes = [1, 16], strides = [1, 1]} : vector<2x16xf32> to vector<1x16xf32>
    %670 = vector.extract_strided_slice %585 {offsets = [0, 0], sizes = [1, 16], strides = [1, 1]} : vector<2x16xf32> to vector<1x16xf32>
    %671 = vector.extract_strided_slice %546 {offsets = [0, 0], sizes = [1, 16], strides = [1, 1]} : vector<2x16xf32> to vector<1x16xf32>
    %672 = vector.extract_strided_slice %507 {offsets = [0, 0], sizes = [1, 16], strides = [1, 1]} : vector<2x16xf32> to vector<1x16xf32>
    %673 = vector.extract_strided_slice %468 {offsets = [0, 0], sizes = [1, 16], strides = [1, 1]} : vector<2x16xf32> to vector<1x16xf32>
    %674 = vector.extract_strided_slice %429 {offsets = [0, 0], sizes = [1, 16], strides = [1, 1]} : vector<2x16xf32> to vector<1x16xf32>
    %675 = vector.extract_strided_slice %390 {offsets = [0, 0], sizes = [1, 16], strides = [1, 1]} : vector<2x16xf32> to vector<1x16xf32>
    %676 = tpu.concatenate %668, %669, %670, %671, %672, %673, %674, %675 in 0 : vector<1x16xf32>, vector<1x16xf32>, vector<1x16xf32>, vector<1x16xf32>, vector<1x16xf32>, vector<1x16xf32>, vector<1x16xf32>, vector<1x16xf32> -> vector<8x16xf32>
    %677 = tpu.concatenate %667, %676 in 1 : vector<8x16xf32>, vector<8x16xf32> -> vector<8x32xf32>
    %cst_93 = arith.constant dense<0.000000e+00> : vector<8x16xf32>
    %678 = tpu.matmul %677, %5, %cst_93 {dimension_numbers = #tpu.dot_dimension_numbers<[1], [0], [0], [1], [0, 0, 1, 1], [], []>} : vector<8x32xf32>, vector<32x16xf32>, vector<8x16xf32> -> vector<8x16xf32>
    %679 = math.tanh %678 : vector<8x16xf32>
    %cst_94 = arith.constant dense<0.000000e+00> : vector<8x2xf32>
    %680 = tpu.matmul %679, %6, %cst_94 {dimension_numbers = #tpu.dot_dimension_numbers<[1], [0], [0], [1], [0, 0, 1, 1], [], []>} : vector<8x16xf32>, vector<16x2xf32>, vector<8x2xf32> -> vector<8x2xf32>
    %681 = tpu.transpose %680, [1, 0] : vector<8x2xf32> -> vector<2x8xf32>
    %682 = vector.extract_strided_slice %0 {offsets = [0, 0], sizes = [1, 1], strides = [1, 1]} : vector<2x1xi32> to vector<1x1xi32>
    %683 = vector.broadcast %682 : vector<1x1xi32> to vector<1x8xi32>
    %684 = arith.cmpi slt, %658, %683 : vector<1x8xi32>
    %685 = arith.extui %684 : vector<1x8xi1> to vector<1x8xi32>
    %686 = arith.sitofp %685 : vector<1x8xi32> to vector<1x8xf32>
    %cst_95 = arith.constant 1.000000e+00 : f32
    %687 = vector.broadcast %cst_95 : f32 to vector<1x8xf32>
    %688 = arith.subf %687, %686 : vector<1x8xf32>
    %cst_96 = arith.constant -1.000000e+07 : f32
    %689 = vector.broadcast %cst_96 : f32 to vector<1x8xf32>
    %690 = arith.mulf %689, %688 : vector<1x8xf32>
    %691 = vector.broadcast %690 : vector<1x8xf32> to vector<2x8xf32>
    %692 = arith.addf %681, %691 : vector<2x8xf32>
    %cst_97 = arith.constant dense<0xFF800000> : vector<2xf32>
    %693 = vector.multi_reduction <maximumf>, %692, %cst_97 [1] : vector<2x8xf32> to vector<2xf32>
    %694 = vector.shape_cast %693 : vector<2xf32> to vector<2x1xf32>
    %695 = vector.broadcast %694 : vector<2x1xf32> to vector<2x8xf32>
    %696 = arith.subf %692, %695 : vector<2x8xf32>
    %697 = math.exp %696 : vector<2x8xf32>
    %cst_98 = arith.constant dense<0.000000e+00> : vector<2xf32>
    %698 = vector.multi_reduction <add>, %697, %cst_98 [1] : vector<2x8xf32> to vector<2xf32>
    %699 = vector.shape_cast %698 : vector<2xf32> to vector<2x1xf32>
    %700 = vector.broadcast %699 : vector<2x1xf32> to vector<2x8xf32>
    %701 = arith.divf %697, %700 : vector<2x8xf32>
    %cst_99 = arith.constant dense<0.000000e+00> : vector<2x32xf32>
    %702 = tpu.matmul %701, %677, %cst_99 {dimension_numbers = #tpu.dot_dimension_numbers<[1], [0], [0], [1], [0, 0, 1, 1], [], []>} : vector<2x8xf32>, vector<8x32xf32>, vector<2x32xf32> -> vector<2x32xf32>
    %cst_100 = arith.constant dense<0.000000e+00> : vector<32xf32>
    %703 = vector.multi_reduction <add>, %702, %cst_100 [0] : vector<2x32xf32> to vector<32xf32>
    %704 = vector.shape_cast %703 : vector<32xf32> to vector<1x32xf32>
    %cst_101 = arith.constant 5.000000e-01 : f32
    %705 = vector.broadcast %cst_101 : f32 to vector<1x32xf32>
    %706 = arith.mulf %704, %705 : vector<1x32xf32>
    %c0_102 = arith.constant 0 : index
    %c0_103 = arith.constant 0 : index
    %c0_104 = arith.constant 0 : index
    %707 = vector.load %arg11[%c0_102, %c0_103, %c0_104] : memref<2x2x8xf32, #tpu.memory_space<vmem>>, vector<1x2x8xf32>
    %708 = vector.shape_cast %707 : vector<1x2x8xf32> to vector<2x8xf32>
    %709 = vector.shape_cast %701 : vector<2x8xf32> to vector<1x2x8xf32>
    tpu.vector_store %arg11[%c0_102, %c0_103, %c0_104], %709 {strides = array<i32>} : memref<2x2x8xf32, #tpu.memory_space<vmem>>, vector<1x2x8xf32>,
    %710 = vector.extract_strided_slice %94 {offsets = [1, 0], sizes = [1, 16], strides = [1, 1]} : vector<2x16xf32> to vector<1x16xf32>
    %711 = vector.extract_strided_slice %133 {offsets = [1, 0], sizes = [1, 16], strides = [1, 1]} : vector<2x16xf32> to vector<1x16xf32>
    %712 = vector.extract_strided_slice %172 {offsets = [1, 0], sizes = [1, 16], strides = [1, 1]} : vector<2x16xf32> to vector<1x16xf32>
    %713 = vector.extract_strided_slice %211 {offsets = [1, 0], sizes = [1, 16], strides = [1, 1]} : vector<2x16xf32> to vector<1x16xf32>
    %714 = vector.extract_strided_slice %250 {offsets = [1, 0], sizes = [1, 16], strides = [1, 1]} : vector<2x16xf32> to vector<1x16xf32>
    %715 = vector.extract_strided_slice %289 {offsets = [1, 0], sizes = [1, 16], strides = [1, 1]} : vector<2x16xf32> to vector<1x16xf32>
    %716 = vector.extract_strided_slice %328 {offsets = [1, 0], sizes = [1, 16], strides = [1, 1]} : vector<2x16xf32> to vector<1x16xf32>
    %717 = vector.extract_strided_slice %361 {offsets = [1, 0], sizes = [1, 16], strides = [1, 1]} : vector<2x16xf32> to vector<1x16xf32>
    %718 = tpu.concatenate %710, %711, %712, %713, %714, %715, %716, %717 in 0 : vector<1x16xf32>, vector<1x16xf32>, vector<1x16xf32>, vector<1x16xf32>, vector<1x16xf32>, vector<1x16xf32>, vector<1x16xf32>, vector<1x16xf32> -> vector<8x16xf32>
    %719 = vector.extract_strided_slice %657 {offsets = [1, 0], sizes = [1, 16], strides = [1, 1]} : vector<2x16xf32> to vector<1x16xf32>
    %720 = vector.extract_strided_slice %624 {offsets = [1, 0], sizes = [1, 16], strides = [1, 1]} : vector<2x16xf32> to vector<1x16xf32>
    %721 = vector.extract_strided_slice %585 {offsets = [1, 0], sizes = [1, 16], strides = [1, 1]} : vector<2x16xf32> to vector<1x16xf32>
    %722 = vector.extract_strided_slice %546 {offsets = [1, 0], sizes = [1, 16], strides = [1, 1]} : vector<2x16xf32> to vector<1x16xf32>
    %723 = vector.extract_strided_slice %507 {offsets = [1, 0], sizes = [1, 16], strides = [1, 1]} : vector<2x16xf32> to vector<1x16xf32>
    %724 = vector.extract_strided_slice %468 {offsets = [1, 0], sizes = [1, 16], strides = [1, 1]} : vector<2x16xf32> to vector<1x16xf32>
    %725 = vector.extract_strided_slice %429 {offsets = [1, 0], sizes = [1, 16], strides = [1, 1]} : vector<2x16xf32> to vector<1x16xf32>
    %726 = vector.extract_strided_slice %390 {offsets = [1, 0], sizes = [1, 16], strides = [1, 1]} : vector<2x16xf32> to vector<1x16xf32>
    %727 = tpu.concatenate %719, %720, %721, %722, %723, %724, %725, %726 in 0 : vector<1x16xf32>, vector<1x16xf32>, vector<1x16xf32>, vector<1x16xf32>, vector<1x16xf32>, vector<1x16xf32>, vector<1x16xf32>, vector<1x16xf32> -> vector<8x16xf32>
    %728 = tpu.concatenate %718, %727 in 1 : vector<8x16xf32>, vector<8x16xf32> -> vector<8x32xf32>
    %cst_105 = arith.constant dense<0.000000e+00> : vector<8x16xf32>
    %729 = tpu.matmul %728, %5, %cst_105 {dimension_numbers = #tpu.dot_dimension_numbers<[1], [0], [0], [1], [0, 0, 1, 1], [], []>} : vector<8x32xf32>, vector<32x16xf32>, vector<8x16xf32> -> vector<8x16xf32>
    %730 = math.tanh %729 : vector<8x16xf32>
    %cst_106 = arith.constant dense<0.000000e+00> : vector<8x2xf32>
    %731 = tpu.matmul %730, %6, %cst_106 {dimension_numbers = #tpu.dot_dimension_numbers<[1], [0], [0], [1], [0, 0, 1, 1], [], []>} : vector<8x16xf32>, vector<16x2xf32>, vector<8x2xf32> -> vector<8x2xf32>
    %732 = tpu.transpose %731, [1, 0] : vector<8x2xf32> -> vector<2x8xf32>
    %733 = vector.extract_strided_slice %0 {offsets = [1, 0], sizes = [1, 1], strides = [1, 1]} : vector<2x1xi32> to vector<1x1xi32>
    %734 = vector.broadcast %733 : vector<1x1xi32> to vector<1x8xi32>
    %735 = arith.cmpi slt, %658, %734 : vector<1x8xi32>
    %736 = arith.extui %735 : vector<1x8xi1> to vector<1x8xi32>
    %737 = arith.sitofp %736 : vector<1x8xi32> to vector<1x8xf32>
    %cst_107 = arith.constant 1.000000e+00 : f32
    %738 = vector.broadcast %cst_107 : f32 to vector<1x8xf32>
    %739 = arith.subf %738, %737 : vector<1x8xf32>
    %cst_108 = arith.constant -1.000000e+07 : f32
    %740 = vector.broadcast %cst_108 : f32 to vector<1x8xf32>
    %741 = arith.mulf %740, %739 : vector<1x8xf32>
    %742 = vector.broadcast %741 : vector<1x8xf32> to vector<2x8xf32>
    %743 = arith.addf %732, %742 : vector<2x8xf32>
    %cst_109 = arith.constant dense<0xFF800000> : vector<2xf32>
    %744 = vector.multi_reduction <maximumf>, %743, %cst_109 [1] : vector<2x8xf32> to vector<2xf32>
    %745 = vector.shape_cast %744 : vector<2xf32> to vector<2x1xf32>
    %746 = vector.broadcast %745 : vector<2x1xf32> to vector<2x8xf32>
    %747 = arith.subf %743, %746 : vector<2x8xf32>
    %748 = math.exp %747 : vector<2x8xf32>
    %cst_110 = arith.constant dense<0.000000e+00> : vector<2xf32>
    %749 = vector.multi_reduction <add>, %748, %cst_110 [1] : vector<2x8xf32> to vector<2xf32>
    %750 = vector.shape_cast %749 : vector<2xf32> to vector<2x1xf32>
    %751 = vector.broadcast %750 : vector<2x1xf32> to vector<2x8xf32>
    %752 = arith.divf %748, %751 : vector<2x8xf32>
    %cst_111 = arith.constant dense<0.000000e+00> : vector<2x32xf32>
    %753 = tpu.matmul %752, %728, %cst_111 {dimension_numbers = #tpu.dot_dimension_numbers<[1], [0], [0], [1], [0, 0, 1, 1], [], []>} : vector<2x8xf32>, vector<8x32xf32>, vector<2x32xf32> -> vector<2x32xf32>
    %cst_112 = arith.constant dense<0.000000e+00> : vector<32xf32>
    %754 = vector.multi_reduction <add>, %753, %cst_112 [0] : vector<2x32xf32> to vector<32xf32>
    %755 = vector.shape_cast %754 : vector<32xf32> to vector<1x32xf32>
    %cst_113 = arith.constant 5.000000e-01 : f32
    %756 = vector.broadcast %cst_113 : f32 to vector<1x32xf32>
    %757 = arith.mulf %755, %756 : vector<1x32xf32>
    %c1 = arith.constant 1 : index
    %c0_114 = arith.constant 0 : index
    %c0_115 = arith.constant 0 : index
    %758 = vector.load %arg11[%c1, %c0_114, %c0_115] : memref<2x2x8xf32, #tpu.memory_space<vmem>>, vector<1x2x8xf32>
    %759 = vector.shape_cast %758 : vector<1x2x8xf32> to vector<2x8xf32>
    %760 = vector.shape_cast %752 : vector<2x8xf32> to vector<1x2x8xf32>
    tpu.vector_store %arg11[%c1, %c0_114, %c0_115], %760 {strides = array<i32>} : memref<2x2x8xf32, #tpu.memory_space<vmem>>, vector<1x2x8xf32>,
    %761 = tpu.concatenate %706, %757 in 0 : vector<1x32xf32>, vector<1x32xf32> -> vector<2x32xf32>
    %c0_116 = arith.constant 0 : index
    %c0_117 = arith.constant 0 : index
    %762 = vector.load %arg10[%c0_116, %c0_117] : memref<2x32xf32, #tpu.memory_space<vmem>>, vector<2x32xf32>
    tpu.vector_store %arg10[%c0_116, %c0_117], %761 {strides = array<i32>} : memref<2x32xf32, #tpu.memory_space<vmem>>, vector<2x32xf32>,
    return
  }
  func.func @transform_0(%arg0: i32) -> (i32, i32) {
    %c0_i32 = arith.constant 0 : i32
    %c0_i32_0 = arith.constant 0 : i32
    %c0_i32_1 = arith.constant 0 : i32
    return %c0_i32, %c0_i32_0 : i32, i32
  }
  func.func @transform_1(%arg0: i32) -> (i32, i32) {
    %c0_i32 = arith.constant 0 : i32
    %c0_i32_0 = arith.constant 0 : i32
    %c0_i32_1 = arith.constant 0 : i32
    return %c0_i32, %c0_i32_0 : i32, i32
  }
  func.func @transform_2(%arg0: i32) -> (i32, i32) {
    %c0_i32 = arith.constant 0 : i32
    %c0_i32_0 = arith.constant 0 : i32
    %c0_i32_1 = arith.constant 0 : i32
    return %c0_i32, %c0_i32_0 : i32, i32
  }
  func.func @transform_3(%arg0: i32) -> (i32, i32) {
    %c0_i32 = arith.constant 0 : i32
    %c0_i32_0 = arith.constant 0 : i32
    %c0_i32_1 = arith.constant 0 : i32
    return %c0_i32, %c0_i32_0 : i32, i32
  }
  func.func @transform_4(%arg0: i32) -> (i32, i32) {
    %c0_i32 = arith.constant 0 : i32
    %c0_i32_0 = arith.constant 0 : i32
    %c0_i32_1 = arith.constant 0 : i32
    return %c0_i32, %c0_i32_0 : i32, i32
  }
  func.func @transform_5(%arg0: i32) -> (i32, i32) {
    %c0_i32 = arith.constant 0 : i32
    %c0_i32_0 = arith.constant 0 : i32
    %c0_i32_1 = arith.constant 0 : i32
    return %c0_i32, %c0_i32_0 : i32, i32
  }
  func.func @transform_6(%arg0: i32) -> (i32, i32) {
    %c0_i32 = arith.constant 0 : i32
    %c0_i32_0 = arith.constant 0 : i32
    %c0_i32_1 = arith.constant 0 : i32
    return %c0_i32, %c0_i32_0 : i32, i32
  }
  func.func @transform_7(%arg0: i32) -> (i32, i32) {
    %c0_i32 = arith.constant 0 : i32
    %c0_i32_0 = arith.constant 0 : i32
    %c0_i32_1 = arith.constant 0 : i32
    return %c0_i32, %c0_i32_0 : i32, i32
  }
  func.func @transform_8(%arg0: i32) -> (i32, i32) {
    %c0_i32 = arith.constant 0 : i32
    %c0_i32_0 = arith.constant 0 : i32
    %c0_i32_1 = arith.constant 0 : i32
    return %c0_i32, %c0_i32_0 : i32, i32
  }
  func.func @transform_9(%arg0: i32) -> (i32, i32) {
    %c0_i32 = arith.constant 0 : i32
    %c0_i32_0 = arith.constant 0 : i32
    %c0_i32_1 = arith.constant 0 : i32
    return %c0_i32, %c0_i32_0 : i32, i32
  }
  func.func @transform_10(%arg0: i32) -> (i32, i32, i32) {
    %c0_i32 = arith.constant 0 : i32
    %c0_i32_0 = arith.constant 0 : i32
    %c0_i32_1 = arith.constant 0 : i32
    %c0_i32_2 = arith.constant 0 : i32
    return %c0_i32, %c0_i32_0, %c0_i32_1 : i32, i32, i32
  }
}

</mosaic_0001>

<llo_original>
// kernel: self_attn_forward.1
$region0: #{self_attn_forward.1}
  #allocation0 [shape = 'u32[]', space=smem, size = 0x4, offset = 0x4, fixed_abs, tag = 'smem constant byte address 0x4 - core index']
  #allocation1 [shape = 'u32[72,128]{1,0:T(1,128)}', space=vmem, size = 0x9000, scoped, tag = 'internal scratch']
  %s0 = inlined_call_operand.vmem [shape: f32[16,32], index: 0, kind: input, shape index: {}]
  %s1 = inlined_call_operand.vmem [shape: s32[2,1], index: 1, kind: input, shape index: {}]
  %s2 = inlined_call_operand.hbm [shape: f32[32,1024], index: 2, kind: input, shape index: {}]
  %s3 = inlined_call_operand.hbm [shape: f32[16,512], index: 3, kind: input, shape index: {}]
  %s4 = inlined_call_operand.hbm [shape: f32[16,512], index: 4, kind: input, shape index: {}]
  %s5 = inlined_call_operand.vmem [shape: f32[1,512], index: 5, kind: input, shape index: {}]
  %s6 = inlined_call_operand.vmem [shape: f32[1,512], index: 6, kind: input, shape index: {}]
  %s7 = inlined_call_operand.vmem [shape: f32[32,16], index: 7, kind: input, shape index: {}]
  %s8 = inlined_call_operand.vmem [shape: f32[16,2], index: 8, kind: input, shape index: {}]
  %s9 = inlined_call_operand.hbm [shape: f32[2,32], index: 9, kind: output, shape index: {0}]
  %s10 = inlined_call_operand.hbm [shape: f32[2,2,8], index: 10, kind: output, shape index: {1}]
  %11 = xla_tuple %s9, %s10
  %s12 = sld [smem:[#allocation0]]
  $region66: #{self_attn_forward.1} parent=0
    _
  %s14 = ssub.s32 1, %s12
  %s15 = scalar_select 0, %s14, %s12
  $region1: #{self_attn_forward.1} parent=0
    #allocation2 [shape = 'u8[131072]{0}', space=vmem, size = 0x20000, scoped, tag = 'input window, operand 2, single buffered']
    #allocation3 [shape = 's32[1]{0}', space=sflag, size = 0x4, scoped, tag = 'scoped memory for self_attn_forward.1']
    #allocation4 [shape = 's32[1]{0}', space=sflag, size = 0x4, scoped, tag = 'scoped memory for self_attn_forward.1']
    #allocation5 [shape = 'u8[32768]{0}', space=vmem, size = 0x8000, scoped, tag = 'input window, operand 3, single buffered']
    #allocation6 [shape = 's32[1]{0}', space=sflag, size = 0x4, scoped, tag = 'scoped memory for self_attn_forward.1']
    #allocation7 [shape = 'u8[32768]{0}', space=vmem, size = 0x8000, scoped, tag = 'input window, operand 4, single buffered']
    #allocation8 [shape = 'u8[1024]{0}', space=vmem, size = 0x400, scoped, tag = 'output window, operand 0, single buffered']
    #allocation9 [shape = 'u8[2048]{0}', space=vmem, size = 0x800, scoped, tag = 'output window, operand 1, single buffered']
    #allocation10 [shape = 's32[1]{0}', space=sflag, size = 0x4, scoped, tag = 'scoped memory for self_attn_forward.1']
    %16 = vsyncpa [#allocation3], 0
    %17 = vsyncpa [#allocation6], 0
    %18 = vsyncpa [#allocation4], 0
    %19 = vsyncpa [#allocation10], 0
    // Predicated region
    $region2: #{self_attn_forward.1} parent=1 // pred_check
      _
    $region3: #{self_attn_forward.1} parent=1 // pred_check_branch
      %21 = sbr.rel (0) target = $region5
    $region4: #{self_attn_forward.1} parent=1 // pred_region
      _
    $region5: #{self_attn_forward.1} parent=1 // pred_fallthru
      _
    // Predicated region
    $region6: #{self_attn_forward.1} parent=1 // pred_check
      _
    $region7: #{self_attn_forward.1} parent=1 // pred_check_branch
      %23 = sbr.rel (0) target = $region9
    $region8: #{self_attn_forward.1} parent=1 // pred_region
      _
    $region9: #{self_attn_forward.1} parent=1 // pred_fallthru
      _
    // Predicated region
    $region10: #{self_attn_forward.1} parent=1 // pred_check
      _
    $region11: #{self_attn_forward.1} parent=1 // pred_check_branch
      %25 = sbr.rel (0) target = $region13
    $region12: #{self_attn_forward.1} parent=1 // pred_region
      %27 = vsyncadd [#allocation3], 0
      %s28 = sshll.u32 %s2, 4
      %s29 = int_to_ptr.hbm [resolvable:$true] %s28
      %s30 = sshll.u32 [#allocation2], 4
      %s31 = int_to_ptr.vmem [resolvable:$true] %s30
      %36 = dma.hbm_to_vmem [thread:$0]  %s29, 4096, %s31, [#allocation3], 1024, 1024, 64
    $region13: #{self_attn_forward.1} parent=1 // pred_fallthru
      _
    // Predicated region
    $region14: #{self_attn_forward.1} parent=1 // pred_check
      _
    $region15: #{self_attn_forward.1} parent=1 // pred_check_branch
      %38 = sbr.rel (0) target = $region17
    $region16: #{self_attn_forward.1} parent=1 // pred_region
      %40 = vsyncadd [#allocation6], 0
      %s41 = sshll.u32 %s3, 4
      %s42 = int_to_ptr.hbm [resolvable:$true] %s41
      %s43 = sshll.u32 [#allocation5], 4
      %s44 = int_to_ptr.vmem [resolvable:$true] %s43
      %49 = dma.hbm_to_vmem [thread:$0]  %s42, 1024, %s44, [#allocation6], 512, 512, 32
    $region17: #{self_attn_forward.1} parent=1 // pred_fallthru
      _
    // Predicated region
    $region18: #{self_attn_forward.1} parent=1 // pred_check
      _
    $region19: #{self_attn_forward.1} parent=1 // pred_check_branch
      %51 = sbr.rel (0) target = $region21
    $region20: #{self_attn_forward.1} parent=1 // pred_region
      %53 = vsyncadd [#allocation6], 0
      %s54 = sshll.u32 %s4, 4
      %s55 = int_to_ptr.hbm [resolvable:$true] %s54
      %s56 = sshll.u32 [#allocation7], 4
      %s57 = int_to_ptr.vmem [resolvable:$true] %s56
      %62 = dma.hbm_to_vmem [thread:$0]  %s55, 1024, %s57, [#allocation6], 512, 512, 32
    $region21: #{self_attn_forward.1} parent=1 // pred_fallthru
      _
    // Predicated region
    $region22: #{self_attn_forward.1} parent=1 // pred_check
      _
    $region23: #{self_attn_forward.1} parent=1 // pred_check_branch
      %64 = sbr.rel (0) target = $region25
    $region24: #{self_attn_forward.1} parent=1 // pred_region
      _
    $region25: #{self_attn_forward.1} parent=1 // pred_fallthru
      _
    // Predicated region
    $region26: #{self_attn_forward.1} parent=1 // pred_check
      _
    $region27: #{self_attn_forward.1} parent=1 // pred_check_branch
      %66 = sbr.rel (0) target = $region29
    $region28: #{self_attn_forward.1} parent=1 // pred_region
      _
    $region29: #{self_attn_forward.1} parent=1 // pred_fallthru
      _
    // Predicated region
    $region30: #{self_attn_forward.1} parent=1 // pred_check
      _
    $region31: #{self_attn_forward.1} parent=1 // pred_check_branch
      %68 = sbr.rel (0) target = $region33
    $region32: #{self_attn_forward.1} parent=1 // pred_region
      _
    $region33: #{self_attn_forward.1} parent=1 // pred_fallthru
      _
    // Predicated region
    $region34: #{self_attn_forward.1} parent=1 // pred_check
      _
    $region35: #{self_attn_forward.1} parent=1 // pred_check_branch
      %70 = sbr.rel (0) target = $region37
    $region36: #{self_attn_forward.1} parent=1 // pred_region
      _
    $region37: #{self_attn_forward.1} parent=1 // pred_fallthru
      _
    // Predicated region
    $region38: #{self_attn_forward.1} parent=1 // pred_check
      _
    $region39: #{self_attn_forward.1} parent=1 // pred_check_branch
      %72 = sbr.rel (0) target = $region41
    $region40: #{self_attn_forward.1} parent=1 // pred_region
      %74 = dma.done [#allocation3], 4096
    $region41: #{self_attn_forward.1} parent=1 // pred_fallthru
      _
    // Predicated region
    $region42: #{self_attn_forward.1} parent=1 // pred_check
      _
    $region43: #{self_attn_forward.1} parent=1 // pred_check_branch
      %76 = sbr.rel (0) target = $region45
    $region44: #{self_attn_forward.1} parent=1 // pred_region
      %78 = dma.done [#allocation6], 1024
    $region45: #{self_attn_forward.1} parent=1 // pred_fallthru
      _
    // Predicated region
    $region46: #{self_attn_forward.1} parent=1 // pred_check
      _
    $region47: #{self_attn_forward.1} parent=1 // pred_check_branch
      %80 = sbr.rel (0) target = $region49
    $region48: #{self_attn_forward.1} parent=1 // pred_region
      %82 = dma.done [#allocation6], 1024
    $region49: #{self_attn_forward.1} parent=1 // pred_fallthru
      _
    %v83 = vld [vmem:[%s1] sm:$0x3]
    %v84 = vld [vmem:[#allocation5] sm:$0xff]
    %v85 = vld [vmem:[#allocation5 + $0x8] sm:$0xff]
    %v86 = vld [vmem:[#allocation5 + $0x10] sm:$0xff]
    %v87 = vld [vmem:[#allocation5 + $0x18] sm:$0xff]
    %v88 = vld [vmem:[#allocation5 + $0x20] sm:$0xff]
    %v89 = vld [vmem:[#allocation5 + $0x28] sm:$0xff]
    %v90 = vld [vmem:[#allocation5 + $0x30] sm:$0xff]
    %v91 = vld [vmem:[#allocation5 + $0x38] sm:$0xff]
    %v92 = vld [vmem:[#allocation7] sm:$0xff]
    %v93 = vld [vmem:[#allocation7 + $0x8] sm:$0xff]
    %v94 = vld [vmem:[#allocation7 + $0x10] sm:$0xff]
    %v95 = vld [vmem:[#allocation7 + $0x18] sm:$0xff]
    %v96 = vld [vmem:[#allocation7 + $0x20] sm:$0xff]
    %v97 = vld [vmem:[#allocation7 + $0x28] sm:$0xff]
    %v98 = vld [vmem:[#allocation7 + $0x30] sm:$0xff]
    %v99 = vld [vmem:[#allocation7 + $0x38] sm:$0xff]
    %v100 = vld [vmem:[%s5] sm:$0xf]
    %v101 = vld [vmem:[%s6] sm:$0xf]
    %v102 = vld [vmem:[%s7] sm:$0xff]
    %v103 = vld [vmem:[%s7 + $0x8] sm:$0xff]
    %v104 = vld [vmem:[%s7 + $0x10] sm:$0xff]
    %v105 = vld [vmem:[%s7 + $0x18] sm:$0xff]
    %v106 = vld [vmem:[%s8] sm:$0xff]
    %v107 = vld [vmem:[%s8 + $0x8] sm:$0xff]
    %v108 = vld [vmem:[%s0] sm:$0xff]
    %v109 = vld [vmem:[%s0 + $0x8] sm:$0xff]
    %v110 = vld [vmem:[#allocation2] sm:$0xff]
    %v111 = vld [vmem:[#allocation2 + $0x8] sm:$0xff]
    %v112 = vld [vmem:[#allocation2 + $0x10] sm:$0xff]
    %v113 = vld [vmem:[#allocation2 + $0x18] sm:$0xff]
    %v114 = vld [vmem:[#allocation2 + $0x20] sm:$0xff]
    %v115 = vld [vmem:[#allocation2 + $0x28] sm:$0xff]
    %v116 = vld [vmem:[#allocation2 + $0x30] sm:$0xff]
    %v117 = vld [vmem:[#allocation2 + $0x38] sm:$0xff]
    %v118 = vld [vmem:[#allocation2 + $0x40] sm:$0xff]
    %v119 = vld [vmem:[#allocation2 + $0x48] sm:$0xff]
    %v120 = vld [vmem:[#allocation2 + $0x50] sm:$0xff]
    %v121 = vld [vmem:[#allocation2 + $0x58] sm:$0xff]
    %v122 = vld [vmem:[#allocation2 + $0x60] sm:$0xff]
    %v123 = vld [vmem:[#allocation2 + $0x68] sm:$0xff]
    %v124 = vld [vmem:[#allocation2 + $0x70] sm:$0xff]
    %v125 = vld [vmem:[#allocation2 + $0x78] sm:$0xff]
    %v126 = vld [vmem:[#allocation2 + $0x80] sm:$0xff]
    %v127 = vld [vmem:[#allocation2 + $0x88] sm:$0xff]
    %v128 = vld [vmem:[#allocation2 + $0x90] sm:$0xff]
    %v129 = vld [vmem:[#allocation2 + $0x98] sm:$0xff]
    %v130 = vld [vmem:[#allocation2 + $0xa0] sm:$0xff]
    %v131 = vld [vmem:[#allocation2 + $0xa8] sm:$0xff]
    %v132 = vld [vmem:[#allocation2 + $0xb0] sm:$0xff]
    %v133 = vld [vmem:[#allocation2 + $0xb8] sm:$0xff]
    %v134 = vld [vmem:[#allocation2 + $0xc0] sm:$0xff]
    %v135 = vld [vmem:[#allocation2 + $0xc8] sm:$0xff]
    %v136 = vld [vmem:[#allocation2 + $0xd0] sm:$0xff]
    %v137 = vld [vmem:[#allocation2 + $0xd8] sm:$0xff]
    %v138 = vld [vmem:[#allocation2 + $0xe0] sm:$0xff]
    %v139 = vld [vmem:[#allocation2 + $0xe8] sm:$0xff]
    %v140 = vld [vmem:[#allocation2 + $0xf0] sm:$0xff]
    %v141 = vld [vmem:[#allocation2 + $0xf8] sm:$0xff]
    %vm142 = vcmask 261120
    %v144 = vsel %vm142, %v108, 0
    %v147 = vsel %vm142, %v109, 0
    %149 = vmatpush.msra.mxu0 0.0
    %150 = vmatpush.msra.mxu0 0.0
    %151 = vmatpush.msra.mxu0 0.0
    %152 = vmatpush.msra.mxu0 0.0
    %153 = vmatpush.msra.mxu0 0.0
    %154 = vmatpush.msra.mxu0 0.0
    %155 = vmatpush.msra.mxu0 0.0
    %156 = vmatpush.msra.mxu0 0.0
    %157 = vmatpush.msra.mxu0 0.0
    %158 = vmatpush.msra.mxu0 0.0
    %159 = vmatpush.msra.mxu0 0.0
    %160 = vmatpush.msra.mxu0 0.0
    %161 = vmatpush.msra.mxu0 %v134
    %162 = vmatpush.msra.mxu0 %v126
    %163 = vmatpush.msra.mxu0 %v118
    %164 = vmatpush.msra.mxu0 %v110
    %165 = vmatmul.f32.gmra.mxu0 %v144
    %v166 = vpop.f32.mrf.mxu0
    %v167 = vadd.f32 0.0, %v166
    %168 = vmatmul.f32.gmra.mxu0 %v147
    %v169 = vpop.f32.mrf.mxu0
    %v170 = vadd.f32 0.0, %v169
    %171 = vdwg.mxu0
    %172 = vmatpush.msra.mxu0 0.0
    %173 = vmatpush.msra.mxu0 0.0
    %174 = vmatpush.msra.mxu0 0.0
    %175 = vmatpush.msra.mxu0 0.0
    %176 = vmatpush.msra.mxu0 0.0
    %177 = vmatpush.msra.mxu0 0.0
    %178 = vmatpush.msra.mxu0 0.0
    %179 = vmatpush.msra.mxu0 0.0
    %180 = vmatpush.msra.mxu0 0.0
    %181 = vmatpush.msra.mxu0 0.0
    %182 = vmatpush.msra.mxu0 0.0
    %183 = vmatpush.msra.mxu0 0.0
    %184 = vmatpush.msra.mxu0 %v135
    %185 = vmatpush.msra.mxu0 %v127
    %186 = vmatpush.msra.mxu0 %v119
    %187 = vmatpush.msra.mxu0 %v111
    %188 = vmatmul.f32.gmra.mxu0 %v144
    %v189 = vpop.f32.mrf.mxu0
    %v190 = vadd.f32 0.0, %v189
    %191 = vmatmul.f32.gmra.mxu0 %v147
    %v192 = vpop.f32.mrf.mxu0
    %v193 = vadd.f32 0.0, %v192
    %194 = vdwg.mxu0
    %195 = vmatpush.msra.mxu0 0.0
    %196 = vmatpush.msra.mxu0 0.0
    %197 = vmatpush.msra.mxu0 0.0
    %198 = vmatpush.msra.mxu0 0.0
    %199 = vmatpush.msra.mxu0 0.0
    %200 = vmatpush.msra.mxu0 0.0
    %201 = vmatpush.msra.mxu0 0.0
    %202 = vmatpush.msra.mxu0 0.0
    %203 = vmatpush.msra.mxu0 0.0
    %204 = vmatpush.msra.mxu0 0.0
    %205 = vmatpush.msra.mxu0 0.0
    %206 = vmatpush.msra.mxu0 0.0
    %207 = vmatpush.msra.mxu0 %v136
    %208 = vmatpush.msra.mxu0 %v128
    %209 = vmatpush.msra.mxu0 %v120
    %210 = vmatpush.msra.mxu0 %v112
    %211 = vmatmul.f32.gmra.mxu0 %v144
    %v212 = vpop.f32.mrf.mxu0
    %v213 = vadd.f32 0.0, %v212
    %214 = vmatmul.f32.gmra.mxu0 %v147
    %v215 = vpop.f32.mrf.mxu0
    %v216 = vadd.f32 0.0, %v215
    %217 = vdwg.mxu0
    %218 = vmatpush.msra.mxu0 0.0
    %219 = vmatpush.msra.mxu0 0.0
    %220 = vmatpush.msra.mxu0 0.0
    %221 = vmatpush.msra.mxu0 0.0
    %222 = vmatpush.msra.mxu0 0.0
    %223 = vmatpush.msra.mxu0 0.0
    %224 = vmatpush.msra.mxu0 0.0
    %225 = vmatpush.msra.mxu0 0.0
    %226 = vmatpush.msra.mxu0 0.0
    %227 = vmatpush.msra.mxu0 0.0
    %228 = vmatpush.msra.mxu0 0.0
    %229 = vmatpush.msra.mxu0 0.0
    %230 = vmatpush.msra.mxu0 %v137
    %231 = vmatpush.msra.mxu0 %v129
    %232 = vmatpush.msra.mxu0 %v121
    %233 = vmatpush.msra.mxu0 %v113
    %234 = vmatmul.f32.gmra.mxu0 %v144
    %v235 = vpop.f32.mrf.mxu0
    %v236 = vadd.f32 0.0, %v235
    %237 = vmatmul.f32.gmra.mxu0 %v147
    %v238 = vpop.f32.mrf.mxu0
    %v239 = vadd.f32 0.0, %v238
    %240 = vdwg.mxu0
    %241 = vmatpush.msra.mxu0 0.0
    %242 = vmatpush.msra.mxu0 0.0
    %243 = vmatpush.msra.mxu0 0.0
    %244 = vmatpush.msra.mxu0 0.0
    %245 = vmatpush.msra.mxu0 0.0
    %246 = vmatpush.msra.mxu0 0.0
    %247 = vmatpush.msra.mxu0 0.0
    %248 = vmatpush.msra.mxu0 0.0
    %249 = vmatpush.msra.mxu0 0.0
    %250 = vmatpush.msra.mxu0 0.0
    %251 = vmatpush.msra.mxu0 0.0
    %252 = vmatpush.msra.mxu0 0.0
    %253 = vmatpush.msra.mxu0 %v138
    %254 = vmatpush.msra.mxu0 %v130
    %255 = vmatpush.msra.mxu0 %v122
    %256 = vmatpush.msra.mxu0 %v114
    %257 = vmatmul.f32.gmra.mxu0 %v144
    %v258 = vpop.f32.mrf.mxu0
    %v259 = vadd.f32 0.0, %v258
    %260 = vmatmul.f32.gmra.mxu0 %v147
    %v261 = vpop.f32.mrf.mxu0
    %v262 = vadd.f32 0.0, %v261
    %263 = vdwg.mxu0
    %264 = vmatpush.msra.mxu0 0.0
    %265 = vmatpush.msra.mxu0 0.0
    %266 = vmatpush.msra.mxu0 0.0
    %267 = vmatpush.msra.mxu0 0.0
    %268 = vmatpush.msra.mxu0 0.0
    %269 = vmatpush.msra.mxu0 0.0
    %270 = vmatpush.msra.mxu0 0.0
    %271 = vmatpush.msra.mxu0 0.0
    %272 = vmatpush.msra.mxu0 0.0
    %273 = vmatpush.msra.mxu0 0.0
    %274 = vmatpush.msra.mxu0 0.0
    %275 = vmatpush.msra.mxu0 0.0
    %276 = vmatpush.msra.mxu0 %v139
    %277 = vmatpush.msra.mxu0 %v131
    %278 = vmatpush.msra.mxu0 %v123
    %279 = vmatpush.msra.mxu0 %v115
    %280 = vmatmul.f32.gmra.mxu0 %v144
    %v281 = vpop.f32.mrf.mxu0
    %v282 = vadd.f32 0.0, %v281
    %283 = vmatmul.f32.gmra.mxu0 %v147
    %v284 = vpop.f32.mrf.mxu0
    %v285 = vadd.f32 0.0, %v284
    %286 = vdwg.mxu0
    %287 = vmatpush.msra.mxu0 0.0
    %288 = vmatpush.msra.mxu0 0.0
    %289 = vmatpush.msra.mxu0 0.0
    %290 = vmatpush.msra.mxu0 0.0
    %291 = vmatpush.msra.mxu0 0.0
    %292 = vmatpush.msra.mxu0 0.0
    %293 = vmatpush.msra.mxu0 0.0
    %294 = vmatpush.msra.mxu0 0.0
    %295 = vmatpush.msra.mxu0 0.0
    %296 = vmatpush.msra.mxu0 0.0
    %297 = vmatpush.msra.mxu0 0.0
    %298 = vmatpush.msra.mxu0 0.0
    %299 = vmatpush.msra.mxu0 %v140
    %300 = vmatpush.msra.mxu0 %v132
    %301 = vmatpush.msra.mxu0 %v124
    %302 = vmatpush.msra.mxu0 %v116
    %303 = vmatmul.f32.gmra.mxu0 %v144
    %v304 = vpop.f32.mrf.mxu0
    %v305 = vadd.f32 0.0, %v304
    %306 = vmatmul.f32.gmra.mxu0 %v147
    %v307 = vpop.f32.mrf.mxu0
    %v308 = vadd.f32 0.0, %v307
    %309 = vdwg.mxu0
    %310 = vmatpush.msra.mxu0 0.0
    %311 = vmatpush.msra.mxu0 0.0
    %312 = vmatpush.msra.mxu0 0.0
    %313 = vmatpush.msra.mxu0 0.0
    %314 = vmatpush.msra.mxu0 0.0
    %315 = vmatpush.msra.mxu0 0.0
    %316 = vmatpush.msra.mxu0 0.0
    %317 = vmatpush.msra.mxu0 0.0
    %318 = vmatpush.msra.mxu0 0.0
    %319 = vmatpush.msra.mxu0 0.0
    %320 = vmatpush.msra.mxu0 0.0
    %321 = vmatpush.msra.mxu0 0.0
    %322 = vmatpush.msra.mxu0 %v141
    %323 = vmatpush.msra.mxu0 %v133
    %324 = vmatpush.msra.mxu0 %v125
    %325 = vmatpush.msra.mxu0 %v117
    %326 = vmatmul.f32.gmra.mxu0 %v144
    %v327 = vpop.f32.mrf.mxu0
    %v328 = vadd.f32 0.0, %v327
    %329 = vmatmul.f32.gmra.mxu0 %v147
    %v330 = vpop.f32.mrf.mxu0
    %v331 = vadd.f32 0.0, %v330
    %332 = vdwg.mxu0
    %v340 = vrot.slane %v170, 7
    %v341 = vrot.slane %v216, 7
    %v342 = vrot.slane %v239, 7
    %v343 = vrot.slane %v262, 7
    %v344 = vrot.slane %v285, 7
    %v345 = vrot.slane %v308, 7
    %v346 = vrot.slane %v331, 7
    %vm354 = vcmask 1040384
    %v355 = vsel %vm354, %v167, %v340
    %v356 = vsel %vm354, %v213, %v341
    %v357 = vsel %vm354, %v236, %v342
    %v358 = vsel %vm354, %v259, %v343
    %v359 = vsel %vm354, %v282, %v344
    %v360 = vsel %vm354, %v305, %v345
    %v361 = vsel %vm354, %v328, %v346
    %v370 = vrot.slane %v167, 1
    %v371 = vrot.slane %v190, 1
    %v372 = vrot.slane %v213, 1
    %v373 = vrot.slane %v236, 1
    %v374 = vrot.slane %v259, 1
    %v375 = vrot.slane %v282, 1
    %v376 = vrot.slane %v305, 1
    %v377 = vrot.slane %v328, 1
    %v386 = vsel %vm354, %v370, %v170
    %v387 = vsel %vm354, %v371, %v193
    %v388 = vsel %vm354, %v372, %v216
    %v389 = vsel %vm354, %v373, %v239
    %v390 = vsel %vm354, %v374, %v262
    %v391 = vsel %vm354, %v375, %v285
    %v392 = vsel %vm354, %v376, %v308
    %v393 = vsel %vm354, %v377, %v331
    %v394 = vrot.slane %v167, 2
    %v395 = vrot.slane %v190, 2
    %v396 = vrot.slane %v213, 2
    %v397 = vrot.slane %v236, 2
    %v398 = vrot.slane %v259, 2
    %v399 = vrot.slane %v282, 2
    %v400 = vrot.slane %v305, 2
    %v401 = vrot.slane %v328, 2
    %v411 = vrot.slane %v170, 1
    %v412 = vrot.slane %v193, 1
    %v413 = vrot.slane %v216, 1
    %v414 = vrot.slane %v239, 1
    %v415 = vrot.slane %v262, 1
    %v416 = vrot.slane %v285, 1
    %v417 = vrot.slane %v308, 1
    %v418 = vrot.slane %v331, 1
    %v427 = vsel %vm354, %v394, %v411
    %v428 = vsel %vm354, %v395, %v412
    %v429 = vsel %vm354, %v396, %v413
    %v430 = vsel %vm354, %v397, %v414
    %v431 = vsel %vm354, %v398, %v415
    %v432 = vsel %vm354, %v399, %v416
    %v433 = vsel %vm354, %v400, %v417
    %v434 = vsel %vm354, %v401, %v418
    %v435 = vrot.slane %v167, 3
    %v436 = vrot.slane %v190, 3
    %v437 = vrot.slane %v213, 3
    %v438 = vrot.slane %v236, 3
    %v439 = vrot.slane %v259, 3
    %v440 = vrot.slane %v282, 3
    %v441 = vrot.slane %v305, 3
    %v442 = vrot.slane %v328, 3
    %v451 = vrot.slane %v170, 2
    %v452 = vrot.slane %v193, 2
    %v453 = vrot.slane %v216, 2
    %v454 = vrot.slane %v239, 2
    %v455 = vrot.slane %v262, 2
    %v456 = vrot.slane %v285, 2
    %v457 = vrot.slane %v308, 2
    %v458 = vrot.slane %v331, 2
    %v467 = vsel %vm354, %v435, %v451
    %v468 = vsel %vm354, %v436, %v452
    %v469 = vsel %vm354, %v437, %v453
    %v470 = vsel %vm354, %v438, %v454
    %v471 = vsel %vm354, %v439, %v455
    %v472 = vsel %vm354, %v440, %v456
    %v473 = vsel %vm354, %v441, %v457
    %v474 = vsel %vm354, %v442, %v458
    %v475 = vrot.slane %v167, 4
    %v476 = vrot.slane %v190, 4
    %v477 = vrot.slane %v213, 4
    %v478 = vrot.slane %v236, 4
    %v479 = vrot.slane %v259, 4
    %v480 = vrot.slane %v282, 4
    %v481 = vrot.slane %v305, 4
    %v482 = vrot.slane %v328, 4
    %v491 = vrot.slane %v170, 3
    %v492 = vrot.slane %v193, 3
    %v493 = vrot.slane %v216, 3
    %v494 = vrot.slane %v239, 3
    %v495 = vrot.slane %v262, 3
    %v496 = vrot.slane %v285, 3
    %v497 = vrot.slane %v308, 3
    %v498 = vrot.slane %v331, 3
    %v507 = vsel %vm354, %v475, %v491
    %v508 = vsel %vm354, %v476, %v492
    %v509 = vsel %vm354, %v477, %v493
    %v510 = vsel %vm354, %v478, %v494
    %v511 = vsel %vm354, %v479, %v495
    %v512 = vsel %vm354, %v480, %v496
    %v513 = vsel %vm354, %v481, %v497
    %v514 = vsel %vm354, %v482, %v498
    %v515 = vrot.slane %v167, 5
    %v516 = vrot.slane %v190, 5
    %v517 = vrot.slane %v213, 5
    %v518 = vrot.slane %v236, 5
    %v519 = vrot.slane %v259, 5
    %v520 = vrot.slane %v282, 5
    %v521 = vrot.slane %v305, 5
    %v522 = vrot.slane %v328, 5
    %v531 = vrot.slane %v170, 4
    %v532 = vrot.slane %v193, 4
    %v533 = vrot.slane %v216, 4
    %v534 = vrot.slane %v239, 4
    %v535 = vrot.slane %v262, 4
    %v536 = vrot.slane %v285, 4
    %v537 = vrot.slane %v308, 4
    %v538 = vrot.slane %v331, 4
    %v547 = vsel %vm354, %v515, %v531
    %v548 = vsel %vm354, %v516, %v532
    %v549 = vsel %vm354, %v517, %v533
    %v550 = vsel %vm354, %v518, %v534
    %v551 = vsel %vm354, %v519, %v535
    %v552 = vsel %vm354, %v520, %v536
    %v553 = vsel %vm354, %v521, %v537
    %v554 = vsel %vm354, %v522, %v538
    %v555 = vrot.slane %v167, 6
    %v556 = vrot.slane %v190, 6
    %v557 = vrot.slane %v213, 6
    %v558 = vrot.slane %v236, 6
    %v559 = vrot.slane %v259, 6
    %v560 = vrot.slane %v282, 6
    %v561 = vrot.slane %v305, 6
    %v562 = vrot.slane %v328, 6
    %v571 = vrot.slane %v170, 5
    %v572 = vrot.slane %v193, 5
    %v573 = vrot.slane %v216, 5
    %v574 = vrot.slane %v239, 5
    %v575 = vrot.slane %v262, 5
    %v576 = vrot.slane %v285, 5
    %v577 = vrot.slane %v308, 5
    %v578 = vrot.slane %v331, 5
    %v587 = vsel %vm354, %v555, %v571
    %v588 = vsel %vm354, %v556, %v572
    %v589 = vsel %vm354, %v557, %v573
    %v590 = vsel %vm354, %v558, %v574
    %v591 = vsel %vm354, %v559, %v575
    %v592 = vsel %vm354, %v560, %v576
    %v593 = vsel %vm354, %v561, %v577
    %v594 = vsel %vm354, %v562, %v578
    %v595 = vrot.slane %v167, 7
    %v596 = vrot.slane %v190, 7
    %v597 = vrot.slane %v213, 7
    %v598 = vrot.slane %v236, 7
    %v599 = vrot.slane %v259, 7
    %v600 = vrot.slane %v305, 7
    %v601 = vrot.slane %v328, 7
    %v609 = vrot.slane %v170, 6
    %v610 = vrot.slane %v193, 6
    %v611 = vrot.slane %v216, 6
    %v612 = vrot.slane %v239, 6
    %v613 = vrot.slane %v262, 6
    %v614 = vrot.slane %v308, 6
    %v615 = vrot.slane %v331, 6
    %v623 = vsel %vm354, %v595, %v609
    %v624 = vsel %vm354, %v596, %v610
    %v625 = vsel %vm354, %v597, %v611
    %v626 = vsel %vm354, %v598, %v612
    %v627 = vsel %vm354, %v599, %v613
    %v628 = vsel %vm354, %v600, %v614
    %v629 = vsel %vm354, %v601, %v615
    %vm630 = vcmp.gt.s32.totalorder %v83, 0
    %vm631 = vcmp.gt.s32.totalorder %v83, 1
    %vm632 = vcmp.gt.s32.totalorder %v83, 2
    %vm633 = vcmp.gt.s32.totalorder %v83, 3
    %vm634 = vcmp.gt.s32.totalorder %v83, 4
    %vm635 = vcmp.gt.s32.totalorder %v83, 5
    %vm636 = vcmp.gt.s32.totalorder %v83, 6
    %vm637 = vcmp.gt.s32.totalorder %v83, 7
    %v639 = vperm.slane %v100, 0
    %v640 = vperm.slane %v100, 1
    %v641 = vperm.slane %v100, 2
    %v642 = vperm.slane %v100, 3
    %v647 = vadd.f32 %v355, %v639
    %v648 = vadd.f32 %v356, %v641
    %v649 = vadd.f32 %v357, %v642
    %v650 = vxor.u32 %v647, 2147483648
    %v651 = vmul.f32 %v650, 1.442695
    %v652 = vpow.pop %v651
    %v653 = vadd.f32 %v652, 1.0
    %v654 = vrcp.pop %v653
    %v655 = vmul.f32 %v653, %v654
    %v656 = vsub.f32 1.0, %v655
    %v657 = vmul.f32 %v654, %v656
    %v658 = vadd.f32 %v654, %v657
    %vm659 = vweird.f32 %v653
    %vm660 = vweird.f32 %v654
    %vm661 = vmor %vm659, %vm660
    %v662 = vsel %vm661, %v654, %v658
    %v663 = vand.u32 2147483647, %v653
    %vm664 = vcmp.eq.f32.partialorder %v663, 8.507059e+37
    %v665 = vand.u32 %v653, 2147483648
    %v666 = vor.u32 1.1754944e-38, %v665
    %v667 = vsel %vm664, %v666, %v662
    %v668 = vmul.f32 1.0, %v667
    %v669 = vtanh.pop %v648
    %v670 = vxor.u32 %v649, 2147483648
    %v671 = vmul.f32 %v670, 1.442695
    %v672 = vpow.pop %v671
    %v673 = vadd.f32 %v672, 1.0
    %v674 = vrcp.pop %v673
    %v675 = vmul.f32 %v673, %v674
    %v676 = vsub.f32 1.0, %v675
    %v677 = vmul.f32 %v674, %v676
    %v678 = vadd.f32 %v674, %v677
    %vm679 = vweird.f32 %v673
    %vm680 = vweird.f32 %v674
    %vm681 = vmor %vm679, %vm680
    %v682 = vsel %vm681, %v674, %v678
    %v683 = vand.u32 2147483647, %v673
    %vm684 = vcmp.eq.f32.partialorder %v683, 8.507059e+37
    %v685 = vand.u32 %v673, 2147483648
    %v686 = vor.u32 1.1754944e-38, %v685
    %v687 = vsel %vm684, %v686, %v682
    %v688 = vmul.f32 1.0, %v687
    %v689 = vmul.f32 %v668, %v669
    %v690 = vtanh.pop %v689
    %v691 = vmul.f32 %v688, %v690
    %v692 = vsel %vm630, 1, 0
    %693 = vset.pattern.permute.xlu0 0
    %694 = vperm.xlu0 %693, %v692
    %v695 = vpop.permute.xlu0 %694
    %vm696 = vcmp.eq.s32.totalorder %v695, 1
    %v697 = vsel %vm696, %v689, 0.0
    %v698 = vsel %vm696, %v691, 0.0
    %vm699 = vcmask 130048
    %v701 = vsel %vm699, %v698, 0
    %703 = vmatpush.msra.mxu0 0.0
    %704 = vmatpush.msra.mxu0 0.0
    %705 = vmatpush.msra.mxu0 0.0
    %706 = vmatpush.msra.mxu0 0.0
    %707 = vmatpush.msra.mxu0 0.0
    %708 = vmatpush.msra.mxu0 0.0
    %709 = vmatpush.msra.mxu0 0.0
    %710 = vmatpush.msra.mxu0 0.0
    %711 = vmatpush.msra.mxu0 0.0
    %712 = vmatpush.msra.mxu0 0.0
    %713 = vmatpush.msra.mxu0 0.0
    %714 = vmatpush.msra.mxu0 0.0
    %715 = vmatpush.msra.mxu0 0.0
    %716 = vmatpush.msra.mxu0 0.0
    %717 = vmatpush.msra.mxu0 %v88
    %718 = vmatpush.msra.mxu0 %v84
    %719 = vmatmul.f32.gmra.mxu0 %v701
    %v720 = vpop.f32.mrf.mxu0
    %v721 = vadd.f32 0.0, %v720
    %722 = vdwg.mxu0
    %723 = vmatpush.msra.mxu0 0.0
    %724 = vmatpush.msra.mxu0 0.0
    %725 = vmatpush.msra.mxu0 0.0
    %726 = vmatpush.msra.mxu0 0.0
    %727 = vmatpush.msra.mxu0 0.0
    %728 = vmatpush.msra.mxu0 0.0
    %729 = vmatpush.msra.mxu0 0.0
    %730 = vmatpush.msra.mxu0 0.0
    %731 = vmatpush.msra.mxu0 0.0
    %732 = vmatpush.msra.mxu0 0.0
    %733 = vmatpush.msra.mxu0 0.0
    %734 = vmatpush.msra.mxu0 0.0
    %735 = vmatpush.msra.mxu0 0.0
    %736 = vmatpush.msra.mxu0 0.0
    %737 = vmatpush.msra.mxu0 %v89
    %738 = vmatpush.msra.mxu0 %v85
    %739 = vmatmul.f32.gmra.mxu0 %v701
    %v740 = vpop.f32.mrf.mxu0
    %v741 = vadd.f32 0.0, %v740
    %742 = vdwg.mxu0
    %743 = vmatpush.msra.mxu0 0.0
    %744 = vmatpush.msra.mxu0 0.0
    %745 = vmatpush.msra.mxu0 0.0
    %746 = vmatpush.msra.mxu0 0.0
    %747 = vmatpush.msra.mxu0 0.0
    %748 = vmatpush.msra.mxu0 0.0
    %749 = vmatpush.msra.mxu0 0.0
    %750 = vmatpush.msra.mxu0 0.0
    %751 = vmatpush.msra.mxu0 0.0
    %752 = vmatpush.msra.mxu0 0.0
    %753 = vmatpush.msra.mxu0 0.0
    %754 = vmatpush.msra.mxu0 0.0
    %755 = vmatpush.msra.mxu0 0.0
    %756 = vmatpush.msra.mxu0 0.0
    %757 = vmatpush.msra.mxu0 %v90
    %758 = vmatpush.msra.mxu0 %v86
    %759 = vmatmul.f32.gmra.mxu0 %v701
    %v760 = vpop.f32.mrf.mxu0
    %v761 = vadd.f32 0.0, %v760
    %762 = vdwg.mxu0
    %763 = vmatpush.msra.mxu0 0.0
    %764 = vmatpush.msra.mxu0 0.0
    %765 = vmatpush.msra.mxu0 0.0
    %766 = vmatpush.msra.mxu0 0.0
    %767 = vmatpush.msra.mxu0 0.0
    %768 = vmatpush.msra.mxu0 0.0
    %769 = vmatpush.msra.mxu0 0.0
    %770 = vmatpush.msra.mxu0 0.0
    %771 = vmatpush.msra.mxu0 0.0
    %772 = vmatpush.msra.mxu0 0.0
    %773 = vmatpush.msra.mxu0 0.0
    %774 = vmatpush.msra.mxu0 0.0
    %775 = vmatpush.msra.mxu0 0.0
    %776 = vmatpush.msra.mxu0 0.0
    %777 = vmatpush.msra.mxu0 %v91
    %778 = vmatpush.msra.mxu0 %v87
    %779 = vmatmul.f32.gmra.mxu0 %v701
    %v780 = vpop.f32.mrf.mxu0
    %v781 = vadd.f32 0.0, %v780
    %782 = vdwg.mxu0
    %v783 = vadd.f32 %v386, %v721
    %v784 = vadd.f32 %v387, %v741
    %v785 = vadd.f32 %v388, %v761
    %v786 = vadd.f32 %v389, %v781
    %v787 = vadd.f32 %v783, %v639
    %v788 = vadd.f32 %v784, %v640
    %v789 = vadd.f32 %v785, %v641
    %v790 = vadd.f32 %v786, %v642
    %v791 = vxor.u32 %v787, 2147483648
    %v792 = vmul.f32 %v791, 1.442695
    %v793 = vpow.pop %v792
    %v794 = vadd.f32 %v793, 1.0
    %v795 = vrcp.pop %v794
    %v796 = vmul.f32 %v794, %v795
    %v797 = vsub.f32 1.0, %v796
    %v798 = vmul.f32 %v795, %v797
    %v799 = vadd.f32 %v795, %v798
    %vm800 = vweird.f32 %v794
    %vm801 = vweird.f32 %v795
    %vm802 = vmor %vm800, %vm801
    %v803 = vsel %vm802, %v795, %v799
    %v804 = vand.u32 2147483647, %v794
    %vm805 = vcmp.eq.f32.partialorder %v804, 8.507059e+37
    %v806 = vand.u32 %v794, 2147483648
    %v807 = vor.u32 1.1754944e-38, %v806
    %v808 = vsel %vm805, %v807, %v803
    %v809 = vmul.f32 1.0, %v808
    %v810 = vxor.u32 %v788, 2147483648
    %v811 = vmul.f32 %v810, 1.442695
    %v812 = vpow.pop %v811
    %v813 = vadd.f32 %v812, 1.0
    %v814 = vrcp.pop %v813
    %v815 = vmul.f32 %v813, %v814
    %v816 = vsub.f32 1.0, %v815
    %v817 = vmul.f32 %v814, %v816
    %v818 = vadd.f32 %v814, %v817
    %vm819 = vweird.f32 %v813
    %vm820 = vweird.f32 %v814
    %vm821 = vmor %vm819, %vm820
    %v822 = vsel %vm821, %v814, %v818
    %v823 = vand.u32 2147483647, %v813
    %vm824 = vcmp.eq.f32.partialorder %v823, 8.507059e+37
    %v825 = vand.u32 %v813, 2147483648
    %v826 = vor.u32 1.1754944e-38, %v825
    %v827 = vsel %vm824, %v826, %v822
    %v828 = vmul.f32 1.0, %v827
    %v829 = vtanh.pop %v789
    %v830 = vxor.u32 %v790, 2147483648
    %v831 = vmul.f32 %v830, 1.442695
    %v832 = vpow.pop %v831
    %v833 = vadd.f32 %v832, 1.0
    %v834 = vrcp.pop %v833
    %v835 = vmul.f32 %v833, %v834
    %v836 = vsub.f32 1.0, %v835
    %v837 = vmul.f32 %v834, %v836
    %v838 = vadd.f32 %v834, %v837
    %vm839 = vweird.f32 %v833
    %vm840 = vweird.f32 %v834
    %vm841 = vmor %vm839, %vm840
    %v842 = vsel %vm841, %v834, %v838
    %v843 = vand.u32 2147483647, %v833
    %vm844 = vcmp.eq.f32.partialorder %v843, 8.507059e+37
    %v845 = vand.u32 %v833, 2147483648
    %v846 = vor.u32 1.1754944e-38, %v845
    %v847 = vsel %vm844, %v846, %v842
    %v848 = vmul.f32 1.0, %v847
    %v849 = vmul.f32 %v828, %v697
    %v850 = vmul.f32 %v809, %v829
    %v851 = vadd.f32 %v849, %v850
    %v852 = vtanh.pop %v851
    %v853 = vmul.f32 %v848, %v852
    %v854 = vsel %vm631, 1, 0
    %855 = vset.pattern.permute.xlu0 0
    %856 = vperm.xlu0 %855, %v854
    %v857 = vpop.permute.xlu0 %856
    %vm858 = vcmp.eq.s32.totalorder %v857, 1
    %v859 = vsel %vm858, %v851, %v697
    %v860 = vsel %vm858, %v853, %v698
    %v861 = vsel %vm858, %v853, 0.0
    %v863 = vsel %vm699, %v860, 0
    %865 = vmatpush.msra.mxu0 0.0
    %866 = vmatpush.msra.mxu0 0.0
    %867 = vmatpush.msra.mxu0 0.0
    %868 = vmatpush.msra.mxu0 0.0
    %869 = vmatpush.msra.mxu0 0.0
    %870 = vmatpush.msra.mxu0 0.0
    %871 = vmatpush.msra.mxu0 0.0
    %872 = vmatpush.msra.mxu0 0.0
    %873 = vmatpush.msra.mxu0 0.0
    %874 = vmatpush.msra.mxu0 0.0
    %875 = vmatpush.msra.mxu0 0.0
    %876 = vmatpush.msra.mxu0 0.0
    %877 = vmatpush.msra.mxu0 0.0
    %878 = vmatpush.msra.mxu0 0.0
    %879 = vmatpush.msra.mxu0 %v88
    %880 = vmatpush.msra.mxu0 %v84
    %881 = vmatmul.f32.gmra.mxu0 %v863
    %v882 = vpop.f32.mrf.mxu0
    %v883 = vadd.f32 0.0, %v882
    %884 = vdwg.mxu0
    %885 = vmatpush.msra.mxu0 0.0
    %886 = vmatpush.msra.mxu0 0.0
    %887 = vmatpush.msra.mxu0 0.0
    %888 = vmatpush.msra.mxu0 0.0
    %889 = vmatpush.msra.mxu0 0.0
    %890 = vmatpush.msra.mxu0 0.0
    %891 = vmatpush.msra.mxu0 0.0
    %892 = vmatpush.msra.mxu0 0.0
    %893 = vmatpush.msra.mxu0 0.0
    %894 = vmatpush.msra.mxu0 0.0
    %895 = vmatpush.msra.mxu0 0.0
    %896 = vmatpush.msra.mxu0 0.0
    %897 = vmatpush.msra.mxu0 0.0
    %898 = vmatpush.msra.mxu0 0.0
    %899 = vmatpush.msra.mxu0 %v89
    %900 = vmatpush.msra.mxu0 %v85
    %901 = vmatmul.f32.gmra.mxu0 %v863
    %v902 = vpop.f32.mrf.mxu0
    %v903 = vadd.f32 0.0, %v902
    %904 = vdwg.mxu0
    %905 = vmatpush.msra.mxu0 0.0
    %906 = vmatpush.msra.mxu0 0.0
    %907 = vmatpush.msra.mxu0 0.0
    %908 = vmatpush.msra.mxu0 0.0
    %909 = vmatpush.msra.mxu0 0.0
    %910 = vmatpush.msra.mxu0 0.0
    %911 = vmatpush.msra.mxu0 0.0
    %912 = vmatpush.msra.mxu0 0.0
    %913 = vmatpush.msra.mxu0 0.0
    %914 = vmatpush.msra.mxu0 0.0
    %915 = vmatpush.msra.mxu0 0.0
    %916 = vmatpush.msra.mxu0 0.0
    %917 = vmatpush.msra.mxu0 0.0
    %918 = vmatpush.msra.mxu0 0.0
    %919 = vmatpush.msra.mxu0 %v90
    %920 = vmatpush.msra.mxu0 %v86
    %921 = vmatmul.f32.gmra.mxu0 %v863
    %v922 = vpop.f32.mrf.mxu0
    %v923 = vadd.f32 0.0, %v922
    %924 = vdwg.mxu0
    %925 = vmatpush.msra.mxu0 0.0
    %926 = vmatpush.msra.mxu0 0.0
    %927 = vmatpush.msra.mxu0 0.0
    %928 = vmatpush.msra.mxu0 0.0
    %929 = vmatpush.msra.mxu0 0.0
    %930 = vmatpush.msra.mxu0 0.0
    %931 = vmatpush.msra.mxu0 0.0
    %932 = vmatpush.msra.mxu0 0.0
    %933 = vmatpush.msra.mxu0 0.0
    %934 = vmatpush.msra.mxu0 0.0
    %935 = vmatpush.msra.mxu0 0.0
    %936 = vmatpush.msra.mxu0 0.0
    %937 = vmatpush.msra.mxu0 0.0
    %938 = vmatpush.msra.mxu0 0.0
    %939 = vmatpush.msra.mxu0 %v91
    %940 = vmatpush.msra.mxu0 %v87
    %941 = vmatmul.f32.gmra.mxu0 %v863
    %v942 = vpop.f32.mrf.mxu0
    %v943 = vadd.f32 0.0, %v942
    %944 = vdwg.mxu0
    %v945 = vadd.f32 %v427, %v883
    %v946 = vadd.f32 %v428, %v903
    %v947 = vadd.f32 %v429, %v923
    %v948 = vadd.f32 %v430, %v943
    %v949 = vadd.f32 %v945, %v639
    %v950 = vadd.f32 %v946, %v640
    %v951 = vadd.f32 %v947, %v641
    %v952 = vadd.f32 %v948, %v642
    %v953 = vxor.u32 %v949, 2147483648
    %v954 = vmul.f32 %v953, 1.442695
    %v955 = vpow.pop %v954
    %v956 = vadd.f32 %v955, 1.0
    %v957 = vrcp.pop %v956
    %v958 = vmul.f32 %v956, %v957
    %v959 = vsub.f32 1.0, %v958
    %v960 = vmul.f32 %v957, %v959
    %v961 = vadd.f32 %v957, %v960
    %vm962 = vweird.f32 %v956
    %vm963 = vweird.f32 %v957
    %vm964 = vmor %vm962, %vm963
    %v965 = vsel %vm964, %v957, %v961
    %v966 = vand.u32 2147483647, %v956
    %vm967 = vcmp.eq.f32.partialorder %v966, 8.507059e+37
    %v968 = vand.u32 %v956, 2147483648
    %v969 = vor.u32 1.1754944e-38, %v968
    %v970 = vsel %vm967, %v969, %v965
    %v971 = vmul.f32 1.0, %v970
    %v972 = vxor.u32 %v950, 2147483648
    %v973 = vmul.f32 %v972, 1.442695
    %v974 = vpow.pop %v973
    %v975 = vadd.f32 %v974, 1.0
    %v976 = vrcp.pop %v975
    %v977 = vmul.f32 %v975, %v976
    %v978 = vsub.f32 1.0, %v977
    %v979 = vmul.f32 %v976, %v978
    %v980 = vadd.f32 %v976, %v979
    %vm981 = vweird.f32 %v975
    %vm982 = vweird.f32 %v976
    %vm983 = vmor %vm981, %vm982
    %v984 = vsel %vm983, %v976, %v980
    %v985 = vand.u32 2147483647, %v975
    %vm986 = vcmp.eq.f32.partialorder %v985, 8.507059e+37
    %v987 = vand.u32 %v975, 2147483648
    %v988 = vor.u32 1.1754944e-38, %v987
    %v989 = vsel %vm986, %v988, %v984
    %v990 = vmul.f32 1.0, %v989
    %v991 = vtanh.pop %v951
    %v992 = vxor.u32 %v952, 2147483648
    %v993 = vmul.f32 %v992, 1.442695
    %v994 = vpow.pop %v993
    %v995 = vadd.f32 %v994, 1.0
    %v996 = vrcp.pop %v995
    %v997 = vmul.f32 %v995, %v996
    %v998 = vsub.f32 1.0, %v997
    %v999 = vmul.f32 %v996, %v998
    %v1000 = vadd.f32 %v996, %v999
    %vm1001 = vweird.f32 %v995
    %vm1002 = vweird.f32 %v996
    %vm1003 = vmor %vm1001, %vm1002
    %v1004 = vsel %vm1003, %v996, %v1000
    %v1005 = vand.u32 2147483647, %v995
    %vm1006 = vcmp.eq.f32.partialorder %v1005, 8.507059e+37
    %v1007 = vand.u32 %v995, 2147483648
    %v1008 = vor.u32 1.1754944e-38, %v1007
    %v1009 = vsel %vm1006, %v1008, %v1004
    %v1010 = vmul.f32 1.0, %v1009
    %v1011 = vmul.f32 %v990, %v859
    %v1012 = vmul.f32 %v971, %v991
    %v1013 = vadd.f32 %v1011, %v1012
    %v1014 = vtanh.pop %v1013
    %v1015 = vmul.f32 %v1010, %v1014
    %v1016 = vsel %vm632, 1, 0
    %1017 = vset.pattern.permute.xlu0 0
    %1018 = vperm.xlu0 %1017, %v1016
    %v1019 = vpop.permute.xlu0 %1018
    %vm1020 = vcmp.eq.s32.totalorder %v1019, 1
    %v1021 = vsel %vm1020, %v1013, %v859
    %v1022 = vsel %vm1020, %v1015, %v860
    %v1023 = vsel %vm1020, %v1015, 0.0
    %v1025 = vsel %vm699, %v1022, 0
    %1027 = vmatpush.msra.mxu0 0.0
    %1028 = vmatpush.msra.mxu0 0.0
    %1029 = vmatpush.msra.mxu0 0.0
    %1030 = vmatpush.msra.mxu0 0.0
    %1031 = vmatpush.msra.mxu0 0.0
    %1032 = vmatpush.msra.mxu0 0.0
    %1033 = vmatpush.msra.mxu0 0.0
    %1034 = vmatpush.msra.mxu0 0.0
    %1035 = vmatpush.msra.mxu0 0.0
    %1036 = vmatpush.msra.mxu0 0.0
    %1037 = vmatpush.msra.mxu0 0.0
    %1038 = vmatpush.msra.mxu0 0.0
    %1039 = vmatpush.msra.mxu0 0.0
    %1040 = vmatpush.msra.mxu0 0.0
    %1041 = vmatpush.msra.mxu0 %v88
    %1042 = vmatpush.msra.mxu0 %v84
    %1043 = vmatmul.f32.gmra.mxu0 %v1025
    %v1044 = vpop.f32.mrf.mxu0
    %v1045 = vadd.f32 0.0, %v1044
    %1046 = vdwg.mxu0
    %1047 = vmatpush.msra.mxu0 0.0
    %1048 = vmatpush.msra.mxu0 0.0
    %1049 = vmatpush.msra.mxu0 0.0
    %1050 = vmatpush.msra.mxu0 0.0
    %1051 = vmatpush.msra.mxu0 0.0
    %1052 = vmatpush.msra.mxu0 0.0
    %1053 = vmatpush.msra.mxu0 0.0
    %1054 = vmatpush.msra.mxu0 0.0
    %1055 = vmatpush.msra.mxu0 0.0
    %1056 = vmatpush.msra.mxu0 0.0
    %1057 = vmatpush.msra.mxu0 0.0
    %1058 = vmatpush.msra.mxu0 0.0
    %1059 = vmatpush.msra.mxu0 0.0
    %1060 = vmatpush.msra.mxu0 0.0
    %1061 = vmatpush.msra.mxu0 %v89
    %1062 = vmatpush.msra.mxu0 %v85
    %1063 = vmatmul.f32.gmra.mxu0 %v1025
    %v1064 = vpop.f32.mrf.mxu0
    %v1065 = vadd.f32 0.0, %v1064
    %1066 = vdwg.mxu0
    %1067 = vmatpush.msra.mxu0 0.0
    %1068 = vmatpush.msra.mxu0 0.0
    %1069 = vmatpush.msra.mxu0 0.0
    %1070 = vmatpush.msra.mxu0 0.0
    %1071 = vmatpush.msra.mxu0 0.0
    %1072 = vmatpush.msra.mxu0 0.0
    %1073 = vmatpush.msra.mxu0 0.0
    %1074 = vmatpush.msra.mxu0 0.0
    %1075 = vmatpush.msra.mxu0 0.0
    %1076 = vmatpush.msra.mxu0 0.0
    %1077 = vmatpush.msra.mxu0 0.0
    %1078 = vmatpush.msra.mxu0 0.0
    %1079 = vmatpush.msra.mxu0 0.0
    %1080 = vmatpush.msra.mxu0 0.0
    %1081 = vmatpush.msra.mxu0 %v90
    %1082 = vmatpush.msra.mxu0 %v86
    %1083 = vmatmul.f32.gmra.mxu0 %v1025
    %v1084 = vpop.f32.mrf.mxu0
    %v1085 = vadd.f32 0.0, %v1084
    %1086 = vdwg.mxu0
    %1087 = vmatpush.msra.mxu0 0.0
    %1088 = vmatpush.msra.mxu0 0.0
    %1089 = vmatpush.msra.mxu0 0.0
    %1090 = vmatpush.msra.mxu0 0.0
    %1091 = vmatpush.msra.mxu0 0.0
    %1092 = vmatpush.msra.mxu0 0.0
    %1093 = vmatpush.msra.mxu0 0.0
    %1094 = vmatpush.msra.mxu0 0.0
    %1095 = vmatpush.msra.mxu0 0.0
    %1096 = vmatpush.msra.mxu0 0.0
    %1097 = vmatpush.msra.mxu0 0.0
    %1098 = vmatpush.msra.mxu0 0.0
    %1099 = vmatpush.msra.mxu0 0.0
    %1100 = vmatpush.msra.mxu0 0.0
    %1101 = vmatpush.msra.mxu0 %v91
    %1102 = vmatpush.msra.mxu0 %v87
    %1103 = vmatmul.f32.gmra.mxu0 %v1025
    %v1104 = vpop.f32.mrf.mxu0
    %v1105 = vadd.f32 0.0, %v1104
    %1106 = vdwg.mxu0
    %v1107 = vadd.f32 %v467, %v1045
    %v1108 = vadd.f32 %v468, %v1065
    %v1109 = vadd.f32 %v469, %v1085
    %v1110 = vadd.f32 %v470, %v1105
    %v1111 = vadd.f32 %v1107, %v639
    %v1112 = vadd.f32 %v1108, %v640
    %v1113 = vadd.f32 %v1109, %v641
    %v1114 = vadd.f32 %v1110, %v642
    %v1115 = vxor.u32 %v1111, 2147483648
    %v1116 = vmul.f32 %v1115, 1.442695
    %v1117 = vpow.pop %v1116
    %v1118 = vadd.f32 %v1117, 1.0
    %v1119 = vrcp.pop %v1118
    %v1120 = vmul.f32 %v1118, %v1119
    %v1121 = vsub.f32 1.0, %v1120
    %v1122 = vmul.f32 %v1119, %v1121
    %v1123 = vadd.f32 %v1119, %v1122
    %vm1124 = vweird.f32 %v1118
    %vm1125 = vweird.f32 %v1119
    %vm1126 = vmor %vm1124, %vm1125
    %v1127 = vsel %vm1126, %v1119, %v1123
    %v1128 = vand.u32 2147483647, %v1118
    %vm1129 = vcmp.eq.f32.partialorder %v1128, 8.507059e+37
    %v1130 = vand.u32 %v1118, 2147483648
    %v1131 = vor.u32 1.1754944e-38, %v1130
    %v1132 = vsel %vm1129, %v1131, %v1127
    %v1133 = vmul.f32 1.0, %v1132
    %v1134 = vxor.u32 %v1112, 2147483648
    %v1135 = vmul.f32 %v1134, 1.442695
    %v1136 = vpow.pop %v1135
    %v1137 = vadd.f32 %v1136, 1.0
    %v1138 = vrcp.pop %v1137
    %v1139 = vmul.f32 %v1137, %v1138
    %v1140 = vsub.f32 1.0, %v1139
    %v1141 = vmul.f32 %v1138, %v1140
    %v1142 = vadd.f32 %v1138, %v1141
    %vm1143 = vweird.f32 %v1137
    %vm1144 = vweird.f32 %v1138
    %vm1145 = vmor %vm1143, %vm1144
    %v1146 = vsel %vm1145, %v1138, %v1142
    %v1147 = vand.u32 2147483647, %v1137
    %vm1148 = vcmp.eq.f32.partialorder %v1147, 8.507059e+37
    %v1149 = vand.u32 %v1137, 2147483648
    %v1150 = vor.u32 1.1754944e-38, %v1149
    %v1151 = vsel %vm1148, %v1150, %v1146
    %v1152 = vmul.f32 1.0, %v1151
    %v1153 = vtanh.pop %v1113
    %v1154 = vxor.u32 %v1114, 2147483648
    %v1155 = vmul.f32 %v1154, 1.442695
    %v1156 = vpow.pop %v1155
    %v1157 = vadd.f32 %v1156, 1.0
    %v1158 = vrcp.pop %v1157
    %v1159 = vmul.f32 %v1157, %v1158
    %v1160 = vsub.f32 1.0, %v1159
    %v1161 = vmul.f32 %v1158, %v1160
    %v1162 = vadd.f32 %v1158, %v1161
    %vm1163 = vweird.f32 %v1157
    %vm1164 = vweird.f32 %v1158
    %vm1165 = vmor %vm1163, %vm1164
    %v1166 = vsel %vm1165, %v1158, %v1162
    %v1167 = vand.u32 2147483647, %v1157
    %vm1168 = vcmp.eq.f32.partialorder %v1167, 8.507059e+37
    %v1169 = vand.u32 %v1157, 2147483648
    %v1170 = vor.u32 1.1754944e-38, %v1169
    %v1171 = vsel %vm1168, %v1170, %v1166
    %v1172 = vmul.f32 1.0, %v1171
    %v1173 = vmul.f32 %v1152, %v1021
    %v1174 = vmul.f32 %v1133, %v1153
    %v1175 = vadd.f32 %v1173, %v1174
    %v1176 = vtanh.pop %v1175
    %v1177 = vmul.f32 %v1172, %v1176
    %v1178 = vsel %vm633, 1, 0
    %1179 = vset.pattern.permute.xlu0 0
    %1180 = vperm.xlu0 %1179, %v1178
    %v1181 = vpop.permute.xlu0 %1180
    %vm1182 = vcmp.eq.s32.totalorder %v1181, 1
    %v1183 = vsel %vm1182, %v1175, %v1021
    %v1184 = vsel %vm1182, %v1177, %v1022
    %v1185 = vsel %vm1182, %v1177, 0.0
    %v1187 = vsel %vm699, %v1184, 0
    %1189 = vmatpush.msra.mxu0 0.0
    %1190 = vmatpush.msra.mxu0 0.0
    %1191 = vmatpush.msra.mxu0 0.0
    %1192 = vmatpush.msra.mxu0 0.0
    %1193 = vmatpush.msra.mxu0 0.0
    %1194 = vmatpush.msra.mxu0 0.0
    %1195 = vmatpush.msra.mxu0 0.0
    %1196 = vmatpush.msra.mxu0 0.0
    %1197 = vmatpush.msra.mxu0 0.0
    %1198 = vmatpush.msra.mxu0 0.0
    %1199 = vmatpush.msra.mxu0 0.0
    %1200 = vmatpush.msra.mxu0 0.0
    %1201 = vmatpush.msra.mxu0 0.0
    %1202 = vmatpush.msra.mxu0 0.0
    %1203 = vmatpush.msra.mxu0 %v88
    %1204 = vmatpush.msra.mxu0 %v84
    %1205 = vmatmul.f32.gmra.mxu0 %v1187
    %v1206 = vpop.f32.mrf.mxu0
    %v1207 = vadd.f32 0.0, %v1206
    %1208 = vdwg.mxu0
    %1209 = vmatpush.msra.mxu0 0.0
    %1210 = vmatpush.msra.mxu0 0.0
    %1211 = vmatpush.msra.mxu0 0.0
    %1212 = vmatpush.msra.mxu0 0.0
    %1213 = vmatpush.msra.mxu0 0.0
    %1214 = vmatpush.msra.mxu0 0.0
    %1215 = vmatpush.msra.mxu0 0.0
    %1216 = vmatpush.msra.mxu0 0.0
    %1217 = vmatpush.msra.mxu0 0.0
    %1218 = vmatpush.msra.mxu0 0.0
    %1219 = vmatpush.msra.mxu0 0.0
    %1220 = vmatpush.msra.mxu0 0.0
    %1221 = vmatpush.msra.mxu0 0.0
    %1222 = vmatpush.msra.mxu0 0.0
    %1223 = vmatpush.msra.mxu0 %v89
    %1224 = vmatpush.msra.mxu0 %v85
    %1225 = vmatmul.f32.gmra.mxu0 %v1187
    %v1226 = vpop.f32.mrf.mxu0
    %v1227 = vadd.f32 0.0, %v1226
    %1228 = vdwg.mxu0
    %1229 = vmatpush.msra.mxu0 0.0
    %1230 = vmatpush.msra.mxu0 0.0
    %1231 = vmatpush.msra.mxu0 0.0
    %1232 = vmatpush.msra.mxu0 0.0
    %1233 = vmatpush.msra.mxu0 0.0
    %1234 = vmatpush.msra.mxu0 0.0
    %1235 = vmatpush.msra.mxu0 0.0
    %1236 = vmatpush.msra.mxu0 0.0
    %1237 = vmatpush.msra.mxu0 0.0
    %1238 = vmatpush.msra.mxu0 0.0
    %1239 = vmatpush.msra.mxu0 0.0
    %1240 = vmatpush.msra.mxu0 0.0
    %1241 = vmatpush.msra.mxu0 0.0
    %1242 = vmatpush.msra.mxu0 0.0
    %1243 = vmatpush.msra.mxu0 %v90
    %1244 = vmatpush.msra.mxu0 %v86
    %1245 = vmatmul.f32.gmra.mxu0 %v1187
    %v1246 = vpop.f32.mrf.mxu0
    %v1247 = vadd.f32 0.0, %v1246
    %1248 = vdwg.mxu0
    %1249 = vmatpush.msra.mxu0 0.0
    %1250 = vmatpush.msra.mxu0 0.0
    %1251 = vmatpush.msra.mxu0 0.0
    %1252 = vmatpush.msra.mxu0 0.0
    %1253 = vmatpush.msra.mxu0 0.0
    %1254 = vmatpush.msra.mxu0 0.0
    %1255 = vmatpush.msra.mxu0 0.0
    %1256 = vmatpush.msra.mxu0 0.0
    %1257 = vmatpush.msra.mxu0 0.0
    %1258 = vmatpush.msra.mxu0 0.0
    %1259 = vmatpush.msra.mxu0 0.0
    %1260 = vmatpush.msra.mxu0 0.0
    %1261 = vmatpush.msra.mxu0 0.0
    %1262 = vmatpush.msra.mxu0 0.0
    %1263 = vmatpush.msra.mxu0 %v91
    %1264 = vmatpush.msra.mxu0 %v87
    %1265 = vmatmul.f32.gmra.mxu0 %v1187
    %v1266 = vpop.f32.mrf.mxu0
    %v1267 = vadd.f32 0.0, %v1266
    %1268 = vdwg.mxu0
    %v1269 = vadd.f32 %v507, %v1207
    %v1270 = vadd.f32 %v508, %v1227
    %v1271 = vadd.f32 %v509, %v1247
    %v1272 = vadd.f32 %v510, %v1267
    %v1273 = vadd.f32 %v1269, %v639
    %v1274 = vadd.f32 %v1270, %v640
    %v1275 = vadd.f32 %v1271, %v641
    %v1276 = vadd.f32 %v1272, %v642
    %v1277 = vxor.u32 %v1273, 2147483648
    %v1278 = vmul.f32 %v1277, 1.442695
    %v1279 = vpow.pop %v1278
    %v1280 = vadd.f32 %v1279, 1.0
    %v1281 = vrcp.pop %v1280
    %v1282 = vmul.f32 %v1280, %v1281
    %v1283 = vsub.f32 1.0, %v1282
    %v1284 = vmul.f32 %v1281, %v1283
    %v1285 = vadd.f32 %v1281, %v1284
    %vm1286 = vweird.f32 %v1280
    %vm1287 = vweird.f32 %v1281
    %vm1288 = vmor %vm1286, %vm1287
    %v1289 = vsel %vm1288, %v1281, %v1285
    %v1290 = vand.u32 2147483647, %v1280
    %vm1291 = vcmp.eq.f32.partialorder %v1290, 8.507059e+37
    %v1292 = vand.u32 %v1280, 2147483648
    %v1293 = vor.u32 1.1754944e-38, %v1292
    %v1294 = vsel %vm1291, %v1293, %v1289
    %v1295 = vmul.f32 1.0, %v1294
    %v1296 = vxor.u32 %v1274, 2147483648
    %v1297 = vmul.f32 %v1296, 1.442695
    %v1298 = vpow.pop %v1297
    %v1299 = vadd.f32 %v1298, 1.0
    %v1300 = vrcp.pop %v1299
    %v1301 = vmul.f32 %v1299, %v1300
    %v1302 = vsub.f32 1.0, %v1301
    %v1303 = vmul.f32 %v1300, %v1302
    %v1304 = vadd.f32 %v1300, %v1303
    %vm1305 = vweird.f32 %v1299
    %vm1306 = vweird.f32 %v1300
    %vm1307 = vmor %vm1305, %vm1306
    %v1308 = vsel %vm1307, %v1300, %v1304
    %v1309 = vand.u32 2147483647, %v1299
    %vm1310 = vcmp.eq.f32.partialorder %v1309, 8.507059e+37
    %v1311 = vand.u32 %v1299, 2147483648
    %v1312 = vor.u32 1.1754944e-38, %v1311
    %v1313 = vsel %vm1310, %v1312, %v1308
    %v1314 = vmul.f32 1.0, %v1313
    %v1315 = vtanh.pop %v1275
    %v1316 = vxor.u32 %v1276, 2147483648
    %v1317 = vmul.f32 %v1316, 1.442695
    %v1318 = vpow.pop %v1317
    %v1319 = vadd.f32 %v1318, 1.0
    %v1320 = vrcp.pop %v1319
    %v1321 = vmul.f32 %v1319, %v1320
    %v1322 = vsub.f32 1.0, %v1321
    %v1323 = vmul.f32 %v1320, %v1322
    %v1324 = vadd.f32 %v1320, %v1323
    %vm1325 = vweird.f32 %v1319
    %vm1326 = vweird.f32 %v1320
    %vm1327 = vmor %vm1325, %vm1326
    %v1328 = vsel %vm1327, %v1320, %v1324
    %v1329 = vand.u32 2147483647, %v1319
    %vm1330 = vcmp.eq.f32.partialorder %v1329, 8.507059e+37
    %v1331 = vand.u32 %v1319, 2147483648
    %v1332 = vor.u32 1.1754944e-38, %v1331
    %v1333 = vsel %vm1330, %v1332, %v1328
    %v1334 = vmul.f32 1.0, %v1333
    %v1335 = vmul.f32 %v1314, %v1183
    %v1336 = vmul.f32 %v1295, %v1315
    %v1337 = vadd.f32 %v1335, %v1336
    %v1338 = vtanh.pop %v1337
    %v1339 = vmul.f32 %v1334, %v1338
    %v1340 = vsel %vm634, 1, 0
    %1341 = vset.pattern.permute.xlu0 0
    %1342 = vperm.xlu0 %1341, %v1340
    %v1343 = vpop.permute.xlu0 %1342
    %vm1344 = vcmp.eq.s32.totalorder %v1343, 1
    %v1345 = vsel %vm1344, %v1337, %v1183
    %v1346 = vsel %vm1344, %v1339, %v1184
    %v1347 = vsel %vm1344, %v1339, 0.0
    %v1349 = vsel %vm699, %v1346, 0
    %1351 = vmatpush.msra.mxu0 0.0
    %1352 = vmatpush.msra.mxu0 0.0
    %1353 = vmatpush.msra.mxu0 0.0
    %1354 = vmatpush.msra.mxu0 0.0
    %1355 = vmatpush.msra.mxu0 0.0
    %1356 = vmatpush.msra.mxu0 0.0
    %1357 = vmatpush.msra.mxu0 0.0
    %1358 = vmatpush.msra.mxu0 0.0
    %1359 = vmatpush.msra.mxu0 0.0
    %1360 = vmatpush.msra.mxu0 0.0
    %1361 = vmatpush.msra.mxu0 0.0
    %1362 = vmatpush.msra.mxu0 0.0
    %1363 = vmatpush.msra.mxu0 0.0
    %1364 = vmatpush.msra.mxu0 0.0
    %1365 = vmatpush.msra.mxu0 %v88
    %1366 = vmatpush.msra.mxu0 %v84
    %1367 = vmatmul.f32.gmra.mxu0 %v1349
    %v1368 = vpop.f32.mrf.mxu0
    %v1369 = vadd.f32 0.0, %v1368
    %1370 = vdwg.mxu0
    %1371 = vmatpush.msra.mxu0 0.0
    %1372 = vmatpush.msra.mxu0 0.0
    %1373 = vmatpush.msra.mxu0 0.0
    %1374 = vmatpush.msra.mxu0 0.0
    %1375 = vmatpush.msra.mxu0 0.0
    %1376 = vmatpush.msra.mxu0 0.0
    %1377 = vmatpush.msra.mxu0 0.0
    %1378 = vmatpush.msra.mxu0 0.0
    %1379 = vmatpush.msra.mxu0 0.0
    %1380 = vmatpush.msra.mxu0 0.0
    %1381 = vmatpush.msra.mxu0 0.0
    %1382 = vmatpush.msra.mxu0 0.0
    %1383 = vmatpush.msra.mxu0 0.0
    %1384 = vmatpush.msra.mxu0 0.0
    %1385 = vmatpush.msra.mxu0 %v89
    %1386 = vmatpush.msra.mxu0 %v85
    %1387 = vmatmul.f32.gmra.mxu0 %v1349
    %v1388 = vpop.f32.mrf.mxu0
    %v1389 = vadd.f32 0.0, %v1388
    %1390 = vdwg.mxu0
    %1391 = vmatpush.msra.mxu0 0.0
    %1392 = vmatpush.msra.mxu0 0.0
    %1393 = vmatpush.msra.mxu0 0.0
    %1394 = vmatpush.msra.mxu0 0.0
    %1395 = vmatpush.msra.mxu0 0.0
    %1396 = vmatpush.msra.mxu0 0.0
    %1397 = vmatpush.msra.mxu0 0.0
    %1398 = vmatpush.msra.mxu0 0.0
    %1399 = vmatpush.msra.mxu0 0.0
    %1400 = vmatpush.msra.mxu0 0.0
    %1401 = vmatpush.msra.mxu0 0.0
    %1402 = vmatpush.msra.mxu0 0.0
    %1403 = vmatpush.msra.mxu0 0.0
    %1404 = vmatpush.msra.mxu0 0.0
    %1405 = vmatpush.msra.mxu0 %v90
    %1406 = vmatpush.msra.mxu0 %v86
    %1407 = vmatmul.f32.gmra.mxu0 %v1349
    %v1408 = vpop.f32.mrf.mxu0
    %v1409 = vadd.f32 0.0, %v1408
    %1410 = vdwg.mxu0
    %1411 = vmatpush.msra.mxu0 0.0
    %1412 = vmatpush.msra.mxu0 0.0
    %1413 = vmatpush.msra.mxu0 0.0
    %1414 = vmatpush.msra.mxu0 0.0
    %1415 = vmatpush.msra.mxu0 0.0
    %1416 = vmatpush.msra.mxu0 0.0
    %1417 = vmatpush.msra.mxu0 0.0
    %1418 = vmatpush.msra.mxu0 0.0
    %1419 = vmatpush.msra.mxu0 0.0
    %1420 = vmatpush.msra.mxu0 0.0
    %1421 = vmatpush.msra.mxu0 0.0
    %1422 = vmatpush.msra.mxu0 0.0
    %1423 = vmatpush.msra.mxu0 0.0
    %1424 = vmatpush.msra.mxu0 0.0
    %1425 = vmatpush.msra.mxu0 %v91
    %1426 = vmatpush.msra.mxu0 %v87
    %1427 = vmatmul.f32.gmra.mxu0 %v1349
    %v1428 = vpop.f32.mrf.mxu0
    %v1429 = vadd.f32 0.0, %v1428
    %1430 = vdwg.mxu0
    %v1431 = vadd.f32 %v547, %v1369
    %v1432 = vadd.f32 %v548, %v1389
    %v1433 = vadd.f32 %v549, %v1409
    %v1434 = vadd.f32 %v550, %v1429
    %v1435 = vadd.f32 %v1431, %v639
    %v1436 = vadd.f32 %v1432, %v640
    %v1437 = vadd.f32 %v1433, %v641
    %v1438 = vadd.f32 %v1434, %v642
    %v1439 = vxor.u32 %v1435, 2147483648
    %v1440 = vmul.f32 %v1439, 1.442695
    %v1441 = vpow.pop %v1440
    %v1442 = vadd.f32 %v1441, 1.0
    %v1443 = vrcp.pop %v1442
    %v1444 = vmul.f32 %v1442, %v1443
    %v1445 = vsub.f32 1.0, %v1444
    %v1446 = vmul.f32 %v1443, %v1445
    %v1447 = vadd.f32 %v1443, %v1446
    %vm1448 = vweird.f32 %v1442
    %vm1449 = vweird.f32 %v1443
    %vm1450 = vmor %vm1448, %vm1449
    %v1451 = vsel %vm1450, %v1443, %v1447
    %v1452 = vand.u32 2147483647, %v1442
    %vm1453 = vcmp.eq.f32.partialorder %v1452, 8.507059e+37
    %v1454 = vand.u32 %v1442, 2147483648
    %v1455 = vor.u32 1.1754944e-38, %v1454
    %v1456 = vsel %vm1453, %v1455, %v1451
    %v1457 = vmul.f32 1.0, %v1456
    %v1458 = vxor.u32 %v1436, 2147483648
    %v1459 = vmul.f32 %v1458, 1.442695
    %v1460 = vpow.pop %v1459
    %v1461 = vadd.f32 %v1460, 1.0
    %v1462 = vrcp.pop %v1461
    %v1463 = vmul.f32 %v1461, %v1462
    %v1464 = vsub.f32 1.0, %v1463
    %v1465 = vmul.f32 %v1462, %v1464
    %v1466 = vadd.f32 %v1462, %v1465
    %vm1467 = vweird.f32 %v1461
    %vm1468 = vweird.f32 %v1462
    %vm1469 = vmor %vm1467, %vm1468
    %v1470 = vsel %vm1469, %v1462, %v1466
    %v1471 = vand.u32 2147483647, %v1461
    %vm1472 = vcmp.eq.f32.partialorder %v1471, 8.507059e+37
    %v1473 = vand.u32 %v1461, 2147483648
    %v1474 = vor.u32 1.1754944e-38, %v1473
    %v1475 = vsel %vm1472, %v1474, %v1470
    %v1476 = vmul.f32 1.0, %v1475
    %v1477 = vtanh.pop %v1437
    %v1478 = vxor.u32 %v1438, 2147483648
    %v1479 = vmul.f32 %v1478, 1.442695
    %v1480 = vpow.pop %v1479
    %v1481 = vadd.f32 %v1480, 1.0
    %v1482 = vrcp.pop %v1481
    %v1483 = vmul.f32 %v1481, %v1482
    %v1484 = vsub.f32 1.0, %v1483
    %v1485 = vmul.f32 %v1482, %v1484
    %v1486 = vadd.f32 %v1482, %v1485
    %vm1487 = vweird.f32 %v1481
    %vm1488 = vweird.f32 %v1482
    %vm1489 = vmor %vm1487, %vm1488
    %v1490 = vsel %vm1489, %v1482, %v1486
    %v1491 = vand.u32 2147483647, %v1481
    %vm1492 = vcmp.eq.f32.partialorder %v1491, 8.507059e+37
    %v1493 = vand.u32 %v1481, 2147483648
    %v1494 = vor.u32 1.1754944e-38, %v1493
    %v1495 = vsel %vm1492, %v1494, %v1490
    %v1496 = vmul.f32 1.0, %v1495
    %v1497 = vmul.f32 %v1476, %v1345
    %v1498 = vmul.f32 %v1457, %v1477
    %v1499 = vadd.f32 %v1497, %v1498
    %v1500 = vtanh.pop %v1499
    %v1501 = vmul.f32 %v1496, %v1500
    %v1502 = vsel %vm635, 1, 0
    %1503 = vset.pattern.permute.xlu0 0
    %1504 = vperm.xlu0 %1503, %v1502
    %v1505 = vpop.permute.xlu0 %1504
    %vm1506 = vcmp.eq.s32.totalorder %v1505, 1
    %v1507 = vsel %vm1506, %v1499, %v1345
    %v1508 = vsel %vm1506, %v1501, %v1346
    %v1509 = vsel %vm1506, %v1501, 0.0
    %v1511 = vsel %vm699, %v1508, 0
    %1513 = vmatpush.msra.mxu0 0.0
    %1514 = vmatpush.msra.mxu0 0.0
    %1515 = vmatpush.msra.mxu0 0.0
    %1516 = vmatpush.msra.mxu0 0.0
    %1517 = vmatpush.msra.mxu0 0.0
    %1518 = vmatpush.msra.mxu0 0.0
    %1519 = vmatpush.msra.mxu0 0.0
    %1520 = vmatpush.msra.mxu0 0.0
    %1521 = vmatpush.msra.mxu0 0.0
    %1522 = vmatpush.msra.mxu0 0.0
    %1523 = vmatpush.msra.mxu0 0.0
    %1524 = vmatpush.msra.mxu0 0.0
    %1525 = vmatpush.msra.mxu0 0.0
    %1526 = vmatpush.msra.mxu0 0.0
    %1527 = vmatpush.msra.mxu0 %v88
    %1528 = vmatpush.msra.mxu0 %v84
    %1529 = vmatmul.f32.gmra.mxu0 %v1511
    %v1530 = vpop.f32.mrf.mxu0
    %v1531 = vadd.f32 0.0, %v1530
    %1532 = vdwg.mxu0
    %1533 = vmatpush.msra.mxu0 0.0
    %1534 = vmatpush.msra.mxu0 0.0
    %1535 = vmatpush.msra.mxu0 0.0
    %1536 = vmatpush.msra.mxu0 0.0
    %1537 = vmatpush.msra.mxu0 0.0
    %1538 = vmatpush.msra.mxu0 0.0
    %1539 = vmatpush.msra.mxu0 0.0
    %1540 = vmatpush.msra.mxu0 0.0
    %1541 = vmatpush.msra.mxu0 0.0
    %1542 = vmatpush.msra.mxu0 0.0
    %1543 = vmatpush.msra.mxu0 0.0
    %1544 = vmatpush.msra.mxu0 0.0
    %1545 = vmatpush.msra.mxu0 0.0
    %1546 = vmatpush.msra.mxu0 0.0
    %1547 = vmatpush.msra.mxu0 %v89
    %1548 = vmatpush.msra.mxu0 %v85
    %1549 = vmatmul.f32.gmra.mxu0 %v1511
    %v1550 = vpop.f32.mrf.mxu0
    %v1551 = vadd.f32 0.0, %v1550
    %1552 = vdwg.mxu0
    %1553 = vmatpush.msra.mxu0 0.0
    %1554 = vmatpush.msra.mxu0 0.0
    %1555 = vmatpush.msra.mxu0 0.0
    %1556 = vmatpush.msra.mxu0 0.0
    %1557 = vmatpush.msra.mxu0 0.0
    %1558 = vmatpush.msra.mxu0 0.0
    %1559 = vmatpush.msra.mxu0 0.0
    %1560 = vmatpush.msra.mxu0 0.0
    %1561 = vmatpush.msra.mxu0 0.0
    %1562 = vmatpush.msra.mxu0 0.0
    %1563 = vmatpush.msra.mxu0 0.0
    %1564 = vmatpush.msra.mxu0 0.0
    %1565 = vmatpush.msra.mxu0 0.0
    %1566 = vmatpush.msra.mxu0 0.0
    %1567 = vmatpush.msra.mxu0 %v90
    %1568 = vmatpush.msra.mxu0 %v86
    %1569 = vmatmul.f32.gmra.mxu0 %v1511
    %v1570 = vpop.f32.mrf.mxu0
    %v1571 = vadd.f32 0.0, %v1570
    %1572 = vdwg.mxu0
    %1573 = vmatpush.msra.mxu0 0.0
    %1574 = vmatpush.msra.mxu0 0.0
    %1575 = vmatpush.msra.mxu0 0.0
    %1576 = vmatpush.msra.mxu0 0.0
    %1577 = vmatpush.msra.mxu0 0.0
    %1578 = vmatpush.msra.mxu0 0.0
    %1579 = vmatpush.msra.mxu0 0.0
    %1580 = vmatpush.msra.mxu0 0.0
    %1581 = vmatpush.msra.mxu0 0.0
    %1582 = vmatpush.msra.mxu0 0.0
    %1583 = vmatpush.msra.mxu0 0.0
    %1584 = vmatpush.msra.mxu0 0.0
    %1585 = vmatpush.msra.mxu0 0.0
    %1586 = vmatpush.msra.mxu0 0.0
    %1587 = vmatpush.msra.mxu0 %v91
    %1588 = vmatpush.msra.mxu0 %v87
    %1589 = vmatmul.f32.gmra.mxu0 %v1511
    %v1590 = vpop.f32.mrf.mxu0
    %v1591 = vadd.f32 0.0, %v1590
    %1592 = vdwg.mxu0
    %v1593 = vadd.f32 %v587, %v1531
    %v1594 = vadd.f32 %v588, %v1551
    %v1595 = vadd.f32 %v589, %v1571
    %v1596 = vadd.f32 %v590, %v1591
    %v1597 = vadd.f32 %v1593, %v639
    %v1598 = vadd.f32 %v1594, %v640
    %v1599 = vadd.f32 %v1595, %v641
    %v1600 = vadd.f32 %v1596, %v642
    %v1601 = vxor.u32 %v1597, 2147483648
    %v1602 = vmul.f32 %v1601, 1.442695
    %v1603 = vpow.pop %v1602
    %v1604 = vadd.f32 %v1603, 1.0
    %v1605 = vrcp.pop %v1604
    %v1606 = vmul.f32 %v1604, %v1605
    %v1607 = vsub.f32 1.0, %v1606
    %v1608 = vmul.f32 %v1605, %v1607
    %v1609 = vadd.f32 %v1605, %v1608
    %vm1610 = vweird.f32 %v1604
    %vm1611 = vweird.f32 %v1605
    %vm1612 = vmor %vm1610, %vm1611
    %v1613 = vsel %vm1612, %v1605, %v1609
    %v1614 = vand.u32 2147483647, %v1604
    %vm1615 = vcmp.eq.f32.partialorder %v1614, 8.507059e+37
    %v1616 = vand.u32 %v1604, 2147483648
    %v1617 = vor.u32 1.1754944e-38, %v1616
    %v1618 = vsel %vm1615, %v1617, %v1613
    %v1619 = vmul.f32 1.0, %v1618
    %v1620 = vxor.u32 %v1598, 2147483648
    %v1621 = vmul.f32 %v1620, 1.442695
    %v1622 = vpow.pop %v1621
    %v1623 = vadd.f32 %v1622, 1.0
    %v1624 = vrcp.pop %v1623
    %v1625 = vmul.f32 %v1623, %v1624
    %v1626 = vsub.f32 1.0, %v1625
    %v1627 = vmul.f32 %v1624, %v1626
    %v1628 = vadd.f32 %v1624, %v1627
    %vm1629 = vweird.f32 %v1623
    %vm1630 = vweird.f32 %v1624
    %vm1631 = vmor %vm1629, %vm1630
    %v1632 = vsel %vm1631, %v1624, %v1628
    %v1633 = vand.u32 2147483647, %v1623
    %vm1634 = vcmp.eq.f32.partialorder %v1633, 8.507059e+37
    %v1635 = vand.u32 %v1623, 2147483648
    %v1636 = vor.u32 1.1754944e-38, %v1635
    %v1637 = vsel %vm1634, %v1636, %v1632
    %v1638 = vmul.f32 1.0, %v1637
    %v1639 = vtanh.pop %v1599
    %v1640 = vxor.u32 %v1600, 2147483648
    %v1641 = vmul.f32 %v1640, 1.442695
    %v1642 = vpow.pop %v1641
    %v1643 = vadd.f32 %v1642, 1.0
    %v1644 = vrcp.pop %v1643
    %v1645 = vmul.f32 %v1643, %v1644
    %v1646 = vsub.f32 1.0, %v1645
    %v1647 = vmul.f32 %v1644, %v1646
    %v1648 = vadd.f32 %v1644, %v1647
    %vm1649 = vweird.f32 %v1643
    %vm1650 = vweird.f32 %v1644
    %vm1651 = vmor %vm1649, %vm1650
    %v1652 = vsel %vm1651, %v1644, %v1648
    %v1653 = vand.u32 2147483647, %v1643
    %vm1654 = vcmp.eq.f32.partialorder %v1653, 8.507059e+37
    %v1655 = vand.u32 %v1643, 2147483648
    %v1656 = vor.u32 1.1754944e-38, %v1655
    %v1657 = vsel %vm1654, %v1656, %v1652
    %v1658 = vmul.f32 1.0, %v1657
    %v1659 = vmul.f32 %v1638, %v1507
    %v1660 = vmul.f32 %v1619, %v1639
    %v1661 = vadd.f32 %v1659, %v1660
    %v1662 = vtanh.pop %v1661
    %v1663 = vmul.f32 %v1658, %v1662
    %v1664 = vsel %vm636, 1, 0
    %1665 = vset.pattern.permute.xlu0 0
    %1666 = vperm.xlu0 %1665, %v1664
    %v1667 = vpop.permute.xlu0 %1666
    %vm1668 = vcmp.eq.s32.totalorder %v1667, 1
    %v1669 = vsel %vm1668, %v1661, %v1507
    %v1670 = vsel %vm1668, %v1663, %v1508
    %v1671 = vsel %vm1668, %v1663, 0.0
    %v1673 = vsel %vm699, %v1670, 0
    %1675 = vmatpush.msra.mxu0 0.0
    %1676 = vmatpush.msra.mxu0 0.0
    %1677 = vmatpush.msra.mxu0 0.0
    %1678 = vmatpush.msra.mxu0 0.0
    %1679 = vmatpush.msra.mxu0 0.0
    %1680 = vmatpush.msra.mxu0 0.0
    %1681 = vmatpush.msra.mxu0 0.0
    %1682 = vmatpush.msra.mxu0 0.0
    %1683 = vmatpush.msra.mxu0 0.0
    %1684 = vmatpush.msra.mxu0 0.0
    %1685 = vmatpush.msra.mxu0 0.0
    %1686 = vmatpush.msra.mxu0 0.0
    %1687 = vmatpush.msra.mxu0 0.0
    %1688 = vmatpush.msra.mxu0 0.0
    %1689 = vmatpush.msra.mxu0 %v88
    %1690 = vmatpush.msra.mxu0 %v84
    %1691 = vmatmul.f32.gmra.mxu0 %v1673
    %v1692 = vpop.f32.mrf.mxu0
    %v1693 = vadd.f32 0.0, %v1692
    %1694 = vdwg.mxu0
    %1695 = vmatpush.msra.mxu0 0.0
    %1696 = vmatpush.msra.mxu0 0.0
    %1697 = vmatpush.msra.mxu0 0.0
    %1698 = vmatpush.msra.mxu0 0.0
    %1699 = vmatpush.msra.mxu0 0.0
    %1700 = vmatpush.msra.mxu0 0.0
    %1701 = vmatpush.msra.mxu0 0.0
    %1702 = vmatpush.msra.mxu0 0.0
    %1703 = vmatpush.msra.mxu0 0.0
    %1704 = vmatpush.msra.mxu0 0.0
    %1705 = vmatpush.msra.mxu0 0.0
    %1706 = vmatpush.msra.mxu0 0.0
    %1707 = vmatpush.msra.mxu0 0.0
    %1708 = vmatpush.msra.mxu0 0.0
    %1709 = vmatpush.msra.mxu0 %v89
    %1710 = vmatpush.msra.mxu0 %v85
    %1711 = vmatmul.f32.gmra.mxu0 %v1673
    %v1712 = vpop.f32.mrf.mxu0
    %v1713 = vadd.f32 0.0, %v1712
    %1714 = vdwg.mxu0
    %1715 = vmatpush.msra.mxu0 0.0
    %1716 = vmatpush.msra.mxu0 0.0
    %1717 = vmatpush.msra.mxu0 0.0
    %1718 = vmatpush.msra.mxu0 0.0
    %1719 = vmatpush.msra.mxu0 0.0
    %1720 = vmatpush.msra.mxu0 0.0
    %1721 = vmatpush.msra.mxu0 0.0
    %1722 = vmatpush.msra.mxu0 0.0
    %1723 = vmatpush.msra.mxu0 0.0
    %1724 = vmatpush.msra.mxu0 0.0
    %1725 = vmatpush.msra.mxu0 0.0
    %1726 = vmatpush.msra.mxu0 0.0
    %1727 = vmatpush.msra.mxu0 0.0
    %1728 = vmatpush.msra.mxu0 0.0
    %1729 = vmatpush.msra.mxu0 %v90
    %1730 = vmatpush.msra.mxu0 %v86
    %1731 = vmatmul.f32.gmra.mxu0 %v1673
    %v1732 = vpop.f32.mrf.mxu0
    %v1733 = vadd.f32 0.0, %v1732
    %1734 = vdwg.mxu0
    %1735 = vmatpush.msra.mxu0 0.0
    %1736 = vmatpush.msra.mxu0 0.0
    %1737 = vmatpush.msra.mxu0 0.0
    %1738 = vmatpush.msra.mxu0 0.0
    %1739 = vmatpush.msra.mxu0 0.0
    %1740 = vmatpush.msra.mxu0 0.0
    %1741 = vmatpush.msra.mxu0 0.0
    %1742 = vmatpush.msra.mxu0 0.0
    %1743 = vmatpush.msra.mxu0 0.0
    %1744 = vmatpush.msra.mxu0 0.0
    %1745 = vmatpush.msra.mxu0 0.0
    %1746 = vmatpush.msra.mxu0 0.0
    %1747 = vmatpush.msra.mxu0 0.0
    %1748 = vmatpush.msra.mxu0 0.0
    %1749 = vmatpush.msra.mxu0 %v91
    %1750 = vmatpush.msra.mxu0 %v87
    %1751 = vmatmul.f32.gmra.mxu0 %v1673
    %v1752 = vpop.f32.mrf.mxu0
    %v1753 = vadd.f32 0.0, %v1752
    %1754 = vdwg.mxu0
    %v1755 = vadd.f32 %v623, %v1693
    %v1756 = vadd.f32 %v624, %v1713
    %v1757 = vadd.f32 %v625, %v1733
    %v1758 = vadd.f32 %v626, %v1753
    %v1759 = vadd.f32 %v1755, %v639
    %v1760 = vadd.f32 %v1756, %v640
    %v1761 = vadd.f32 %v1757, %v641
    %v1762 = vadd.f32 %v1758, %v642
    %v1763 = vxor.u32 %v1759, 2147483648
    %v1764 = vmul.f32 %v1763, 1.442695
    %v1765 = vpow.pop %v1764
    %v1766 = vadd.f32 %v1765, 1.0
    %v1767 = vrcp.pop %v1766
    %v1768 = vmul.f32 %v1766, %v1767
    %v1769 = vsub.f32 1.0, %v1768
    %v1770 = vmul.f32 %v1767, %v1769
    %v1771 = vadd.f32 %v1767, %v1770
    %vm1772 = vweird.f32 %v1766
    %vm1773 = vweird.f32 %v1767
    %vm1774 = vmor %vm1772, %vm1773
    %v1775 = vsel %vm1774, %v1767, %v1771
    %v1776 = vand.u32 2147483647, %v1766
    %vm1777 = vcmp.eq.f32.partialorder %v1776, 8.507059e+37
    %v1778 = vand.u32 %v1766, 2147483648
    %v1779 = vor.u32 1.1754944e-38, %v1778
    %v1780 = vsel %vm1777, %v1779, %v1775
    %v1781 = vmul.f32 1.0, %v1780
    %v1782 = vxor.u32 %v1760, 2147483648
    %v1783 = vmul.f32 %v1782, 1.442695
    %v1784 = vpow.pop %v1783
    %v1785 = vadd.f32 %v1784, 1.0
    %v1786 = vrcp.pop %v1785
    %v1787 = vmul.f32 %v1785, %v1786
    %v1788 = vsub.f32 1.0, %v1787
    %v1789 = vmul.f32 %v1786, %v1788
    %v1790 = vadd.f32 %v1786, %v1789
    %vm1791 = vweird.f32 %v1785
    %vm1792 = vweird.f32 %v1786
    %vm1793 = vmor %vm1791, %vm1792
    %v1794 = vsel %vm1793, %v1786, %v1790
    %v1795 = vand.u32 2147483647, %v1785
    %vm1796 = vcmp.eq.f32.partialorder %v1795, 8.507059e+37
    %v1797 = vand.u32 %v1785, 2147483648
    %v1798 = vor.u32 1.1754944e-38, %v1797
    %v1799 = vsel %vm1796, %v1798, %v1794
    %v1800 = vmul.f32 1.0, %v1799
    %v1801 = vtanh.pop %v1761
    %v1802 = vxor.u32 %v1762, 2147483648
    %v1803 = vmul.f32 %v1802, 1.442695
    %v1804 = vpow.pop %v1803
    %v1805 = vadd.f32 %v1804, 1.0
    %v1806 = vrcp.pop %v1805
    %v1807 = vmul.f32 %v1805, %v1806
    %v1808 = vsub.f32 1.0, %v1807
    %v1809 = vmul.f32 %v1806, %v1808
    %v1810 = vadd.f32 %v1806, %v1809
    %vm1811 = vweird.f32 %v1805
    %vm1812 = vweird.f32 %v1806
    %vm1813 = vmor %vm1811, %vm1812
    %v1814 = vsel %vm1813, %v1806, %v1810
    %v1815 = vand.u32 2147483647, %v1805
    %vm1816 = vcmp.eq.f32.partialorder %v1815, 8.507059e+37
    %v1817 = vand.u32 %v1805, 2147483648
    %v1818 = vor.u32 1.1754944e-38, %v1817
    %v1819 = vsel %vm1816, %v1818, %v1814
    %v1820 = vmul.f32 1.0, %v1819
    %v1821 = vmul.f32 %v1800, %v1669
    %v1822 = vmul.f32 %v1781, %v1801
    %v1823 = vadd.f32 %v1821, %v1822
    %v1824 = vtanh.pop %v1823
    %v1825 = vmul.f32 %v1820, %v1824
    %v1826 = vsel %vm637, 1, 0
    %1827 = vset.pattern.permute.xlu0 0
    %1828 = vperm.xlu0 %1827, %v1826
    %v1829 = vpop.permute.xlu0 %1828
    %vm1830 = vcmp.eq.s32.totalorder %v1829, 1
    %v1831 = vsel %vm1830, %v1825, 0.0
    %v1833 = vperm.slane %v101, 0
    %v1834 = vperm.slane %v101, 1
    %v1835 = vperm.slane %v101, 2
    %v1836 = vperm.slane %v101, 3
    %v1841 = vadd.f32 %v627, %v1833
    %v1842 = vadd.f32 %v628, %v1835
    %v1843 = vadd.f32 %v629, %v1836
    %v1844 = vxor.u32 %v1841, 2147483648
    %v1845 = vmul.f32 %v1844, 1.442695
    %v1846 = vpow.pop %v1845
    %v1847 = vadd.f32 %v1846, 1.0
    %v1848 = vrcp.pop %v1847
    %v1849 = vmul.f32 %v1847, %v1848
    %v1850 = vsub.f32 1.0, %v1849
    %v1851 = vmul.f32 %v1848, %v1850
    %v1852 = vadd.f32 %v1848, %v1851
    %vm1853 = vweird.f32 %v1847
    %vm1854 = vweird.f32 %v1848
    %vm1855 = vmor %vm1853, %vm1854
    %v1856 = vsel %vm1855, %v1848, %v1852
    %v1857 = vand.u32 2147483647, %v1847
    %vm1858 = vcmp.eq.f32.partialorder %v1857, 8.507059e+37
    %v1859 = vand.u32 %v1847, 2147483648
    %v1860 = vor.u32 1.1754944e-38, %v1859
    %v1861 = vsel %vm1858, %v1860, %v1856
    %v1862 = vmul.f32 1.0, %v1861
    %v1863 = vtanh.pop %v1842
    %v1864 = vxor.u32 %v1843, 2147483648
    %v1865 = vmul.f32 %v1864, 1.442695
    %v1866 = vpow.pop %v1865
    %v1867 = vadd.f32 %v1866, 1.0
    %v1868 = vrcp.pop %v1867
    %v1869 = vmul.f32 %v1867, %v1868
    %v1870 = vsub.f32 1.0, %v1869
    %v1871 = vmul.f32 %v1868, %v1870
    %v1872 = vadd.f32 %v1868, %v1871
    %vm1873 = vweird.f32 %v1867
    %vm1874 = vweird.f32 %v1868
    %vm1875 = vmor %vm1873, %vm1874
    %v1876 = vsel %vm1875, %v1868, %v1872
    %v1877 = vand.u32 2147483647, %v1867
    %vm1878 = vcmp.eq.f32.partialorder %v1877, 8.507059e+37
    %v1879 = vand.u32 %v1867, 2147483648
    %v1880 = vor.u32 1.1754944e-38, %v1879
    %v1881 = vsel %vm1878, %v1880, %v1876
    %v1882 = vmul.f32 1.0, %v1881
    %v1883 = vmul.f32 %v1862, %v1863
    %v1884 = vtanh.pop %v1883
    %v1885 = vmul.f32 %v1882, %v1884
    %v1886 = vsel %vm1830, %v1883, 0.0
    %v1887 = vsel %vm1830, %v1885, 0.0
    %v1889 = vsel %vm699, %v1887, 0
    %1891 = vmatpush.msra.mxu0 0.0
    %1892 = vmatpush.msra.mxu0 0.0
    %1893 = vmatpush.msra.mxu0 0.0
    %1894 = vmatpush.msra.mxu0 0.0
    %1895 = vmatpush.msra.mxu0 0.0
    %1896 = vmatpush.msra.mxu0 0.0
    %1897 = vmatpush.msra.mxu0 0.0
    %1898 = vmatpush.msra.mxu0 0.0
    %1899 = vmatpush.msra.mxu0 0.0
    %1900 = vmatpush.msra.mxu0 0.0
    %1901 = vmatpush.msra.mxu0 0.0
    %1902 = vmatpush.msra.mxu0 0.0
    %1903 = vmatpush.msra.mxu0 0.0
    %1904 = vmatpush.msra.mxu0 0.0
    %1905 = vmatpush.msra.mxu0 %v96
    %1906 = vmatpush.msra.mxu0 %v92
    %1907 = vmatmul.f32.gmra.mxu0 %v1889
    %v1908 = vpop.f32.mrf.mxu0
    %v1909 = vadd.f32 0.0, %v1908
    %1910 = vdwg.mxu0
    %1911 = vmatpush.msra.mxu0 0.0
    %1912 = vmatpush.msra.mxu0 0.0
    %1913 = vmatpush.msra.mxu0 0.0
    %1914 = vmatpush.msra.mxu0 0.0
    %1915 = vmatpush.msra.mxu0 0.0
    %1916 = vmatpush.msra.mxu0 0.0
    %1917 = vmatpush.msra.mxu0 0.0
    %1918 = vmatpush.msra.mxu0 0.0
    %1919 = vmatpush.msra.mxu0 0.0
    %1920 = vmatpush.msra.mxu0 0.0
    %1921 = vmatpush.msra.mxu0 0.0
    %1922 = vmatpush.msra.mxu0 0.0
    %1923 = vmatpush.msra.mxu0 0.0
    %1924 = vmatpush.msra.mxu0 0.0
    %1925 = vmatpush.msra.mxu0 %v97
    %1926 = vmatpush.msra.mxu0 %v93
    %1927 = vmatmul.f32.gmra.mxu0 %v1889
    %v1928 = vpop.f32.mrf.mxu0
    %v1929 = vadd.f32 0.0, %v1928
    %1930 = vdwg.mxu0
    %1931 = vmatpush.msra.mxu0 0.0
    %1932 = vmatpush.msra.mxu0 0.0
    %1933 = vmatpush.msra.mxu0 0.0
    %1934 = vmatpush.msra.mxu0 0.0
    %1935 = vmatpush.msra.mxu0 0.0
    %1936 = vmatpush.msra.mxu0 0.0
    %1937 = vmatpush.msra.mxu0 0.0
    %1938 = vmatpush.msra.mxu0 0.0
    %1939 = vmatpush.msra.mxu0 0.0
    %1940 = vmatpush.msra.mxu0 0.0
    %1941 = vmatpush.msra.mxu0 0.0
    %1942 = vmatpush.msra.mxu0 0.0
    %1943 = vmatpush.msra.mxu0 0.0
    %1944 = vmatpush.msra.mxu0 0.0
    %1945 = vmatpush.msra.mxu0 %v98
    %1946 = vmatpush.msra.mxu0 %v94
    %1947 = vmatmul.f32.gmra.mxu0 %v1889
    %v1948 = vpop.f32.mrf.mxu0
    %v1949 = vadd.f32 0.0, %v1948
    %1950 = vdwg.mxu0
    %1951 = vmatpush.msra.mxu0 0.0
    %1952 = vmatpush.msra.mxu0 0.0
    %1953 = vmatpush.msra.mxu0 0.0
    %1954 = vmatpush.msra.mxu0 0.0
    %1955 = vmatpush.msra.mxu0 0.0
    %1956 = vmatpush.msra.mxu0 0.0
    %1957 = vmatpush.msra.mxu0 0.0
    %1958 = vmatpush.msra.mxu0 0.0
    %1959 = vmatpush.msra.mxu0 0.0
    %1960 = vmatpush.msra.mxu0 0.0
    %1961 = vmatpush.msra.mxu0 0.0
    %1962 = vmatpush.msra.mxu0 0.0
    %1963 = vmatpush.msra.mxu0 0.0
    %1964 = vmatpush.msra.mxu0 0.0
    %1965 = vmatpush.msra.mxu0 %v99
    %1966 = vmatpush.msra.mxu0 %v95
    %1967 = vmatmul.f32.gmra.mxu0 %v1889
    %v1968 = vpop.f32.mrf.mxu0
    %v1969 = vadd.f32 0.0, %v1968
    %1970 = vdwg.mxu0
    %v1971 = vadd.f32 %v591, %v1909
    %v1972 = vadd.f32 %v592, %v1929
    %v1973 = vadd.f32 %v593, %v1949
    %v1974 = vadd.f32 %v594, %v1969
    %v1975 = vadd.f32 %v1971, %v1833
    %v1976 = vadd.f32 %v1972, %v1834
    %v1977 = vadd.f32 %v1973, %v1835
    %v1978 = vadd.f32 %v1974, %v1836
    %v1979 = vxor.u32 %v1975, 2147483648
    %v1980 = vmul.f32 %v1979, 1.442695
    %v1981 = vpow.pop %v1980
    %v1982 = vadd.f32 %v1981, 1.0
    %v1983 = vrcp.pop %v1982
    %v1984 = vmul.f32 %v1982, %v1983
    %v1985 = vsub.f32 1.0, %v1984
    %v1986 = vmul.f32 %v1983, %v1985
    %v1987 = vadd.f32 %v1983, %v1986
    %vm1988 = vweird.f32 %v1982
    %vm1989 = vweird.f32 %v1983
    %vm1990 = vmor %vm1988, %vm1989
    %v1991 = vsel %vm1990, %v1983, %v1987
    %v1992 = vand.u32 2147483647, %v1982
    %vm1993 = vcmp.eq.f32.partialorder %v1992, 8.507059e+37
    %v1994 = vand.u32 %v1982, 2147483648
    %v1995 = vor.u32 1.1754944e-38, %v1994
    %v1996 = vsel %vm1993, %v1995, %v1991
    %v1997 = vmul.f32 1.0, %v1996
    %v1998 = vxor.u32 %v1976, 2147483648
    %v1999 = vmul.f32 %v1998, 1.442695
    %v2000 = vpow.pop %v1999
    %v2001 = vadd.f32 %v2000, 1.0
    %v2002 = vrcp.pop %v2001
    %v2003 = vmul.f32 %v2001, %v2002
    %v2004 = vsub.f32 1.0, %v2003
    %v2005 = vmul.f32 %v2002, %v2004
    %v2006 = vadd.f32 %v2002, %v2005
    %vm2007 = vweird.f32 %v2001
    %vm2008 = vweird.f32 %v2002
    %vm2009 = vmor %vm2007, %vm2008
    %v2010 = vsel %vm2009, %v2002, %v2006
    %v2011 = vand.u32 2147483647, %v2001
    %vm2012 = vcmp.eq.f32.partialorder %v2011, 8.507059e+37
    %v2013 = vand.u32 %v2001, 2147483648
    %v2014 = vor.u32 1.1754944e-38, %v2013
    %v2015 = vsel %vm2012, %v2014, %v2010
    %v2016 = vmul.f32 1.0, %v2015
    %v2017 = vtanh.pop %v1977
    %v2018 = vxor.u32 %v1978, 2147483648
    %v2019 = vmul.f32 %v2018, 1.442695
    %v2020 = vpow.pop %v2019
    %v2021 = vadd.f32 %v2020, 1.0
    %v2022 = vrcp.pop %v2021
    %v2023 = vmul.f32 %v2021, %v2022
    %v2024 = vsub.f32 1.0, %v2023
    %v2025 = vmul.f32 %v2022, %v2024
    %v2026 = vadd.f32 %v2022, %v2025
    %vm2027 = vweird.f32 %v2021
    %vm2028 = vweird.f32 %v2022
    %vm2029 = vmor %vm2027, %vm2028
    %v2030 = vsel %vm2029, %v2022, %v2026
    %v2031 = vand.u32 2147483647, %v2021
    %vm2032 = vcmp.eq.f32.partialorder %v2031, 8.507059e+37
    %v2033 = vand.u32 %v2021, 2147483648
    %v2034 = vor.u32 1.1754944e-38, %v2033
    %v2035 = vsel %vm2032, %v2034, %v2030
    %v2036 = vmul.f32 1.0, %v2035
    %v2037 = vmul.f32 %v2016, %v1886
    %v2038 = vmul.f32 %v1997, %v2017
    %v2039 = vadd.f32 %v2037, %v2038
    %v2040 = vtanh.pop %v2039
    %v2041 = vmul.f32 %v2036, %v2040
    %v2042 = vsel %vm1668, %v2039, %v1886
    %v2043 = vsel %vm1668, %v2041, %v1887
    %v2044 = vsel %vm1668, %v2041, 0.0
    %v2046 = vsel %vm699, %v2043, 0
    %2048 = vmatpush.msra.mxu0 0.0
    %2049 = vmatpush.msra.mxu0 0.0
    %2050 = vmatpush.msra.mxu0 0.0
    %2051 = vmatpush.msra.mxu0 0.0
    %2052 = vmatpush.msra.mxu0 0.0
    %2053 = vmatpush.msra.mxu0 0.0
    %2054 = vmatpush.msra.mxu0 0.0
    %2055 = vmatpush.msra.mxu0 0.0
    %2056 = vmatpush.msra.mxu0 0.0
    %2057 = vmatpush.msra.mxu0 0.0
    %2058 = vmatpush.msra.mxu0 0.0
    %2059 = vmatpush.msra.mxu0 0.0
    %2060 = vmatpush.msra.mxu0 0.0
    %2061 = vmatpush.msra.mxu0 0.0
    %2062 = vmatpush.msra.mxu0 %v96
    %2063 = vmatpush.msra.mxu0 %v92
    %2064 = vmatmul.f32.gmra.mxu0 %v2046
    %v2065 = vpop.f32.mrf.mxu0
    %v2066 = vadd.f32 0.0, %v2065
    %2067 = vdwg.mxu0
    %2068 = vmatpush.msra.mxu0 0.0
    %2069 = vmatpush.msra.mxu0 0.0
    %2070 = vmatpush.msra.mxu0 0.0
    %2071 = vmatpush.msra.mxu0 0.0
    %2072 = vmatpush.msra.mxu0 0.0
    %2073 = vmatpush.msra.mxu0 0.0
    %2074 = vmatpush.msra.mxu0 0.0
    %2075 = vmatpush.msra.mxu0 0.0
    %2076 = vmatpush.msra.mxu0 0.0
    %2077 = vmatpush.msra.mxu0 0.0
    %2078 = vmatpush.msra.mxu0 0.0
    %2079 = vmatpush.msra.mxu0 0.0
    %2080 = vmatpush.msra.mxu0 0.0
    %2081 = vmatpush.msra.mxu0 0.0
    %2082 = vmatpush.msra.mxu0 %v97
    %2083 = vmatpush.msra.mxu0 %v93
    %2084 = vmatmul.f32.gmra.mxu0 %v2046
    %v2085 = vpop.f32.mrf.mxu0
    %v2086 = vadd.f32 0.0, %v2085
    %2087 = vdwg.mxu0
    %2088 = vmatpush.msra.mxu0 0.0
    %2089 = vmatpush.msra.mxu0 0.0
    %2090 = vmatpush.msra.mxu0 0.0
    %2091 = vmatpush.msra.mxu0 0.0
    %2092 = vmatpush.msra.mxu0 0.0
    %2093 = vmatpush.msra.mxu0 0.0
    %2094 = vmatpush.msra.mxu0 0.0
    %2095 = vmatpush.msra.mxu0 0.0
    %2096 = vmatpush.msra.mxu0 0.0
    %2097 = vmatpush.msra.mxu0 0.0
    %2098 = vmatpush.msra.mxu0 0.0
    %2099 = vmatpush.msra.mxu0 0.0
    %2100 = vmatpush.msra.mxu0 0.0
    %2101 = vmatpush.msra.mxu0 0.0
    %2102 = vmatpush.msra.mxu0 %v98
    %2103 = vmatpush.msra.mxu0 %v94
    %2104 = vmatmul.f32.gmra.mxu0 %v2046
    %v2105 = vpop.f32.mrf.mxu0
    %v2106 = vadd.f32 0.0, %v2105
    %2107 = vdwg.mxu0
    %2108 = vmatpush.msra.mxu0 0.0
    %2109 = vmatpush.msra.mxu0 0.0
    %2110 = vmatpush.msra.mxu0 0.0
    %2111 = vmatpush.msra.mxu0 0.0
    %2112 = vmatpush.msra.mxu0 0.0
    %2113 = vmatpush.msra.mxu0 0.0
    %2114 = vmatpush.msra.mxu0 0.0
    %2115 = vmatpush.msra.mxu0 0.0
    %2116 = vmatpush.msra.mxu0 0.0
    %2117 = vmatpush.msra.mxu0 0.0
    %2118 = vmatpush.msra.mxu0 0.0
    %2119 = vmatpush.msra.mxu0 0.0
    %2120 = vmatpush.msra.mxu0 0.0
    %2121 = vmatpush.msra.mxu0 0.0
    %2122 = vmatpush.msra.mxu0 %v99
    %2123 = vmatpush.msra.mxu0 %v95
    %2124 = vmatmul.f32.gmra.mxu0 %v2046
    %v2125 = vpop.f32.mrf.mxu0
    %v2126 = vadd.f32 0.0, %v2125
    %2127 = vdwg.mxu0
    %v2128 = vadd.f32 %v551, %v2066
    %v2129 = vadd.f32 %v552, %v2086
    %v2130 = vadd.f32 %v553, %v2106
    %v2131 = vadd.f32 %v554, %v2126
    %v2132 = vadd.f32 %v2128, %v1833
    %v2133 = vadd.f32 %v2129, %v1834
    %v2134 = vadd.f32 %v2130, %v1835
    %v2135 = vadd.f32 %v2131, %v1836
    %v2136 = vxor.u32 %v2132, 2147483648
    %v2137 = vmul.f32 %v2136, 1.442695
    %v2138 = vpow.pop %v2137
    %v2139 = vadd.f32 %v2138, 1.0
    %v2140 = vrcp.pop %v2139
    %v2141 = vmul.f32 %v2139, %v2140
    %v2142 = vsub.f32 1.0, %v2141
    %v2143 = vmul.f32 %v2140, %v2142
    %v2144 = vadd.f32 %v2140, %v2143
    %vm2145 = vweird.f32 %v2139
    %vm2146 = vweird.f32 %v2140
    %vm2147 = vmor %vm2145, %vm2146
    %v2148 = vsel %vm2147, %v2140, %v2144
    %v2149 = vand.u32 2147483647, %v2139
    %vm2150 = vcmp.eq.f32.partialorder %v2149, 8.507059e+37
    %v2151 = vand.u32 %v2139, 2147483648
    %v2152 = vor.u32 1.1754944e-38, %v2151
    %v2153 = vsel %vm2150, %v2152, %v2148
    %v2154 = vmul.f32 1.0, %v2153
    %v2155 = vxor.u32 %v2133, 2147483648
    %v2156 = vmul.f32 %v2155, 1.442695
    %v2157 = vpow.pop %v2156
    %v2158 = vadd.f32 %v2157, 1.0
    %v2159 = vrcp.pop %v2158
    %v2160 = vmul.f32 %v2158, %v2159
    %v2161 = vsub.f32 1.0, %v2160
    %v2162 = vmul.f32 %v2159, %v2161
    %v2163 = vadd.f32 %v2159, %v2162
    %vm2164 = vweird.f32 %v2158
    %vm2165 = vweird.f32 %v2159
    %vm2166 = vmor %vm2164, %vm2165
    %v2167 = vsel %vm2166, %v2159, %v2163
    %v2168 = vand.u32 2147483647, %v2158
    %vm2169 = vcmp.eq.f32.partialorder %v2168, 8.507059e+37
    %v2170 = vand.u32 %v2158, 2147483648
    %v2171 = vor.u32 1.1754944e-38, %v2170
    %v2172 = vsel %vm2169, %v2171, %v2167
    %v2173 = vmul.f32 1.0, %v2172
    %v2174 = vtanh.pop %v2134
    %v2175 = vxor.u32 %v2135, 2147483648
    %v2176 = vmul.f32 %v2175, 1.442695
    %v2177 = vpow.pop %v2176
    %v2178 = vadd.f32 %v2177, 1.0
    %v2179 = vrcp.pop %v2178
    %v2180 = vmul.f32 %v2178, %v2179
    %v2181 = vsub.f32 1.0, %v2180
    %v2182 = vmul.f32 %v2179, %v2181
    %v2183 = vadd.f32 %v2179, %v2182
    %vm2184 = vweird.f32 %v2178
    %vm2185 = vweird.f32 %v2179
    %vm2186 = vmor %vm2184, %vm2185
    %v2187 = vsel %vm2186, %v2179, %v2183
    %v2188 = vand.u32 2147483647, %v2178
    %vm2189 = vcmp.eq.f32.partialorder %v2188, 8.507059e+37
    %v2190 = vand.u32 %v2178, 2147483648
    %v2191 = vor.u32 1.1754944e-38, %v2190
    %v2192 = vsel %vm2189, %v2191, %v2187
    %v2193 = vmul.f32 1.0, %v2192
    %v2194 = vmul.f32 %v2173, %v2042
    %v2195 = vmul.f32 %v2154, %v2174
    %v2196 = vadd.f32 %v2194, %v2195
    %v2197 = vtanh.pop %v2196
    %v2198 = vmul.f32 %v2193, %v2197
    %v2199 = vsel %vm1506, %v2196, %v2042
    %v2200 = vsel %vm1506, %v2198, %v2043
    %v2201 = vsel %vm1506, %v2198, 0.0
    %v2203 = vsel %vm699, %v2200, 0
    %2205 = vmatpush.msra.mxu0 0.0
    %2206 = vmatpush.msra.mxu0 0.0
    %2207 = vmatpush.msra.mxu0 0.0
    %2208 = vmatpush.msra.mxu0 0.0
    %2209 = vmatpush.msra.mxu0 0.0
    %2210 = vmatpush.msra.mxu0 0.0
    %2211 = vmatpush.msra.mxu0 0.0
    %2212 = vmatpush.msra.mxu0 0.0
    %2213 = vmatpush.msra.mxu0 0.0
    %2214 = vmatpush.msra.mxu0 0.0
    %2215 = vmatpush.msra.mxu0 0.0
    %2216 = vmatpush.msra.mxu0 0.0
    %2217 = vmatpush.msra.mxu0 0.0
    %2218 = vmatpush.msra.mxu0 0.0
    %2219 = vmatpush.msra.mxu0 %v96
    %2220 = vmatpush.msra.mxu0 %v92
    %2221 = vmatmul.f32.gmra.mxu0 %v2203
    %v2222 = vpop.f32.mrf.mxu0
    %v2223 = vadd.f32 0.0, %v2222
    %2224 = vdwg.mxu0
    %2225 = vmatpush.msra.mxu0 0.0
    %2226 = vmatpush.msra.mxu0 0.0
    %2227 = vmatpush.msra.mxu0 0.0
    %2228 = vmatpush.msra.mxu0 0.0
    %2229 = vmatpush.msra.mxu0 0.0
    %2230 = vmatpush.msra.mxu0 0.0
    %2231 = vmatpush.msra.mxu0 0.0
    %2232 = vmatpush.msra.mxu0 0.0
    %2233 = vmatpush.msra.mxu0 0.0
    %2234 = vmatpush.msra.mxu0 0.0
    %2235 = vmatpush.msra.mxu0 0.0
    %2236 = vmatpush.msra.mxu0 0.0
    %2237 = vmatpush.msra.mxu0 0.0
    %2238 = vmatpush.msra.mxu0 0.0
    %2239 = vmatpush.msra.mxu0 %v97
    %2240 = vmatpush.msra.mxu0 %v93
    %2241 = vmatmul.f32.gmra.mxu0 %v2203
    %v2242 = vpop.f32.mrf.mxu0
    %v2243 = vadd.f32 0.0, %v2242
    %2244 = vdwg.mxu0
    %2245 = vmatpush.msra.mxu0 0.0
    %2246 = vmatpush.msra.mxu0 0.0
    %2247 = vmatpush.msra.mxu0 0.0
    %2248 = vmatpush.msra.mxu0 0.0
    %2249 = vmatpush.msra.mxu0 0.0
    %2250 = vmatpush.msra.mxu0 0.0
    %2251 = vmatpush.msra.mxu0 0.0
    %2252 = vmatpush.msra.mxu0 0.0
    %2253 = vmatpush.msra.mxu0 0.0
    %2254 = vmatpush.msra.mxu0 0.0
    %2255 = vmatpush.msra.mxu0 0.0
    %2256 = vmatpush.msra.mxu0 0.0
    %2257 = vmatpush.msra.mxu0 0.0
    %2258 = vmatpush.msra.mxu0 0.0
    %2259 = vmatpush.msra.mxu0 %v98
    %2260 = vmatpush.msra.mxu0 %v94
    %2261 = vmatmul.f32.gmra.mxu0 %v2203
    %v2262 = vpop.f32.mrf.mxu0
    %v2263 = vadd.f32 0.0, %v2262
    %2264 = vdwg.mxu0
    %2265 = vmatpush.msra.mxu0 0.0
    %2266 = vmatpush.msra.mxu0 0.0
    %2267 = vmatpush.msra.mxu0 0.0
    %2268 = vmatpush.msra.mxu0 0.0
    %2269 = vmatpush.msra.mxu0 0.0
    %2270 = vmatpush.msra.mxu0 0.0
    %2271 = vmatpush.msra.mxu0 0.0
    %2272 = vmatpush.msra.mxu0 0.0
    %2273 = vmatpush.msra.mxu0 0.0
    %2274 = vmatpush.msra.mxu0 0.0
    %2275 = vmatpush.msra.mxu0 0.0
    %2276 = vmatpush.msra.mxu0 0.0
    %2277 = vmatpush.msra.mxu0 0.0
    %2278 = vmatpush.msra.mxu0 0.0
    %2279 = vmatpush.msra.mxu0 %v99
    %2280 = vmatpush.msra.mxu0 %v95
    %2281 = vmatmul.f32.gmra.mxu0 %v2203
    %v2282 = vpop.f32.mrf.mxu0
    %v2283 = vadd.f32 0.0, %v2282
    %2284 = vdwg.mxu0
    %v2285 = vadd.f32 %v511, %v2223
    %v2286 = vadd.f32 %v512, %v2243
    %v2287 = vadd.f32 %v513, %v2263
    %v2288 = vadd.f32 %v514, %v2283
    %v2289 = vadd.f32 %v2285, %v1833
    %v2290 = vadd.f32 %v2286, %v1834
    %v2291 = vadd.f32 %v2287, %v1835
    %v2292 = vadd.f32 %v2288, %v1836
    %v2293 = vxor.u32 %v2289, 2147483648
    %v2294 = vmul.f32 %v2293, 1.442695
    %v2295 = vpow.pop %v2294
    %v2296 = vadd.f32 %v2295, 1.0
    %v2297 = vrcp.pop %v2296
    %v2298 = vmul.f32 %v2296, %v2297
    %v2299 = vsub.f32 1.0, %v2298
    %v2300 = vmul.f32 %v2297, %v2299
    %v2301 = vadd.f32 %v2297, %v2300
    %vm2302 = vweird.f32 %v2296
    %vm2303 = vweird.f32 %v2297
    %vm2304 = vmor %vm2302, %vm2303
    %v2305 = vsel %vm2304, %v2297, %v2301
    %v2306 = vand.u32 2147483647, %v2296
    %vm2307 = vcmp.eq.f32.partialorder %v2306, 8.507059e+37
    %v2308 = vand.u32 %v2296, 2147483648
    %v2309 = vor.u32 1.1754944e-38, %v2308
    %v2310 = vsel %vm2307, %v2309, %v2305
    %v2311 = vmul.f32 1.0, %v2310
    %v2312 = vxor.u32 %v2290, 2147483648
    %v2313 = vmul.f32 %v2312, 1.442695
    %v2314 = vpow.pop %v2313
    %v2315 = vadd.f32 %v2314, 1.0
    %v2316 = vrcp.pop %v2315
    %v2317 = vmul.f32 %v2315, %v2316
    %v2318 = vsub.f32 1.0, %v2317
    %v2319 = vmul.f32 %v2316, %v2318
    %v2320 = vadd.f32 %v2316, %v2319
    %vm2321 = vweird.f32 %v2315
    %vm2322 = vweird.f32 %v2316
    %vm2323 = vmor %vm2321, %vm2322
    %v2324 = vsel %vm2323, %v2316, %v2320
    %v2325 = vand.u32 2147483647, %v2315
    %vm2326 = vcmp.eq.f32.partialorder %v2325, 8.507059e+37
    %v2327 = vand.u32 %v2315, 2147483648
    %v2328 = vor.u32 1.1754944e-38, %v2327
    %v2329 = vsel %vm2326, %v2328, %v2324
    %v2330 = vmul.f32 1.0, %v2329
    %v2331 = vtanh.pop %v2291
    %v2332 = vxor.u32 %v2292, 2147483648
    %v2333 = vmul.f32 %v2332, 1.442695
    %v2334 = vpow.pop %v2333
    %v2335 = vadd.f32 %v2334, 1.0
    %v2336 = vrcp.pop %v2335
    %v2337 = vmul.f32 %v2335, %v2336
    %v2338 = vsub.f32 1.0, %v2337
    %v2339 = vmul.f32 %v2336, %v2338
    %v2340 = vadd.f32 %v2336, %v2339
    %vm2341 = vweird.f32 %v2335
    %vm2342 = vweird.f32 %v2336
    %vm2343 = vmor %vm2341, %vm2342
    %v2344 = vsel %vm2343, %v2336, %v2340
    %v2345 = vand.u32 2147483647, %v2335
    %vm2346 = vcmp.eq.f32.partialorder %v2345, 8.507059e+37
    %v2347 = vand.u32 %v2335, 2147483648
    %v2348 = vor.u32 1.1754944e-38, %v2347
    %v2349 = vsel %vm2346, %v2348, %v2344
    %v2350 = vmul.f32 1.0, %v2349
    %v2351 = vmul.f32 %v2330, %v2199
    %v2352 = vmul.f32 %v2311, %v2331
    %v2353 = vadd.f32 %v2351, %v2352
    %v2354 = vtanh.pop %v2353
    %v2355 = vmul.f32 %v2350, %v2354
    %v2356 = vsel %vm1344, %v2353, %v2199
    %v2357 = vsel %vm1344, %v2355, %v2200
    %v2358 = vsel %vm1344, %v2355, 0.0
    %v2360 = vsel %vm699, %v2357, 0
    %2362 = vmatpush.msra.mxu0 0.0
    %2363 = vmatpush.msra.mxu0 0.0
    %2364 = vmatpush.msra.mxu0 0.0
    %2365 = vmatpush.msra.mxu0 0.0
    %2366 = vmatpush.msra.mxu0 0.0
    %2367 = vmatpush.msra.mxu0 0.0
    %2368 = vmatpush.msra.mxu0 0.0
    %2369 = vmatpush.msra.mxu0 0.0
    %2370 = vmatpush.msra.mxu0 0.0
    %2371 = vmatpush.msra.mxu0 0.0
    %2372 = vmatpush.msra.mxu0 0.0
    %2373 = vmatpush.msra.mxu0 0.0
    %2374 = vmatpush.msra.mxu0 0.0
    %2375 = vmatpush.msra.mxu0 0.0
    %2376 = vmatpush.msra.mxu0 %v96
    %2377 = vmatpush.msra.mxu0 %v92
    %2378 = vmatmul.f32.gmra.mxu0 %v2360
    %v2379 = vpop.f32.mrf.mxu0
    %v2380 = vadd.f32 0.0, %v2379
    %2381 = vdwg.mxu0
    %2382 = vmatpush.msra.mxu0 0.0
    %2383 = vmatpush.msra.mxu0 0.0
    %2384 = vmatpush.msra.mxu0 0.0
    %2385 = vmatpush.msra.mxu0 0.0
    %2386 = vmatpush.msra.mxu0 0.0
    %2387 = vmatpush.msra.mxu0 0.0
    %2388 = vmatpush.msra.mxu0 0.0
    %2389 = vmatpush.msra.mxu0 0.0
    %2390 = vmatpush.msra.mxu0 0.0
    %2391 = vmatpush.msra.mxu0 0.0
    %2392 = vmatpush.msra.mxu0 0.0
    %2393 = vmatpush.msra.mxu0 0.0
    %2394 = vmatpush.msra.mxu0 0.0
    %2395 = vmatpush.msra.mxu0 0.0
    %2396 = vmatpush.msra.mxu0 %v97
    %2397 = vmatpush.msra.mxu0 %v93
    %2398 = vmatmul.f32.gmra.mxu0 %v2360
    %v2399 = vpop.f32.mrf.mxu0
    %v2400 = vadd.f32 0.0, %v2399
    %2401 = vdwg.mxu0
    %2402 = vmatpush.msra.mxu0 0.0
    %2403 = vmatpush.msra.mxu0 0.0
    %2404 = vmatpush.msra.mxu0 0.0
    %2405 = vmatpush.msra.mxu0 0.0
    %2406 = vmatpush.msra.mxu0 0.0
    %2407 = vmatpush.msra.mxu0 0.0
    %2408 = vmatpush.msra.mxu0 0.0
    %2409 = vmatpush.msra.mxu0 0.0
    %2410 = vmatpush.msra.mxu0 0.0
    %2411 = vmatpush.msra.mxu0 0.0
    %2412 = vmatpush.msra.mxu0 0.0
    %2413 = vmatpush.msra.mxu0 0.0
    %2414 = vmatpush.msra.mxu0 0.0
    %2415 = vmatpush.msra.mxu0 0.0
    %2416 = vmatpush.msra.mxu0 %v98
    %2417 = vmatpush.msra.mxu0 %v94
    %2418 = vmatmul.f32.gmra.mxu0 %v2360
    %v2419 = vpop.f32.mrf.mxu0
    %v2420 = vadd.f32 0.0, %v2419
    %2421 = vdwg.mxu0
    %2422 = vmatpush.msra.mxu0 0.0
    %2423 = vmatpush.msra.mxu0 0.0
    %2424 = vmatpush.msra.mxu0 0.0
    %2425 = vmatpush.msra.mxu0 0.0
    %2426 = vmatpush.msra.mxu0 0.0
    %2427 = vmatpush.msra.mxu0 0.0
    %2428 = vmatpush.msra.mxu0 0.0
    %2429 = vmatpush.msra.mxu0 0.0
    %2430 = vmatpush.msra.mxu0 0.0
    %2431 = vmatpush.msra.mxu0 0.0
    %2432 = vmatpush.msra.mxu0 0.0
    %2433 = vmatpush.msra.mxu0 0.0
    %2434 = vmatpush.msra.mxu0 0.0
    %2435 = vmatpush.msra.mxu0 0.0
    %2436 = vmatpush.msra.mxu0 %v99
    %2437 = vmatpush.msra.mxu0 %v95
    %2438 = vmatmul.f32.gmra.mxu0 %v2360
    %v2439 = vpop.f32.mrf.mxu0
    %v2440 = vadd.f32 0.0, %v2439
    %2441 = vdwg.mxu0
    %v2442 = vadd.f32 %v471, %v2380
    %v2443 = vadd.f32 %v472, %v2400
    %v2444 = vadd.f32 %v473, %v2420
    %v2445 = vadd.f32 %v474, %v2440
    %v2446 = vadd.f32 %v2442, %v1833
    %v2447 = vadd.f32 %v2443, %v1834
    %v2448 = vadd.f32 %v2444, %v1835
    %v2449 = vadd.f32 %v2445, %v1836
    %v2450 = vxor.u32 %v2446, 2147483648
    %v2451 = vmul.f32 %v2450, 1.442695
    %v2452 = vpow.pop %v2451
    %v2453 = vadd.f32 %v2452, 1.0
    %v2454 = vrcp.pop %v2453
    %v2455 = vmul.f32 %v2453, %v2454
    %v2456 = vsub.f32 1.0, %v2455
    %v2457 = vmul.f32 %v2454, %v2456
    %v2458 = vadd.f32 %v2454, %v2457
    %vm2459 = vweird.f32 %v2453
    %vm2460 = vweird.f32 %v2454
    %vm2461 = vmor %vm2459, %vm2460
    %v2462 = vsel %vm2461, %v2454, %v2458
    %v2463 = vand.u32 2147483647, %v2453
    %vm2464 = vcmp.eq.f32.partialorder %v2463, 8.507059e+37
    %v2465 = vand.u32 %v2453, 2147483648
    %v2466 = vor.u32 1.1754944e-38, %v2465
    %v2467 = vsel %vm2464, %v2466, %v2462
    %v2468 = vmul.f32 1.0, %v2467
    %v2469 = vxor.u32 %v2447, 2147483648
    %v2470 = vmul.f32 %v2469, 1.442695
    %v2471 = vpow.pop %v2470
    %v2472 = vadd.f32 %v2471, 1.0
    %v2473 = vrcp.pop %v2472
    %v2474 = vmul.f32 %v2472, %v2473
    %v2475 = vsub.f32 1.0, %v2474
    %v2476 = vmul.f32 %v2473, %v2475
    %v2477 = vadd.f32 %v2473, %v2476
    %vm2478 = vweird.f32 %v2472
    %vm2479 = vweird.f32 %v2473
    %vm2480 = vmor %vm2478, %vm2479
    %v2481 = vsel %vm2480, %v2473, %v2477
    %v2482 = vand.u32 2147483647, %v2472
    %vm2483 = vcmp.eq.f32.partialorder %v2482, 8.507059e+37
    %v2484 = vand.u32 %v2472, 2147483648
    %v2485 = vor.u32 1.1754944e-38, %v2484
    %v2486 = vsel %vm2483, %v2485, %v2481
    %v2487 = vmul.f32 1.0, %v2486
    %v2488 = vtanh.pop %v2448
    %v2489 = vxor.u32 %v2449, 2147483648
    %v2490 = vmul.f32 %v2489, 1.442695
    %v2491 = vpow.pop %v2490
    %v2492 = vadd.f32 %v2491, 1.0
    %v2493 = vrcp.pop %v2492
    %v2494 = vmul.f32 %v2492, %v2493
    %v2495 = vsub.f32 1.0, %v2494
    %v2496 = vmul.f32 %v2493, %v2495
    %v2497 = vadd.f32 %v2493, %v2496
    %vm2498 = vweird.f32 %v2492
    %vm2499 = vweird.f32 %v2493
    %vm2500 = vmor %vm2498, %vm2499
    %v2501 = vsel %vm2500, %v2493, %v2497
    %v2502 = vand.u32 2147483647, %v2492
    %vm2503 = vcmp.eq.f32.partialorder %v2502, 8.507059e+37
    %v2504 = vand.u32 %v2492, 2147483648
    %v2505 = vor.u32 1.1754944e-38, %v2504
    %v2506 = vsel %vm2503, %v2505, %v2501
    %v2507 = vmul.f32 1.0, %v2506
    %v2508 = vmul.f32 %v2487, %v2356
    %v2509 = vmul.f32 %v2468, %v2488
    %v2510 = vadd.f32 %v2508, %v2509
    %v2511 = vtanh.pop %v2510
    %v2512 = vmul.f32 %v2507, %v2511
    %v2513 = vsel %vm1182, %v2510, %v2356
    %v2514 = vsel %vm1182, %v2512, %v2357
    %v2515 = vsel %vm1182, %v2512, 0.0
    %v2517 = vsel %vm699, %v2514, 0
    %2519 = vmatpush.msra.mxu0 0.0
    %2520 = vmatpush.msra.mxu0 0.0
    %2521 = vmatpush.msra.mxu0 0.0
    %2522 = vmatpush.msra.mxu0 0.0
    %2523 = vmatpush.msra.mxu0 0.0
    %2524 = vmatpush.msra.mxu0 0.0
    %2525 = vmatpush.msra.mxu0 0.0
    %2526 = vmatpush.msra.mxu0 0.0
    %2527 = vmatpush.msra.mxu0 0.0
    %2528 = vmatpush.msra.mxu0 0.0
    %2529 = vmatpush.msra.mxu0 0.0
    %2530 = vmatpush.msra.mxu0 0.0
    %2531 = vmatpush.msra.mxu0 0.0
    %2532 = vmatpush.msra.mxu0 0.0
    %2533 = vmatpush.msra.mxu0 %v96
    %2534 = vmatpush.msra.mxu0 %v92
    %2535 = vmatmul.f32.gmra.mxu0 %v2517
    %v2536 = vpop.f32.mrf.mxu0
    %v2537 = vadd.f32 0.0, %v2536
    %2538 = vdwg.mxu0
    %2539 = vmatpush.msra.mxu0 0.0
    %2540 = vmatpush.msra.mxu0 0.0
    %2541 = vmatpush.msra.mxu0 0.0
    %2542 = vmatpush.msra.mxu0 0.0
    %2543 = vmatpush.msra.mxu0 0.0
    %2544 = vmatpush.msra.mxu0 0.0
    %2545 = vmatpush.msra.mxu0 0.0
    %2546 = vmatpush.msra.mxu0 0.0
    %2547 = vmatpush.msra.mxu0 0.0
    %2548 = vmatpush.msra.mxu0 0.0
    %2549 = vmatpush.msra.mxu0 0.0
    %2550 = vmatpush.msra.mxu0 0.0
    %2551 = vmatpush.msra.mxu0 0.0
    %2552 = vmatpush.msra.mxu0 0.0
    %2553 = vmatpush.msra.mxu0 %v97
    %2554 = vmatpush.msra.mxu0 %v93
    %2555 = vmatmul.f32.gmra.mxu0 %v2517
    %v2556 = vpop.f32.mrf.mxu0
    %v2557 = vadd.f32 0.0, %v2556
    %2558 = vdwg.mxu0
    %2559 = vmatpush.msra.mxu0 0.0
    %2560 = vmatpush.msra.mxu0 0.0
    %2561 = vmatpush.msra.mxu0 0.0
    %2562 = vmatpush.msra.mxu0 0.0
    %2563 = vmatpush.msra.mxu0 0.0
    %2564 = vmatpush.msra.mxu0 0.0
    %2565 = vmatpush.msra.mxu0 0.0
    %2566 = vmatpush.msra.mxu0 0.0
    %2567 = vmatpush.msra.mxu0 0.0
    %2568 = vmatpush.msra.mxu0 0.0
    %2569 = vmatpush.msra.mxu0 0.0
    %2570 = vmatpush.msra.mxu0 0.0
    %2571 = vmatpush.msra.mxu0 0.0
    %2572 = vmatpush.msra.mxu0 0.0
    %2573 = vmatpush.msra.mxu0 %v98
    %2574 = vmatpush.msra.mxu0 %v94
    %2575 = vmatmul.f32.gmra.mxu0 %v2517
    %v2576 = vpop.f32.mrf.mxu0
    %v2577 = vadd.f32 0.0, %v2576
    %2578 = vdwg.mxu0
    %2579 = vmatpush.msra.mxu0 0.0
    %2580 = vmatpush.msra.mxu0 0.0
    %2581 = vmatpush.msra.mxu0 0.0
    %2582 = vmatpush.msra.mxu0 0.0
    %2583 = vmatpush.msra.mxu0 0.0
    %2584 = vmatpush.msra.mxu0 0.0
    %2585 = vmatpush.msra.mxu0 0.0
    %2586 = vmatpush.msra.mxu0 0.0
    %2587 = vmatpush.msra.mxu0 0.0
    %2588 = vmatpush.msra.mxu0 0.0
    %2589 = vmatpush.msra.mxu0 0.0
    %2590 = vmatpush.msra.mxu0 0.0
    %2591 = vmatpush.msra.mxu0 0.0
    %2592 = vmatpush.msra.mxu0 0.0
    %2593 = vmatpush.msra.mxu0 %v99
    %2594 = vmatpush.msra.mxu0 %v95
    %2595 = vmatmul.f32.gmra.mxu0 %v2517
    %v2596 = vpop.f32.mrf.mxu0
    %v2597 = vadd.f32 0.0, %v2596
    %2598 = vdwg.mxu0
    %v2599 = vadd.f32 %v431, %v2537
    %v2600 = vadd.f32 %v432, %v2557
    %v2601 = vadd.f32 %v433, %v2577
    %v2602 = vadd.f32 %v434, %v2597
    %v2603 = vadd.f32 %v2599, %v1833
    %v2604 = vadd.f32 %v2600, %v1834
    %v2605 = vadd.f32 %v2601, %v1835
    %v2606 = vadd.f32 %v2602, %v1836
    %v2607 = vxor.u32 %v2603, 2147483648
    %v2608 = vmul.f32 %v2607, 1.442695
    %v2609 = vpow.pop %v2608
    %v2610 = vadd.f32 %v2609, 1.0
    %v2611 = vrcp.pop %v2610
    %v2612 = vmul.f32 %v2610, %v2611
    %v2613 = vsub.f32 1.0, %v2612
    %v2614 = vmul.f32 %v2611, %v2613
    %v2615 = vadd.f32 %v2611, %v2614
    %vm2616 = vweird.f32 %v2610
    %vm2617 = vweird.f32 %v2611
    %vm2618 = vmor %vm2616, %vm2617
    %v2619 = vsel %vm2618, %v2611, %v2615
    %v2620 = vand.u32 2147483647, %v2610
    %vm2621 = vcmp.eq.f32.partialorder %v2620, 8.507059e+37
    %v2622 = vand.u32 %v2610, 2147483648
    %v2623 = vor.u32 1.1754944e-38, %v2622
    %v2624 = vsel %vm2621, %v2623, %v2619
    %v2625 = vmul.f32 1.0, %v2624
    %v2626 = vxor.u32 %v2604, 2147483648
    %v2627 = vmul.f32 %v2626, 1.442695
    %v2628 = vpow.pop %v2627
    %v2629 = vadd.f32 %v2628, 1.0
    %v2630 = vrcp.pop %v2629
    %v2631 = vmul.f32 %v2629, %v2630
    %v2632 = vsub.f32 1.0, %v2631
    %v2633 = vmul.f32 %v2630, %v2632
    %v2634 = vadd.f32 %v2630, %v2633
    %vm2635 = vweird.f32 %v2629
    %vm2636 = vweird.f32 %v2630
    %vm2637 = vmor %vm2635, %vm2636
    %v2638 = vsel %vm2637, %v2630, %v2634
    %v2639 = vand.u32 2147483647, %v2629
    %vm2640 = vcmp.eq.f32.partialorder %v2639, 8.507059e+37
    %v2641 = vand.u32 %v2629, 2147483648
    %v2642 = vor.u32 1.1754944e-38, %v2641
    %v2643 = vsel %vm2640, %v2642, %v2638
    %v2644 = vmul.f32 1.0, %v2643
    %v2645 = vtanh.pop %v2605
    %v2646 = vxor.u32 %v2606, 2147483648
    %v2647 = vmul.f32 %v2646, 1.442695
    %v2648 = vpow.pop %v2647
    %v2649 = vadd.f32 %v2648, 1.0
    %v2650 = vrcp.pop %v2649
    %v2651 = vmul.f32 %v2649, %v2650
    %v2652 = vsub.f32 1.0, %v2651
    %v2653 = vmul.f32 %v2650, %v2652
    %v2654 = vadd.f32 %v2650, %v2653
    %vm2655 = vweird.f32 %v2649
    %vm2656 = vweird.f32 %v2650
    %vm2657 = vmor %vm2655, %vm2656
    %v2658 = vsel %vm2657, %v2650, %v2654
    %v2659 = vand.u32 2147483647, %v2649
    %vm2660 = vcmp.eq.f32.partialorder %v2659, 8.507059e+37
    %v2661 = vand.u32 %v2649, 2147483648
    %v2662 = vor.u32 1.1754944e-38, %v2661
    %v2663 = vsel %vm2660, %v2662, %v2658
    %v2664 = vmul.f32 1.0, %v2663
    %v2665 = vmul.f32 %v2644, %v2513
    %v2666 = vmul.f32 %v2625, %v2645
    %v2667 = vadd.f32 %v2665, %v2666
    %v2668 = vtanh.pop %v2667
    %v2669 = vmul.f32 %v2664, %v2668
    %v2670 = vsel %vm1020, %v2667, %v2513
    %v2671 = vsel %vm1020, %v2669, %v2514
    %v2672 = vsel %vm1020, %v2669, 0.0
    %v2674 = vsel %vm699, %v2671, 0
    %2676 = vmatpush.msra.mxu0 0.0
    %2677 = vmatpush.msra.mxu0 0.0
    %2678 = vmatpush.msra.mxu0 0.0
    %2679 = vmatpush.msra.mxu0 0.0
    %2680 = vmatpush.msra.mxu0 0.0
    %2681 = vmatpush.msra.mxu0 0.0
    %2682 = vmatpush.msra.mxu0 0.0
    %2683 = vmatpush.msra.mxu0 0.0
    %2684 = vmatpush.msra.mxu0 0.0
    %2685 = vmatpush.msra.mxu0 0.0
    %2686 = vmatpush.msra.mxu0 0.0
    %2687 = vmatpush.msra.mxu0 0.0
    %2688 = vmatpush.msra.mxu0 0.0
    %2689 = vmatpush.msra.mxu0 0.0
    %2690 = vmatpush.msra.mxu0 %v96
    %2691 = vmatpush.msra.mxu0 %v92
    %2692 = vmatmul.f32.gmra.mxu0 %v2674
    %v2693 = vpop.f32.mrf.mxu0
    %v2694 = vadd.f32 0.0, %v2693
    %2695 = vdwg.mxu0
    %2696 = vmatpush.msra.mxu0 0.0
    %2697 = vmatpush.msra.mxu0 0.0
    %2698 = vmatpush.msra.mxu0 0.0
    %2699 = vmatpush.msra.mxu0 0.0
    %2700 = vmatpush.msra.mxu0 0.0
    %2701 = vmatpush.msra.mxu0 0.0
    %2702 = vmatpush.msra.mxu0 0.0
    %2703 = vmatpush.msra.mxu0 0.0
    %2704 = vmatpush.msra.mxu0 0.0
    %2705 = vmatpush.msra.mxu0 0.0
    %2706 = vmatpush.msra.mxu0 0.0
    %2707 = vmatpush.msra.mxu0 0.0
    %2708 = vmatpush.msra.mxu0 0.0
    %2709 = vmatpush.msra.mxu0 0.0
    %2710 = vmatpush.msra.mxu0 %v97
    %2711 = vmatpush.msra.mxu0 %v93
    %2712 = vmatmul.f32.gmra.mxu0 %v2674
    %v2713 = vpop.f32.mrf.mxu0
    %v2714 = vadd.f32 0.0, %v2713
    %2715 = vdwg.mxu0
    %2716 = vmatpush.msra.mxu0 0.0
    %2717 = vmatpush.msra.mxu0 0.0
    %2718 = vmatpush.msra.mxu0 0.0
    %2719 = vmatpush.msra.mxu0 0.0
    %2720 = vmatpush.msra.mxu0 0.0
    %2721 = vmatpush.msra.mxu0 0.0
    %2722 = vmatpush.msra.mxu0 0.0
    %2723 = vmatpush.msra.mxu0 0.0
    %2724 = vmatpush.msra.mxu0 0.0
    %2725 = vmatpush.msra.mxu0 0.0
    %2726 = vmatpush.msra.mxu0 0.0
    %2727 = vmatpush.msra.mxu0 0.0
    %2728 = vmatpush.msra.mxu0 0.0
    %2729 = vmatpush.msra.mxu0 0.0
    %2730 = vmatpush.msra.mxu0 %v98
    %2731 = vmatpush.msra.mxu0 %v94
    %2732 = vmatmul.f32.gmra.mxu0 %v2674
    %v2733 = vpop.f32.mrf.mxu0
    %v2734 = vadd.f32 0.0, %v2733
    %2735 = vdwg.mxu0
    %2736 = vmatpush.msra.mxu0 0.0
    %2737 = vmatpush.msra.mxu0 0.0
    %2738 = vmatpush.msra.mxu0 0.0
    %2739 = vmatpush.msra.mxu0 0.0
    %2740 = vmatpush.msra.mxu0 0.0
    %2741 = vmatpush.msra.mxu0 0.0
    %2742 = vmatpush.msra.mxu0 0.0
    %2743 = vmatpush.msra.mxu0 0.0
    %2744 = vmatpush.msra.mxu0 0.0
    %2745 = vmatpush.msra.mxu0 0.0
    %2746 = vmatpush.msra.mxu0 0.0
    %2747 = vmatpush.msra.mxu0 0.0
    %2748 = vmatpush.msra.mxu0 0.0
    %2749 = vmatpush.msra.mxu0 0.0
    %2750 = vmatpush.msra.mxu0 %v99
    %2751 = vmatpush.msra.mxu0 %v95
    %2752 = vmatmul.f32.gmra.mxu0 %v2674
    %v2753 = vpop.f32.mrf.mxu0
    %v2754 = vadd.f32 0.0, %v2753
    %2755 = vdwg.mxu0
    %v2756 = vadd.f32 %v390, %v2694
    %v2757 = vadd.f32 %v391, %v2714
    %v2758 = vadd.f32 %v392, %v2734
    %v2759 = vadd.f32 %v393, %v2754
    %v2760 = vadd.f32 %v2756, %v1833
    %v2761 = vadd.f32 %v2757, %v1834
    %v2762 = vadd.f32 %v2758, %v1835
    %v2763 = vadd.f32 %v2759, %v1836
    %v2764 = vxor.u32 %v2760, 2147483648
    %v2765 = vmul.f32 %v2764, 1.442695
    %v2766 = vpow.pop %v2765
    %v2767 = vadd.f32 %v2766, 1.0
    %v2768 = vrcp.pop %v2767
    %v2769 = vmul.f32 %v2767, %v2768
    %v2770 = vsub.f32 1.0, %v2769
    %v2771 = vmul.f32 %v2768, %v2770
    %v2772 = vadd.f32 %v2768, %v2771
    %vm2773 = vweird.f32 %v2767
    %vm2774 = vweird.f32 %v2768
    %vm2775 = vmor %vm2773, %vm2774
    %v2776 = vsel %vm2775, %v2768, %v2772
    %v2777 = vand.u32 2147483647, %v2767
    %vm2778 = vcmp.eq.f32.partialorder %v2777, 8.507059e+37
    %v2779 = vand.u32 %v2767, 2147483648
    %v2780 = vor.u32 1.1754944e-38, %v2779
    %v2781 = vsel %vm2778, %v2780, %v2776
    %v2782 = vmul.f32 1.0, %v2781
    %v2783 = vxor.u32 %v2761, 2147483648
    %v2784 = vmul.f32 %v2783, 1.442695
    %v2785 = vpow.pop %v2784
    %v2786 = vadd.f32 %v2785, 1.0
    %v2787 = vrcp.pop %v2786
    %v2788 = vmul.f32 %v2786, %v2787
    %v2789 = vsub.f32 1.0, %v2788
    %v2790 = vmul.f32 %v2787, %v2789
    %v2791 = vadd.f32 %v2787, %v2790
    %vm2792 = vweird.f32 %v2786
    %vm2793 = vweird.f32 %v2787
    %vm2794 = vmor %vm2792, %vm2793
    %v2795 = vsel %vm2794, %v2787, %v2791
    %v2796 = vand.u32 2147483647, %v2786
    %vm2797 = vcmp.eq.f32.partialorder %v2796, 8.507059e+37
    %v2798 = vand.u32 %v2786, 2147483648
    %v2799 = vor.u32 1.1754944e-38, %v2798
    %v2800 = vsel %vm2797, %v2799, %v2795
    %v2801 = vmul.f32 1.0, %v2800
    %v2802 = vtanh.pop %v2762
    %v2803 = vxor.u32 %v2763, 2147483648
    %v2804 = vmul.f32 %v2803, 1.442695
    %v2805 = vpow.pop %v2804
    %v2806 = vadd.f32 %v2805, 1.0
    %v2807 = vrcp.pop %v2806
    %v2808 = vmul.f32 %v2806, %v2807
    %v2809 = vsub.f32 1.0, %v2808
    %v2810 = vmul.f32 %v2807, %v2809
    %v2811 = vadd.f32 %v2807, %v2810
    %vm2812 = vweird.f32 %v2806
    %vm2813 = vweird.f32 %v2807
    %vm2814 = vmor %vm2812, %vm2813
    %v2815 = vsel %vm2814, %v2807, %v2811
    %v2816 = vand.u32 2147483647, %v2806
    %vm2817 = vcmp.eq.f32.partialorder %v2816, 8.507059e+37
    %v2818 = vand.u32 %v2806, 2147483648
    %v2819 = vor.u32 1.1754944e-38, %v2818
    %v2820 = vsel %vm2817, %v2819, %v2815
    %v2821 = vmul.f32 1.0, %v2820
    %v2822 = vmul.f32 %v2801, %v2670
    %v2823 = vmul.f32 %v2782, %v2802
    %v2824 = vadd.f32 %v2822, %v2823
    %v2825 = vtanh.pop %v2824
    %v2826 = vmul.f32 %v2821, %v2825
    %v2827 = vsel %vm858, %v2824, %v2670
    %v2828 = vsel %vm858, %v2826, %v2671
    %v2829 = vsel %vm858, %v2826, 0.0
    %v2831 = vsel %vm699, %v2828, 0
    %2833 = vmatpush.msra.mxu0 0.0
    %2834 = vmatpush.msra.mxu0 0.0
    %2835 = vmatpush.msra.mxu0 0.0
    %2836 = vmatpush.msra.mxu0 0.0
    %2837 = vmatpush.msra.mxu0 0.0
    %2838 = vmatpush.msra.mxu0 0.0
    %2839 = vmatpush.msra.mxu0 0.0
    %2840 = vmatpush.msra.mxu0 0.0
    %2841 = vmatpush.msra.mxu0 0.0
    %2842 = vmatpush.msra.mxu0 0.0
    %2843 = vmatpush.msra.mxu0 0.0
    %2844 = vmatpush.msra.mxu0 0.0
    %2845 = vmatpush.msra.mxu0 0.0
    %2846 = vmatpush.msra.mxu0 0.0
    %2847 = vmatpush.msra.mxu0 %v96
    %2848 = vmatpush.msra.mxu0 %v92
    %2849 = vmatmul.f32.gmra.mxu0 %v2831
    %v2850 = vpop.f32.mrf.mxu0
    %v2851 = vadd.f32 0.0, %v2850
    %2852 = vdwg.mxu0
    %2853 = vmatpush.msra.mxu0 0.0
    %2854 = vmatpush.msra.mxu0 0.0
    %2855 = vmatpush.msra.mxu0 0.0
    %2856 = vmatpush.msra.mxu0 0.0
    %2857 = vmatpush.msra.mxu0 0.0
    %2858 = vmatpush.msra.mxu0 0.0
    %2859 = vmatpush.msra.mxu0 0.0
    %2860 = vmatpush.msra.mxu0 0.0
    %2861 = vmatpush.msra.mxu0 0.0
    %2862 = vmatpush.msra.mxu0 0.0
    %2863 = vmatpush.msra.mxu0 0.0
    %2864 = vmatpush.msra.mxu0 0.0
    %2865 = vmatpush.msra.mxu0 0.0
    %2866 = vmatpush.msra.mxu0 0.0
    %2867 = vmatpush.msra.mxu0 %v97
    %2868 = vmatpush.msra.mxu0 %v93
    %2869 = vmatmul.f32.gmra.mxu0 %v2831
    %v2870 = vpop.f32.mrf.mxu0
    %v2871 = vadd.f32 0.0, %v2870
    %2872 = vdwg.mxu0
    %2873 = vmatpush.msra.mxu0 0.0
    %2874 = vmatpush.msra.mxu0 0.0
    %2875 = vmatpush.msra.mxu0 0.0
    %2876 = vmatpush.msra.mxu0 0.0
    %2877 = vmatpush.msra.mxu0 0.0
    %2878 = vmatpush.msra.mxu0 0.0
    %2879 = vmatpush.msra.mxu0 0.0
    %2880 = vmatpush.msra.mxu0 0.0
    %2881 = vmatpush.msra.mxu0 0.0
    %2882 = vmatpush.msra.mxu0 0.0
    %2883 = vmatpush.msra.mxu0 0.0
    %2884 = vmatpush.msra.mxu0 0.0
    %2885 = vmatpush.msra.mxu0 0.0
    %2886 = vmatpush.msra.mxu0 0.0
    %2887 = vmatpush.msra.mxu0 %v98
    %2888 = vmatpush.msra.mxu0 %v94
    %2889 = vmatmul.f32.gmra.mxu0 %v2831
    %v2890 = vpop.f32.mrf.mxu0
    %v2891 = vadd.f32 0.0, %v2890
    %2892 = vdwg.mxu0
    %2893 = vmatpush.msra.mxu0 0.0
    %2894 = vmatpush.msra.mxu0 0.0
    %2895 = vmatpush.msra.mxu0 0.0
    %2896 = vmatpush.msra.mxu0 0.0
    %2897 = vmatpush.msra.mxu0 0.0
    %2898 = vmatpush.msra.mxu0 0.0
    %2899 = vmatpush.msra.mxu0 0.0
    %2900 = vmatpush.msra.mxu0 0.0
    %2901 = vmatpush.msra.mxu0 0.0
    %2902 = vmatpush.msra.mxu0 0.0
    %2903 = vmatpush.msra.mxu0 0.0
    %2904 = vmatpush.msra.mxu0 0.0
    %2905 = vmatpush.msra.mxu0 0.0
    %2906 = vmatpush.msra.mxu0 0.0
    %2907 = vmatpush.msra.mxu0 %v99
    %2908 = vmatpush.msra.mxu0 %v95
    %2909 = vmatmul.f32.gmra.mxu0 %v2831
    %v2910 = vpop.f32.mrf.mxu0
    %v2911 = vadd.f32 0.0, %v2910
    %2912 = vdwg.mxu0
    %v2913 = vadd.f32 %v358, %v2851
    %v2914 = vadd.f32 %v359, %v2871
    %v2915 = vadd.f32 %v360, %v2891
    %v2916 = vadd.f32 %v361, %v2911
    %v2917 = vadd.f32 %v2913, %v1833
    %v2918 = vadd.f32 %v2914, %v1834
    %v2919 = vadd.f32 %v2915, %v1835
    %v2920 = vadd.f32 %v2916, %v1836
    %v2921 = vxor.u32 %v2917, 2147483648
    %v2922 = vmul.f32 %v2921, 1.442695
    %v2923 = vpow.pop %v2922
    %v2924 = vadd.f32 %v2923, 1.0
    %v2925 = vrcp.pop %v2924
    %v2926 = vmul.f32 %v2924, %v2925
    %v2927 = vsub.f32 1.0, %v2926
    %v2928 = vmul.f32 %v2925, %v2927
    %v2929 = vadd.f32 %v2925, %v2928
    %vm2930 = vweird.f32 %v2924
    %vm2931 = vweird.f32 %v2925
    %vm2932 = vmor %vm2930, %vm2931
    %v2933 = vsel %vm2932, %v2925, %v2929
    %v2934 = vand.u32 2147483647, %v2924
    %vm2935 = vcmp.eq.f32.partialorder %v2934, 8.507059e+37
    %v2936 = vand.u32 %v2924, 2147483648
    %v2937 = vor.u32 1.1754944e-38, %v2936
    %v2938 = vsel %vm2935, %v2937, %v2933
    %v2939 = vmul.f32 1.0, %v2938
    %v2940 = vxor.u32 %v2918, 2147483648
    %v2941 = vmul.f32 %v2940, 1.442695
    %v2942 = vpow.pop %v2941
    %v2943 = vadd.f32 %v2942, 1.0
    %v2944 = vrcp.pop %v2943
    %v2945 = vmul.f32 %v2943, %v2944
    %v2946 = vsub.f32 1.0, %v2945
    %v2947 = vmul.f32 %v2944, %v2946
    %v2948 = vadd.f32 %v2944, %v2947
    %vm2949 = vweird.f32 %v2943
    %vm2950 = vweird.f32 %v2944
    %vm2951 = vmor %vm2949, %vm2950
    %v2952 = vsel %vm2951, %v2944, %v2948
    %v2953 = vand.u32 2147483647, %v2943
    %vm2954 = vcmp.eq.f32.partialorder %v2953, 8.507059e+37
    %v2955 = vand.u32 %v2943, 2147483648
    %v2956 = vor.u32 1.1754944e-38, %v2955
    %v2957 = vsel %vm2954, %v2956, %v2952
    %v2958 = vmul.f32 1.0, %v2957
    %v2959 = vtanh.pop %v2919
    %v2960 = vxor.u32 %v2920, 2147483648
    %v2961 = vmul.f32 %v2960, 1.442695
    %v2962 = vpow.pop %v2961
    %v2963 = vadd.f32 %v2962, 1.0
    %v2964 = vrcp.pop %v2963
    %v2965 = vmul.f32 %v2963, %v2964
    %v2966 = vsub.f32 1.0, %v2965
    %v2967 = vmul.f32 %v2964, %v2966
    %v2968 = vadd.f32 %v2964, %v2967
    %vm2969 = vweird.f32 %v2963
    %vm2970 = vweird.f32 %v2964
    %vm2971 = vmor %vm2969, %vm2970
    %v2972 = vsel %vm2971, %v2964, %v2968
    %v2973 = vand.u32 2147483647, %v2963
    %vm2974 = vcmp.eq.f32.partialorder %v2973, 8.507059e+37
    %v2975 = vand.u32 %v2963, 2147483648
    %v2976 = vor.u32 1.1754944e-38, %v2975
    %v2977 = vsel %vm2974, %v2976, %v2972
    %v2978 = vmul.f32 1.0, %v2977
    %v2979 = vmul.f32 %v2958, %v2827
    %v2980 = vmul.f32 %v2939, %v2959
    %v2981 = vadd.f32 %v2979, %v2980
    %v2982 = vtanh.pop %v2981
    %v2983 = vmul.f32 %v2978, %v2982
    %v2984 = vsel %vm696, %v2983, 0.0
    %v2985 = vlaneseq
    %v2986 = vand.u32 %v2985, 127
    %v2988 = vrot.slane %v861, 7
    %v2991 = vrot.slane %v1023, 6
    %v2994 = vrot.slane %v1185, 5
    %v2997 = vrot.slane %v1347, 4
    %v3000 = vrot.slane %v1509, 3
    %v3003 = vrot.slane %v1671, 2
    %v3006 = vrot.slane %v1831, 1
    %v3008 = vsel %vm354, %v698, %v2988
    %vm3009 = vcmask 1041408
    %v3010 = vsel %vm3009, %v3008, %v2991
    %vm3011 = vcmask 1042432
    %v3012 = vsel %vm3011, %v3010, %v2994
    %vm3013 = vcmask 1043456
    %v3014 = vsel %vm3013, %v3012, %v2997
    %vm3015 = vcmask 1044480
    %v3016 = vsel %vm3015, %v3014, %v3000
    %vm3017 = vcmask 1045504
    %v3018 = vsel %vm3017, %v3016, %v3003
    %vm3019 = vcmask 1046528
    %v3020 = vsel %vm3019, %v3018, %v3006
    %v3022 = vrot.slane %v2829, 7
    %v3025 = vrot.slane %v2672, 6
    %v3028 = vrot.slane %v2515, 5
    %v3031 = vrot.slane %v2358, 4
    %v3034 = vrot.slane %v2201, 3
    %v3037 = vrot.slane %v2044, 2
    %v3039 = vrot.slane %v1887, 1
    %v3041 = vsel %vm354, %v2984, %v3022
    %v3042 = vsel %vm3009, %v3041, %v3025
    %v3043 = vsel %vm3011, %v3042, %v3028
    %v3044 = vsel %vm3013, %v3043, %v3031
    %v3045 = vsel %vm3015, %v3044, %v3034
    %v3046 = vsel %vm3017, %v3045, %v3037
    %v3047 = vsel %vm3019, %v3046, %v3039
    %3049 = vrot.lane.b32.xlu0 %v3047, 16
    %v3050 = vpop.permute.xlu0 %3049
    %v3052 = vsel %vm699, %v3020, %v3050
    %v3054 = vsel %vm142, %v3052, 0
    %3056 = vmatpush.msra.mxu0 0.0
    %3057 = vmatpush.msra.mxu0 0.0
    %3058 = vmatpush.msra.mxu0 0.0
    %3059 = vmatpush.msra.mxu0 0.0
    %3060 = vmatpush.msra.mxu0 0.0
    %3061 = vmatpush.msra.mxu0 0.0
    %3062 = vmatpush.msra.mxu0 0.0
    %3063 = vmatpush.msra.mxu0 0.0
    %3064 = vmatpush.msra.mxu0 0.0
    %3065 = vmatpush.msra.mxu0 0.0
    %3066 = vmatpush.msra.mxu0 0.0
    %3067 = vmatpush.msra.mxu0 0.0
    %3068 = vmatpush.msra.mxu0 %v105
    %3069 = vmatpush.msra.mxu0 %v104
    %3070 = vmatpush.msra.mxu0 %v103
    %3071 = vmatpush.msra.mxu0 %v102
    %3072 = vmatmul.f32.gmra.mxu0 %v3054
    %v3073 = vpop.f32.mrf.mxu0
    %v3074 = vadd.f32 0.0, %v3073
    %3075 = vdwg.mxu0
    %v3076 = vtanh.pop %v3074
    %v3078 = vsel %vm699, %v3076, 0
    %3080 = vmatpush.msra.mxu0 0.0
    %3081 = vmatpush.msra.mxu0 0.0
    %3082 = vmatpush.msra.mxu0 0.0
    %3083 = vmatpush.msra.mxu0 0.0
    %3084 = vmatpush.msra.mxu0 0.0
    %3085 = vmatpush.msra.mxu0 0.0
    %3086 = vmatpush.msra.mxu0 0.0
    %3087 = vmatpush.msra.mxu0 0.0
    %3088 = vmatpush.msra.mxu0 0.0
    %3089 = vmatpush.msra.mxu0 0.0
    %3090 = vmatpush.msra.mxu0 0.0
    %3091 = vmatpush.msra.mxu0 0.0
    %3092 = vmatpush.msra.mxu0 0.0
    %3093 = vmatpush.msra.mxu0 0.0
    %3094 = vmatpush.msra.mxu0 %v107
    %3095 = vmatpush.msra.mxu0 %v106
    %3096 = vmatmul.f32.gmra.mxu0 %v3078
    %v3097 = vpop.f32.mrf.mxu0
    %v3098 = vadd.f32 0.0, %v3097
    %3099 = vdwg.mxu0
    %3100 = vxpose.xlu0.b32.start [1/16] %v3098, 128
    %3101 = vxpose.xlu0.b32.cont [2/16] 0.0, 128
    %3102 = vxpose.xlu0.b32.cont [3/16] 0.0, 128
    %3103 = vxpose.xlu0.b32.cont [4/16] 0.0, 128
    %3104 = vxpose.xlu0.b32.cont [5/16] 0.0, 128
    %3105 = vxpose.xlu0.b32.cont [6/16] 0.0, 128
    %3106 = vxpose.xlu0.b32.cont [7/16] 0.0, 128
    %3107 = vxpose.xlu0.b32.cont [8/16] 0.0, 128
    %3108 = vxpose.xlu0.b32.cont [9/16] 0.0, 128
    %3109 = vxpose.xlu0.b32.cont [10/16] 0.0, 128
    %3110 = vxpose.xlu0.b32.cont [11/16] 0.0, 128
    %3111 = vxpose.xlu0.b32.cont [12/16] 0.0, 128
    %3112 = vxpose.xlu0.b32.cont [13/16] 0.0, 128
    %3113 = vxpose.xlu0.b32.cont [14/16] 0.0, 128
    %3114 = vxpose.xlu0.b32.cont [15/16] 0.0, 128
    %3115 = vxpose.xlu0.b32.end [16/16] 0.0, 128
    %v3116 = vpop.trf.xlu0
    %v3117 = vpop.trf.xlu0
    %v3118 = vpop.trf.xlu0
    %v3119 = vpop.trf.xlu0
    %v3120 = vpop.trf.xlu0
    %v3121 = vpop.trf.xlu0
    %v3122 = vpop.trf.xlu0
    %v3123 = vpop.trf.xlu0
    %v3124 = vpop.trf.xlu0
    %v3125 = vpop.trf.xlu0
    %v3126 = vpop.trf.xlu0
    %v3127 = vpop.trf.xlu0
    %v3128 = vpop.trf.xlu0
    %v3129 = vpop.trf.xlu0
    %v3130 = vpop.trf.xlu0
    %v3131 = vpop.trf.xlu0
    %3132 = vset.pattern.permute.xlu0 0
    %3133 = vperm.xlu0 %3132, %v83
    %v3134 = vpop.permute.xlu0 %3133
    %vm3135 = vcmp.lt.s32.totalorder %v2986, %v3134
    %v3136 = vsel %vm3135, 1, 0
    %v3137 = vcvt.s32.f32 %v3136
    %v3138 = vsub.f32 1.0, %v3137
    %v3139 = vmul.f32 %v3138, -10000000.0
    %v3140 = vperm.slane %v3139, 0
    %v3141 = vadd.f32 %v3116, %v3140
    %vm3142 = vcmask 58368
    %v3143 = vsel %vm3142, %v3141, -inf
    %3144 = vmax.xlane.f32.xlu0 %v3143
    %v3145 = vpop.xlane.xlu0 %3144
    %v3146 = vsub.f32 %v3141, %v3145
    %v3147 = vmul.f32 %v3146, 1.442695
    %v3148 = vpow.pop %v3147
    %v3149 = vsel %vm3142, %v3148, 0.0
    %3150 = vadd.xlane.f32.xlu0 %v3149
    %v3151 = vpop.xlane.xlu0 %3150
    %v3152 = vrcp.pop %v3151
    %v3153 = vmul.f32 %v3151, %v3152
    %v3154 = vsub.f32 1.0, %v3153
    %v3155 = vmul.f32 %v3152, %v3154
    %v3156 = vadd.f32 %v3152, %v3155
    %vm3157 = vweird.f32 %v3151
    %vm3158 = vweird.f32 %v3152
    %vm3159 = vmor %vm3157, %vm3158
    %v3160 = vsel %vm3159, %v3152, %v3156
    %v3161 = vand.u32 2147483647, %v3151
    %vm3162 = vcmp.eq.f32.partialorder %v3161, 8.507059e+37
    %v3163 = vand.u32 %v3151, 2147483648
    %v3164 = vor.u32 1.1754944e-38, %v3163
    %v3165 = vsel %vm3162, %v3164, %v3160
    %v3166 = vmul.f32 %v3148, %v3165
    %vm3167 = vcmask 64512
    %v3169 = vsel %vm3167, %v3166, 0
    %3171 = vmatpush.msra.mxu0 0.0
    %3172 = vmatpush.msra.mxu0 0.0
    %3173 = vmatpush.msra.mxu0 0.0
    %3174 = vmatpush.msra.mxu0 0.0
    %3175 = vmatpush.msra.mxu0 0.0
    %3176 = vmatpush.msra.mxu0 0.0
    %3177 = vmatpush.msra.mxu0 0.0
    %3178 = vmatpush.msra.mxu0 0.0
    %3179 = vmatpush.msra.mxu0 0.0
    %3180 = vmatpush.msra.mxu0 0.0
    %3181 = vmatpush.msra.mxu0 0.0
    %3182 = vmatpush.msra.mxu0 0.0
    %3183 = vmatpush.msra.mxu0 0.0
    %3184 = vmatpush.msra.mxu0 0.0
    %3185 = vmatpush.msra.mxu0 0.0
    %3186 = vmatpush.msra.mxu0 %v3052
    %3187 = vmatmul.f32.gmra.mxu0 %v3169
    %v3188 = vpop.f32.mrf.mxu0
    %v3189 = vadd.f32 0.0, %v3188
    %3190 = vdwg.mxu0
    %vm3191 = vcmask 254976
    %v3192 = vsel %vm3191, %v3189, 0.0
    %v3193 = vrot.slane %v3192, 4
    %v3194 = vadd.f32 %v3192, %v3193
    %v3195 = vrot.slane %v3194, 2
    %v3196 = vadd.f32 %v3194, %v3195
    %v3197 = vrot.slane %v3196, 1
    %v3198 = vadd.f32 %v3196, %v3197
    %v3199 = vmul.f32 %v3198, 0.5
    %3200 = vst.msk [vmem:[#allocation9] sm:$0x3] %vm3142, %v3166
    %v3201 = vrot.slane %v698, 1
    %v3203 = vrot.slane %v1023, 7
    %v3205 = vrot.slane %v1185, 6
    %v3207 = vrot.slane %v1347, 5
    %v3209 = vrot.slane %v1509, 4
    %v3211 = vrot.slane %v1671, 3
    %v3213 = vrot.slane %v1831, 2
    %v3215 = vsel %vm354, %v3201, %v861
    %v3216 = vsel %vm3009, %v3215, %v3203
    %v3217 = vsel %vm3011, %v3216, %v3205
    %v3218 = vsel %vm3013, %v3217, %v3207
    %v3219 = vsel %vm3015, %v3218, %v3209
    %v3220 = vsel %vm3017, %v3219, %v3211
    %v3221 = vsel %vm3019, %v3220, %v3213
    %v3223 = vrot.slane %v2984, 1
    %v3225 = vrot.slane %v2672, 7
    %v3227 = vrot.slane %v2515, 6
    %v3229 = vrot.slane %v2358, 5
    %v3231 = vrot.slane %v2201, 4
    %v3233 = vrot.slane %v2044, 3
    %v3235 = vrot.slane %v1887, 2
    %v3237 = vsel %vm354, %v3223, %v2829
    %v3238 = vsel %vm3009, %v3237, %v3225
    %v3239 = vsel %vm3011, %v3238, %v3227
    %v3240 = vsel %vm3013, %v3239, %v3229
    %v3241 = vsel %vm3015, %v3240, %v3231
    %v3242 = vsel %vm3017, %v3241, %v3233
    %v3243 = vsel %vm3019, %v3242, %v3235
    %3245 = vrot.lane.b32.xlu0 %v3243, 16
    %v3246 = vpop.permute.xlu0 %3245
    %v3248 = vsel %vm699, %v3221, %v3246
    %v3250 = vsel %vm142, %v3248, 0
    %3252 = vmatpush.msra.mxu0 0.0
    %3253 = vmatpush.msra.mxu0 0.0
    %3254 = vmatpush.msra.mxu0 0.0
    %3255 = vmatpush.msra.mxu0 0.0
    %3256 = vmatpush.msra.mxu0 0.0
    %3257 = vmatpush.msra.mxu0 0.0
    %3258 = vmatpush.msra.mxu0 0.0
    %3259 = vmatpush.msra.mxu0 0.0
    %3260 = vmatpush.msra.mxu0 0.0
    %3261 = vmatpush.msra.mxu0 0.0
    %3262 = vmatpush.msra.mxu0 0.0
    %3263 = vmatpush.msra.mxu0 0.0
    %3264 = vmatpush.msra.mxu0 %v105
    %3265 = vmatpush.msra.mxu0 %v104
    %3266 = vmatpush.msra.mxu0 %v103
    %3267 = vmatpush.msra.mxu0 %v102
    %3268 = vmatmul.f32.gmra.mxu0 %v3250
    %v3269 = vpop.f32.mrf.mxu0
    %v3270 = vadd.f32 0.0, %v3269
    %3271 = vdwg.mxu0
    %v3272 = vtanh.pop %v3270
    %v3274 = vsel %vm699, %v3272, 0
    %3276 = vmatpush.msra.mxu0 0.0
    %3277 = vmatpush.msra.mxu0 0.0
    %3278 = vmatpush.msra.mxu0 0.0
    %3279 = vmatpush.msra.mxu0 0.0
    %3280 = vmatpush.msra.mxu0 0.0
    %3281 = vmatpush.msra.mxu0 0.0
    %3282 = vmatpush.msra.mxu0 0.0
    %3283 = vmatpush.msra.mxu0 0.0
    %3284 = vmatpush.msra.mxu0 0.0
    %3285 = vmatpush.msra.mxu0 0.0
    %3286 = vmatpush.msra.mxu0 0.0
    %3287 = vmatpush.msra.mxu0 0.0
    %3288 = vmatpush.msra.mxu0 0.0
    %3289 = vmatpush.msra.mxu0 0.0
    %3290 = vmatpush.msra.mxu0 %v107
    %3291 = vmatpush.msra.mxu0 %v106
    %3292 = vmatmul.f32.gmra.mxu0 %v3274
    %v3293 = vpop.f32.mrf.mxu0
    %v3294 = vadd.f32 0.0, %v3293
    %3295 = vdwg.mxu0
    %3296 = vxpose.xlu0.b32.start [1/16] %v3294, 128
    %3297 = vxpose.xlu0.b32.cont [2/16] 0.0, 128
    %3298 = vxpose.xlu0.b32.cont [3/16] 0.0, 128
    %3299 = vxpose.xlu0.b32.cont [4/16] 0.0, 128
    %3300 = vxpose.xlu0.b32.cont [5/16] 0.0, 128
    %3301 = vxpose.xlu0.b32.cont [6/16] 0.0, 128
    %3302 = vxpose.xlu0.b32.cont [7/16] 0.0, 128
    %3303 = vxpose.xlu0.b32.cont [8/16] 0.0, 128
    %3304 = vxpose.xlu0.b32.cont [9/16] 0.0, 128
    %3305 = vxpose.xlu0.b32.cont [10/16] 0.0, 128
    %3306 = vxpose.xlu0.b32.cont [11/16] 0.0, 128
    %3307 = vxpose.xlu0.b32.cont [12/16] 0.0, 128
    %3308 = vxpose.xlu0.b32.cont [13/16] 0.0, 128
    %3309 = vxpose.xlu0.b32.cont [14/16] 0.0, 128
    %3310 = vxpose.xlu0.b32.cont [15/16] 0.0, 128
    %3311 = vxpose.xlu0.b32.end [16/16] 0.0, 128
    %v3312 = vpop.trf.xlu0
    %v3313 = vpop.trf.xlu0
    %v3314 = vpop.trf.xlu0
    %v3315 = vpop.trf.xlu0
    %v3316 = vpop.trf.xlu0
    %v3317 = vpop.trf.xlu0
    %v3318 = vpop.trf.xlu0
    %v3319 = vpop.trf.xlu0
    %v3320 = vpop.trf.xlu0
    %v3321 = vpop.trf.xlu0
    %v3322 = vpop.trf.xlu0
    %v3323 = vpop.trf.xlu0
    %v3324 = vpop.trf.xlu0
    %v3325 = vpop.trf.xlu0
    %v3326 = vpop.trf.xlu0
    %v3327 = vpop.trf.xlu0
    %v3328 = vperm.slane %v3139, 1
    %v3329 = vadd.f32 %v3312, %v3328
    %v3330 = vsel %vm3142, %v3329, -inf
    %3331 = vmax.xlane.f32.xlu0 %v3330
    %v3332 = vpop.xlane.xlu0 %3331
    %v3333 = vsub.f32 %v3329, %v3332
    %v3334 = vmul.f32 %v3333, 1.442695
    %v3335 = vpow.pop %v3334
    %v3336 = vsel %vm3142, %v3335, 0.0
    %3337 = vadd.xlane.f32.xlu0 %v3336
    %v3338 = vpop.xlane.xlu0 %3337
    %v3339 = vrcp.pop %v3338
    %v3340 = vmul.f32 %v3338, %v3339
    %v3341 = vsub.f32 1.0, %v3340
    %v3342 = vmul.f32 %v3339, %v3341
    %v3343 = vadd.f32 %v3339, %v3342
    %vm3344 = vweird.f32 %v3338
    %vm3345 = vweird.f32 %v3339
    %vm3346 = vmor %vm3344, %vm3345
    %v3347 = vsel %vm3346, %v3339, %v3343
    %v3348 = vand.u32 2147483647, %v3338
    %vm3349 = vcmp.eq.f32.partialorder %v3348, 8.507059e+37
    %v3350 = vand.u32 %v3338, 2147483648
    %v3351 = vor.u32 1.1754944e-38, %v3350
    %v3352 = vsel %vm3349, %v3351, %v3347
    %v3353 = vmul.f32 %v3335, %v3352
    %v3355 = vsel %vm3167, %v3353, 0
    %3357 = vmatpush.msra.mxu0 0.0
    %3358 = vmatpush.msra.mxu0 0.0
    %3359 = vmatpush.msra.mxu0 0.0
    %3360 = vmatpush.msra.mxu0 0.0
    %3361 = vmatpush.msra.mxu0 0.0
    %3362 = vmatpush.msra.mxu0 0.0
    %3363 = vmatpush.msra.mxu0 0.0
    %3364 = vmatpush.msra.mxu0 0.0
    %3365 = vmatpush.msra.mxu0 0.0
    %3366 = vmatpush.msra.mxu0 0.0
    %3367 = vmatpush.msra.mxu0 0.0
    %3368 = vmatpush.msra.mxu0 0.0
    %3369 = vmatpush.msra.mxu0 0.0
    %3370 = vmatpush.msra.mxu0 0.0
    %3371 = vmatpush.msra.mxu0 0.0
    %3372 = vmatpush.msra.mxu0 %v3248
    %3373 = vmatmul.f32.gmra.mxu0 %v3355
    %v3374 = vpop.f32.mrf.mxu0
    %v3375 = vadd.f32 0.0, %v3374
    %3376 = vdwg.mxu0
    %v3377 = vsel %vm3191, %v3375, 0.0
    %v3378 = vrot.slane %v3377, 4
    %v3379 = vadd.f32 %v3377, %v3378
    %v3380 = vrot.slane %v3379, 2
    %v3381 = vadd.f32 %v3379, %v3380
    %v3382 = vrot.slane %v3381, 1
    %v3383 = vadd.f32 %v3381, %v3382
    %v3384 = vmul.f32 %v3383, 0.5
    %s3385 = scalar_lea.vmem [#allocation9], 2
    %3386 = vst.msk [vmem:[%s3385] sm:$0x3] %vm3142, %v3353
    %v3387 = vsel %vm354, %v3199, %v3384
    %3388 = vst.msk [vmem:[#allocation8] sm:$0x3] %vm3191, %v3387
    // Predicated region
    $region50: #{self_attn_forward.1} parent=1 // pred_check
      _
    $region51: #{self_attn_forward.1} parent=1 // pred_check_branch
      %3390 = sbr.rel (0) target = $region53
    $region52: #{self_attn_forward.1} parent=1 // pred_region
      %3392 = vsyncadd [#allocation4], 0
      %s3394 = sshll.u32 [#allocation8], 4
      %s3395 = int_to_ptr.vmem [resolvable:$true] %s3394
      %s3396 = sshll.u32 %s9, 4
      %s3397 = int_to_ptr.hbm [resolvable:$true] %s3396
      %3399 = dma.vmem_to_hbm [thread:$0]  %s3395, 32, %s3397, [#allocation4]
    $region53: #{self_attn_forward.1} parent=1 // pred_fallthru
      _
    // Predicated region
    $region54: #{self_attn_forward.1} parent=1 // pred_check
      _
    $region55: #{self_attn_forward.1} parent=1 // pred_check_branch
      %3401 = sbr.rel (0) target = $region57
    $region56: #{self_attn_forward.1} parent=1 // pred_region
      %3403 = vsyncadd [#allocation10], 0
      %s3404 = sshll.u32 [#allocation9], 4
      %s3405 = int_to_ptr.vmem [resolvable:$true] %s3404
      %s3406 = sshll.u32 %s10, 4
      %s3407 = int_to_ptr.hbm [resolvable:$true] %s3406
      %3412 = dma.vmem_to_hbm [thread:$0]  %s3405, 64, %s3407, [#allocation10], 32, 32, 2
    $region57: #{self_attn_forward.1} parent=1 // pred_fallthru
      _
    // Predicated region
    $region58: #{self_attn_forward.1} parent=1 // pred_check
      _
    $region59: #{self_attn_forward.1} parent=1 // pred_check_branch
      %3414 = sbr.rel (0) target = $region61
    $region60: #{self_attn_forward.1} parent=1 // pred_region
      %3416 = dma.done [#allocation4], 32
    $region61: #{self_attn_forward.1} parent=1 // pred_fallthru
      _
    // Predicated region
    $region62: #{self_attn_forward.1} parent=1 // pred_check
      _
    $region63: #{self_attn_forward.1} parent=1 // pred_check_branch
      %3418 = sbr.rel (0) target = $region65
    $region64: #{self_attn_forward.1} parent=1 // pred_region
      %3420 = dma.done [#allocation10], 64
    $region65: #{self_attn_forward.1} parent=1 // pred_fallthru
      _
    %3421 = vsyncpa [#allocation3], 1
    %3422 = vsyncpa [#allocation6], 1
    %3423 = vsyncpa [#allocation4], 1
    %3424 = vsyncpa [#allocation10], 1

</llo_original>
